<compile_context>
chip_gen: v7x
topology: tpu7x:2x2x1
jax: 0.10.0
libtpu: 0.0.40
codegen_flags: <defaults>
</compile_context>

<pallas_src>
import functools

import jax
import jax.numpy as jnp
from jax.experimental import pallas as pl
from jax.experimental.pallas import tpu as pltpu


# ----------------------------------------------------------------------------
# Fused VAE kernel: 8 batched matmuls, all weights resident in VMEM
# ----------------------------------------------------------------------------
def _vae_kernel(x_ref, eps_ref,
                d1_ref, b1_ref, d2_ref, b2_ref,
                wf1_ref, bf1_ref, whead_ref, bhead_ref,
                wf2_ref, bf2_ref, wf3_ref, bf3_ref,
                d3_ref, b3_ref, d4_ref, b4_ref,
                xrec_ref, ml_ref):
    f32 = jnp.float32

    x = x_ref[0]          # [bb, 25]
    eps = eps_ref[0]      # [bb, latent]
    latent = eps.shape[1]

    def dense(a, w_ref, b_ref, act=None):
        y = jnp.dot(a, w_ref[...], preferred_element_type=f32) + b_ref[...]
        if act == "relu":
            y = jnp.maximum(y, 0.0)
        elif act == "sigmoid":
            y = jax.nn.sigmoid(y)
        return y

    # ------------------------------ encoder ------------------------------
    h = dense(x, d1_ref, b1_ref, "relu")          # conv1 (dense-folded) [bb,400]
    h = dense(h, d2_ref, b2_ref, "relu")          # conv2 (dense-folded) [bb,800]
    h = dense(h, wf1_ref, bf1_ref, "relu")        # fc1                  [bb,128]
    ml = dense(h, whead_ref, bhead_ref)           # fc_mu ++ fc_logvar   [bb,2L]
    ml_ref[0] = ml

    # -------------------------- reparameterize ---------------------------
    mu = ml[:, :latent]
    lv = ml[:, latent:]
    z = mu + eps * jnp.exp(0.5 * lv)              # [bb, latent]

    # ------------------------------ decoder ------------------------------
    h = dense(z, wf2_ref, bf2_ref, "relu")        # fc2                  [bb,128]
    h = dense(h, wf3_ref, bf3_ref, "relu")        # fc3 (+view)          [bb,800]
    h = dense(h, d3_ref, b3_ref, "relu")          # deconv1 (dense)      [bb,400]
    xrec_ref[0] = dense(h, d4_ref, b4_ref, "sigmoid")  # deconv2 + sigmoid [bb,25]


# ----------------------------------------------------------------------------
# Host-side packing (runs once): fold convs / deconvs into dense matrices
# ----------------------------------------------------------------------------
def _conv_dense(w, b, H, W):
    """Regular conv [Cout,Cin,3,3], stride 1, pad 1 -> dense map.

    Returns D [Cin*H*W, Cout*H*W] (NCHW channel-major flatten on both sides)
    and bias [1, Cout*H*W], such that  x_flat @ D + bias == conv(x)+b flattened.
    Exact: each column entry is a single weight value (conv of a one-hot).
    """
    cout, cin = int(w.shape[0]), int(w.shape[1])
    n_in = cin * H * W
    basis = jnp.eye(n_in, dtype=jnp.float32).reshape(n_in, cin, H, W)
    cols = jax.lax.conv_general_dilated(
        basis, jnp.asarray(w, jnp.float32), window_strides=(1, 1),
        padding=[(1, 1), (1, 1)],
        dimension_numbers=("NCHW", "OIHW", "NCHW"),
        precision=jax.lax.Precision.HIGHEST)
    D = cols.reshape(n_in, cout * H * W)
    b_full = jnp.repeat(jnp.asarray(b, jnp.float32).reshape(-1), H * W)
    return D, b_full.reshape(1, -1)


def _deconv_dense(w, b, H, W):
    """ConvTranspose2d(stride=1, pad=1) weight [Cin,Cout,3,3] -> dense map
    (equivalent regular conv: swap channels + flip spatially)."""
    w_conv = jnp.transpose(jnp.asarray(w, jnp.float32), (1, 0, 2, 3))[:, :, ::-1, ::-1]
    return _conv_dense(w_conv, b, H, W)


def prepare_packed_params(params, input_dim=5, latent_dim=12, hidden_dim=128):
    H = W = input_dim
    d1, b1 = _conv_dense(params["conv1_w"], params["conv1_b"], H, W)
    d2, b2 = _conv_dense(params["conv2_w"], params["conv2_b"], H, W)
    d3, b3 = _deconv_dense(params["deconv1_w"], params["deconv1_b"], H, W)
    d4, b4 = _deconv_dense(params["deconv2_w"], params["deconv2_b"], H, W)
    packed = {
        "d1": d1, "b1": b1,
        "d2": d2, "b2": b2,
        # fc1 consumes the NCHW channel-major flatten, which is exactly the
        # column ordering of d2 -> no permutation needed.
        "wf1": params["fc1_w"], "bf1": params["fc1_b"],
        "whead": jnp.concatenate([params["fc_mu_w"], params["fc_logvar_w"]], axis=1),
        "bhead": jnp.concatenate([params["fc_mu_b"], params["fc_logvar_b"]], axis=1),
        "wf2": params["fc2_w"], "bf2": params["fc2_b"],
        # fc3 output ordering (view(B,32,5,5) -> channel-major) matches d3's
        # expected input ordering -> no permutation needed.
        "wf3": params["fc3_w"], "bf3": params["fc3_b"],
        "d3": d3, "b3": b3,
        "d4": d4, "b4": b4,
    }
    return {k: jnp.asarray(v, jnp.float32) for k, v in packed.items()}


_WEIGHT_ORDER = ["d1", "b1", "d2", "b2", "wf1", "bf1", "whead", "bhead",
                 "wf2", "bf2", "wf3", "bf3", "d3", "b3", "d4", "b4"]


# ----------------------------------------------------------------------------
# Forward wrapper (single pallas_call, batch grid of <= 2 parallel steps)
# ----------------------------------------------------------------------------
def vae_forward(packed, x, eps, input_dim=5):
    if x.ndim == 2:
        x = x[None, None]
    elif x.ndim == 3:
        x = x[None]
    B = x.shape[0]
    hw = input_dim * input_dim
    latent = packed["whead"].shape[1] // 2

    # Split the batch over at most 2 grid steps (v7x: one per TensorCore;
    # v5e/v6e: near-neutral).  Batch inside a step rides the matmul M dim.
    nb = 2 if B >= 2 else 1
    bb = -(-B // nb)
    b_pad = nb * bb

    x_flat = x.reshape(B, hw).astype(jnp.float32)
    eps = eps.astype(jnp.float32)
    if b_pad != B:
        x_flat = jnp.concatenate(
            [x_flat, jnp.zeros((b_pad - B, hw), jnp.float32)], axis=0)
        eps = jnp.concatenate(
            [eps, jnp.zeros((b_pad - B, latent), jnp.float32)], axis=0)
    x3 = x_flat.reshape(nb, bb, hw)
    eps3 = eps.reshape(nb, bb, latent)

    weights = [packed[n] for n in _WEIGHT_ORDER]

    def data_spec(shape):
        return pl.BlockSpec((1,) + tuple(shape[1:]), lambda i: (i, 0, 0))

    def const_spec(shape):
        nd = len(shape)
        return pl.BlockSpec(tuple(shape), lambda i: (0,) * nd)

    in_specs = ([data_spec(x3.shape), data_spec(eps3.shape)]
                + [const_spec(w.shape) for w in weights])
    out_shape = (
        jax.ShapeDtypeStruct((nb, bb, hw), jnp.float32),           # x_rec
        jax.ShapeDtypeStruct((nb, bb, 2 * latent), jnp.float32),   # mu ++ logvar
    )
    out_specs = (data_spec((nb, bb, hw)), data_spec((nb, bb, 2 * latent)))

    xrec3, ml3 = pl.pallas_call(
        _vae_kernel,
        out_shape=out_shape,
        grid=(nb,),
        in_specs=in_specs,
        out_specs=out_specs,
        compiler_params=pltpu.CompilerParams(
            dimension_semantics=("parallel",)),
    )(x3, eps3, *weights)

    x_rec = xrec3.reshape(b_pad, hw)[:B].reshape(B, 1, input_dim, input_dim)
    ml = ml3.reshape(b_pad, 2 * latent)[:B]
    mean = ml[:, :latent]
    log_var = ml[:, latent:]
    return x_rec, mean, log_var


# ----------------------------------------------------------------------------
# Parameter construction (deterministic, PyTorch-like uniform(-1/sqrt(fan_in)))
# ----------------------------------------------------------------------------
def _uniform(key, shape, fan_in):
    bound = 1.0 / jnp.sqrt(jnp.float32(fan_in))
    return jax.random.uniform(key, shape, jnp.float32, -bound, bound)


def init_vae_params(key, input_dim=5, latent_dim=12, hidden_dim=128):
    keys = jax.random.split(key, 18)
    flat = 32 * input_dim * input_dim
    p = {}
    p["conv1_w"] = _uniform(keys[0], (16, 1, 3, 3), 1 * 9)
    p["conv1_b"] = _uniform(keys[1], (16,), 1 * 9)
    p["conv2_w"] = _uniform(keys[2], (32, 16, 3, 3), 16 * 9)
    p["conv2_b"] = _uniform(keys[3], (32,), 16 * 9)
    p["fc1_w"] = _uniform(keys[4], (flat, hidden_dim), flat)
    p["fc1_b"] = _uniform(keys[5], (1, hidden_dim), flat)
    p["fc_mu_w"] = _uniform(keys[6], (hidden_dim, latent_dim), hidden_dim)
    p["fc_mu_b"] = _uniform(keys[7], (1, latent_dim), hidden_dim)
    p["fc_logvar_w"] = _uniform(keys[8], (hidden_dim, latent_dim), hidden_dim)
    p["fc_logvar_b"] = _uniform(keys[9], (1, latent_dim), hidden_dim)
    p["fc2_w"] = _uniform(keys[10], (latent_dim, hidden_dim), latent_dim)
    p["fc2_b"] = _uniform(keys[11], (1, hidden_dim), latent_dim)
    p["fc3_w"] = _uniform(keys[12], (hidden_dim, flat), hidden_dim)
    p["fc3_b"] = _uniform(keys[13], (1, flat), hidden_dim)
    p["deconv1_w"] = _uniform(keys[14], (32, 16, 3, 3), 32 * 9)
    p["deconv1_b"] = _uniform(keys[15], (16,), 32 * 9)
    p["deconv2_w"] = _uniform(keys[16], (16, 1, 3, 3), 16 * 9)
    p["deconv2_b"] = _uniform(keys[17], (1,), 16 * 9)
    return p


# ----------------------------------------------------------------------------
# Pure-JAX reference (same params, high-precision XLA ops) for validation
# ----------------------------------------------------------------------------
def vae_forward_ref(params, x, eps, input_dim=5):
    if x.ndim == 2:
        x = x[None, None]
    elif x.ndim == 3:
        x = x[None]
    B = x.shape[0]
    hi = jax.lax.Precision.HIGHEST

    def conv(h, w, b):
        y = jax.lax.conv_general_dilated(
            h, w, window_strides=(1, 1), padding=[(1, 1), (1, 1)],
            dimension_numbers=("NCHW", "OIHW", "NCHW"), precision=hi)
        return y + b.reshape(1, -1, 1, 1)

    h = jax.nn.relu(conv(x, params["conv1_w"], params["conv1_b"]))
    h = jax.nn.relu(conv(h, params["conv2_w"], params["conv2_b"]))
    h = h.reshape(B, -1)
    h = jax.nn.relu(jnp.dot(h, params["fc1_w"], precision=hi) + params["fc1_b"])
    mean = jnp.dot(h, params["fc_mu_w"], precision=hi) + params["fc_mu_b"]
    log_var = jnp.dot(h, params["fc_logvar_w"], precision=hi) + params["fc_logvar_b"]
    z = mean + eps * jnp.exp(0.5 * log_var)
    h = jax.nn.relu(jnp.dot(z, params["fc2_w"], precision=hi) + params["fc2_b"])
    h = jax.nn.relu(jnp.dot(h, params["fc3_w"], precision=hi) + params["fc3_b"])
    h = h.reshape(B, 32, input_dim, input_dim)
    wd1 = jnp.transpose(params["deconv1_w"], (1, 0, 2, 3))[:, :, ::-1, ::-1]
    h = jax.nn.relu(conv(h, wd1, params["deconv1_b"]))
    wd2 = jnp.transpose(params["deconv2_w"], (1, 0, 2, 3))[:, :, ::-1, ::-1]
    x_rec = jax.nn.sigmoid(conv(h, wd2, params["deconv2_b"]))
    return x_rec, mean, log_var


# ----------------------------------------------------------------------------
# Main
# ----------------------------------------------------------------------------
if __name__ == "__main__":
    INPUT_DIM, LATENT_DIM, HIDDEN_DIM = 5, 12, 128
    B = 2

    root = jax.random.PRNGKey(0)
    k_params, k_x, k_eps = jax.random.split(root, 3)

    params = init_vae_params(k_params, INPUT_DIM, LATENT_DIM, HIDDEN_DIM)
    packed = prepare_packed_params(params, INPUT_DIM, LATENT_DIM, HIDDEN_DIM)
    x = jax.random.normal(k_x, (B, 1, INPUT_DIM, INPUT_DIM), jnp.float32)
    eps = jax.random.normal(k_eps, (B, LATENT_DIM), jnp.float32)

    fwd = jax.jit(functools.partial(vae_forward, input_dim=INPUT_DIM))
    x_rec, mean, log_var = fwd(packed, x, eps)
    jax.block_until_ready((x_rec, mean, log_var))

    # basic sanity
    assert x_rec.shape == (B, 1, INPUT_DIM, INPUT_DIM)
    assert mean.shape == (B, LATENT_DIM)
    assert log_var.shape == (B, LATENT_DIM)
    assert bool(jnp.all(jnp.isfinite(x_rec)))
    assert bool(jnp.all((x_rec >= 0.0) & (x_rec <= 1.0)))

    # reference check against plain-JAX high-precision forward
    ref_out = vae_forward_ref(params, x, eps, INPUT_DIM)
    for got, want in zip((x_rec, mean, log_var), ref_out):
        assert got.shape == want.shape
        err = float(jnp.max(jnp.abs(got - want)))
        assert bool(jnp.allclose(got, want, rtol=5e-3, atol=5e-3)), err

    print("KERNEL_OK")
</pallas_src>

<mosaic_0001>
module attributes {stable_mosaic.version = 11 : i64} {
  func.func @_vae_kernel(%arg0: i32, %arg1: memref<1x1x25xf32, #tpu.memory_space<vmem>>, %arg2: memref<1x1x12xf32, #tpu.memory_space<vmem>>, %arg3: memref<25x400xf32, #tpu.memory_space<vmem>>, %arg4: memref<1x400xf32, #tpu.memory_space<vmem>>, %arg5: memref<400x800xf32, #tpu.memory_space<vmem>>, %arg6: memref<1x800xf32, #tpu.memory_space<vmem>>, %arg7: memref<800x128xf32, #tpu.memory_space<vmem>>, %arg8: memref<1x128xf32, #tpu.memory_space<vmem>>, %arg9: memref<128x24xf32, #tpu.memory_space<vmem>>, %arg10: memref<1x24xf32, #tpu.memory_space<vmem>>, %arg11: memref<12x128xf32, #tpu.memory_space<vmem>>, %arg12: memref<1x128xf32, #tpu.memory_space<vmem>>, %arg13: memref<128x800xf32, #tpu.memory_space<vmem>>, %arg14: memref<1x800xf32, #tpu.memory_space<vmem>>, %arg15: memref<800x400xf32, #tpu.memory_space<vmem>>, %arg16: memref<1x400xf32, #tpu.memory_space<vmem>>, %arg17: memref<400x25xf32, #tpu.memory_space<vmem>>, %arg18: memref<1x25xf32, #tpu.memory_space<vmem>>, %arg19: memref<1x1x25xf32, #tpu.memory_space<vmem>>, %arg20: memref<1x1x24xf32, #tpu.memory_space<vmem>>) attributes {dimension_semantics = [#tpu.dimension_semantics<parallel>], iteration_bounds = array<i64: 2>, scalar_prefetch = 0 : i64, scratch_operands = 0 : i64, tpu.core_type = #tpu.core_type<tc>, window_params = [{transform_indices = @transform_0, window_bounds = array<i64: 1, 1, 25>}, {transform_indices = @transform_1, window_bounds = array<i64: 1, 1, 12>}, {pipeline_mode = #tpu.pipeline_mode<synchronous>, transform_indices = @transform_2, window_bounds = array<i64: 25, 400>}, {pipeline_mode = #tpu.pipeline_mode<synchronous>, transform_indices = @transform_3, window_bounds = array<i64: 1, 400>}, {pipeline_mode = #tpu.pipeline_mode<synchronous>, transform_indices = @transform_4, window_bounds = array<i64: 400, 800>}, {pipeline_mode = #tpu.pipeline_mode<synchronous>, transform_indices = @transform_5, window_bounds = array<i64: 1, 800>}, {pipeline_mode = #tpu.pipeline_mode<synchronous>, transform_indices = @transform_6, window_bounds = array<i64: 800, 128>}, {pipeline_mode = #tpu.pipeline_mode<synchronous>, transform_indices = @transform_7, window_bounds = array<i64: 1, 128>}, {pipeline_mode = #tpu.pipeline_mode<synchronous>, transform_indices = @transform_8, window_bounds = array<i64: 128, 24>}, {pipeline_mode = #tpu.pipeline_mode<synchronous>, transform_indices = @transform_9, window_bounds = array<i64: 1, 24>}, {pipeline_mode = #tpu.pipeline_mode<synchronous>, transform_indices = @transform_10, window_bounds = array<i64: 12, 128>}, {pipeline_mode = #tpu.pipeline_mode<synchronous>, transform_indices = @transform_11, window_bounds = array<i64: 1, 128>}, {pipeline_mode = #tpu.pipeline_mode<synchronous>, transform_indices = @transform_12, window_bounds = array<i64: 128, 800>}, {pipeline_mode = #tpu.pipeline_mode<synchronous>, transform_indices = @transform_13, window_bounds = array<i64: 1, 800>}, {pipeline_mode = #tpu.pipeline_mode<synchronous>, transform_indices = @transform_14, window_bounds = array<i64: 800, 400>}, {pipeline_mode = #tpu.pipeline_mode<synchronous>, transform_indices = @transform_15, window_bounds = array<i64: 1, 400>}, {pipeline_mode = #tpu.pipeline_mode<synchronous>, transform_indices = @transform_16, window_bounds = array<i64: 400, 25>}, {pipeline_mode = #tpu.pipeline_mode<synchronous>, transform_indices = @transform_17, window_bounds = array<i64: 1, 25>}, {transform_indices = @transform_18, window_bounds = array<i64: 1, 1, 25>}, {transform_indices = @transform_19, window_bounds = array<i64: 1, 1, 24>}]} {
    %c0 = arith.constant 0 : index
    %c0_0 = arith.constant 0 : index
    %c0_1 = arith.constant 0 : index
    %0 = vector.load %arg1[%c0, %c0_0, %c0_1] : memref<1x1x25xf32, #tpu.memory_space<vmem>>, vector<1x1x25xf32>
    %1 = vector.shape_cast %0 : vector<1x1x25xf32> to vector<1x25xf32>
    %c0_2 = arith.constant 0 : index
    %c0_3 = arith.constant 0 : index
    %c0_4 = arith.constant 0 : index
    %2 = vector.load %arg2[%c0_2, %c0_3, %c0_4] : memref<1x1x12xf32, #tpu.memory_space<vmem>>, vector<1x1x12xf32>
    %3 = vector.shape_cast %2 : vector<1x1x12xf32> to vector<1x12xf32>
    %c0_5 = arith.constant 0 : index
    %c0_6 = arith.constant 0 : index
    %4 = vector.load %arg3[%c0_5, %c0_6] : memref<25x400xf32, #tpu.memory_space<vmem>>, vector<25x400xf32>
    %cst = arith.constant dense<0.000000e+00> : vector<1x400xf32>
    %5 = tpu.matmul %1, %4, %cst {dimension_numbers = #tpu.dot_dimension_numbers<[1], [0], [0], [1], [0, 0, 1, 1], [], []>} : vector<1x25xf32>, vector<25x400xf32>, vector<1x400xf32> -> vector<1x400xf32>
    %c0_7 = arith.constant 0 : index
    %c0_8 = arith.constant 0 : index
    %6 = vector.load %arg4[%c0_7, %c0_8] : memref<1x400xf32, #tpu.memory_space<vmem>>, vector<1x400xf32>
    %7 = arith.addf %5, %6 : vector<1x400xf32>
    %cst_9 = arith.constant 0.000000e+00 : f32
    %8 = vector.broadcast %cst_9 : f32 to vector<1x400xf32>
    %9 = arith.maximumf %7, %8 : vector<1x400xf32>
    %c0_10 = arith.constant 0 : index
    %c0_11 = arith.constant 0 : index
    %10 = vector.load %arg5[%c0_10, %c0_11] : memref<400x800xf32, #tpu.memory_space<vmem>>, vector<400x800xf32>
    %cst_12 = arith.constant dense<0.000000e+00> : vector<1x800xf32>
    %11 = tpu.matmul %9, %10, %cst_12 {dimension_numbers = #tpu.dot_dimension_numbers<[1], [0], [0], [1], [0, 0, 1, 1], [], []>} : vector<1x400xf32>, vector<400x800xf32>, vector<1x800xf32> -> vector<1x800xf32>
    %c0_13 = arith.constant 0 : index
    %c0_14 = arith.constant 0 : index
    %12 = vector.load %arg6[%c0_13, %c0_14] : memref<1x800xf32, #tpu.memory_space<vmem>>, vector<1x800xf32>
    %13 = arith.addf %11, %12 : vector<1x800xf32>
    %cst_15 = arith.constant 0.000000e+00 : f32
    %14 = vector.broadcast %cst_15 : f32 to vector<1x800xf32>
    %15 = arith.maximumf %13, %14 : vector<1x800xf32>
    %c0_16 = arith.constant 0 : index
    %c0_17 = arith.constant 0 : index
    %16 = vector.load %arg7[%c0_16, %c0_17] : memref<800x128xf32, #tpu.memory_space<vmem>>, vector<800x128xf32>
    %cst_18 = arith.constant dense<0.000000e+00> : vector<1x128xf32>
    %17 = tpu.matmul %15, %16, %cst_18 {dimension_numbers = #tpu.dot_dimension_numbers<[1], [0], [0], [1], [0, 0, 1, 1], [], []>} : vector<1x800xf32>, vector<800x128xf32>, vector<1x128xf32> -> vector<1x128xf32>
    %c0_19 = arith.constant 0 : index
    %c0_20 = arith.constant 0 : index
    %18 = vector.load %arg8[%c0_19, %c0_20] : memref<1x128xf32, #tpu.memory_space<vmem>>, vector<1x128xf32>
    %19 = arith.addf %17, %18 : vector<1x128xf32>
    %cst_21 = arith.constant 0.000000e+00 : f32
    %20 = vector.broadcast %cst_21 : f32 to vector<1x128xf32>
    %21 = arith.maximumf %19, %20 : vector<1x128xf32>
    %c0_22 = arith.constant 0 : index
    %c0_23 = arith.constant 0 : index
    %22 = vector.load %arg9[%c0_22, %c0_23] : memref<128x24xf32, #tpu.memory_space<vmem>>, vector<128x24xf32>
    %cst_24 = arith.constant dense<0.000000e+00> : vector<1x24xf32>
    %23 = tpu.matmul %21, %22, %cst_24 {dimension_numbers = #tpu.dot_dimension_numbers<[1], [0], [0], [1], [0, 0, 1, 1], [], []>} : vector<1x128xf32>, vector<128x24xf32>, vector<1x24xf32> -> vector<1x24xf32>
    %c0_25 = arith.constant 0 : index
    %c0_26 = arith.constant 0 : index
    %24 = vector.load %arg10[%c0_25, %c0_26] : memref<1x24xf32, #tpu.memory_space<vmem>>, vector<1x24xf32>
    %25 = arith.addf %23, %24 : vector<1x24xf32>
    %c0_27 = arith.constant 0 : index
    %c0_28 = arith.constant 0 : index
    %c0_29 = arith.constant 0 : index
    %26 = vector.load %arg20[%c0_27, %c0_28, %c0_29] : memref<1x1x24xf32, #tpu.memory_space<vmem>>, vector<1x1x24xf32>
    %27 = vector.shape_cast %26 : vector<1x1x24xf32> to vector<1x24xf32>
    %28 = vector.shape_cast %25 : vector<1x24xf32> to vector<1x1x24xf32>
    tpu.vector_store %arg20[%c0_27, %c0_28, %c0_29], %28 {strides = array<i32>} : memref<1x1x24xf32, #tpu.memory_space<vmem>>, vector<1x1x24xf32>,
    %29 = vector.extract_strided_slice %25 {offsets = [0, 0], sizes = [1, 12], strides = [1, 1]} : vector<1x24xf32> to vector<1x12xf32>
    %30 = vector.extract_strided_slice %25 {offsets = [0, 12], sizes = [1, 12], strides = [1, 1]} : vector<1x24xf32> to vector<1x12xf32>
    %cst_30 = arith.constant 5.000000e-01 : f32
    %31 = vector.broadcast %cst_30 : f32 to vector<1x12xf32>
    %32 = arith.mulf %31, %30 : vector<1x12xf32>
    %33 = math.exp %32 : vector<1x12xf32>
    %34 = arith.mulf %3, %33 : vector<1x12xf32>
    %35 = arith.addf %29, %34 : vector<1x12xf32>
    %c0_31 = arith.constant 0 : index
    %c0_32 = arith.constant 0 : index
    %36 = vector.load %arg11[%c0_31, %c0_32] : memref<12x128xf32, #tpu.memory_space<vmem>>, vector<12x128xf32>
    %cst_33 = arith.constant dense<0.000000e+00> : vector<1x128xf32>
    %37 = tpu.matmul %35, %36, %cst_33 {dimension_numbers = #tpu.dot_dimension_numbers<[1], [0], [0], [1], [0, 0, 1, 1], [], []>} : vector<1x12xf32>, vector<12x128xf32>, vector<1x128xf32> -> vector<1x128xf32>
    %c0_34 = arith.constant 0 : index
    %c0_35 = arith.constant 0 : index
    %38 = vector.load %arg12[%c0_34, %c0_35] : memref<1x128xf32, #tpu.memory_space<vmem>>, vector<1x128xf32>
    %39 = arith.addf %37, %38 : vector<1x128xf32>
    %cst_36 = arith.constant 0.000000e+00 : f32
    %40 = vector.broadcast %cst_36 : f32 to vector<1x128xf32>
    %41 = arith.maximumf %39, %40 : vector<1x128xf32>
    %c0_37 = arith.constant 0 : index
    %c0_38 = arith.constant 0 : index
    %42 = vector.load %arg13[%c0_37, %c0_38] : memref<128x800xf32, #tpu.memory_space<vmem>>, vector<128x800xf32>
    %cst_39 = arith.constant dense<0.000000e+00> : vector<1x800xf32>
    %43 = tpu.matmul %41, %42, %cst_39 {dimension_numbers = #tpu.dot_dimension_numbers<[1], [0], [0], [1], [0, 0, 1, 1], [], []>} : vector<1x128xf32>, vector<128x800xf32>, vector<1x800xf32> -> vector<1x800xf32>
    %c0_40 = arith.constant 0 : index
    %c0_41 = arith.constant 0 : index
    %44 = vector.load %arg14[%c0_40, %c0_41] : memref<1x800xf32, #tpu.memory_space<vmem>>, vector<1x800xf32>
    %45 = arith.addf %43, %44 : vector<1x800xf32>
    %cst_42 = arith.constant 0.000000e+00 : f32
    %46 = vector.broadcast %cst_42 : f32 to vector<1x800xf32>
    %47 = arith.maximumf %45, %46 : vector<1x800xf32>
    %c0_43 = arith.constant 0 : index
    %c0_44 = arith.constant 0 : index
    %48 = vector.load %arg15[%c0_43, %c0_44] : memref<800x400xf32, #tpu.memory_space<vmem>>, vector<800x400xf32>
    %cst_45 = arith.constant dense<0.000000e+00> : vector<1x400xf32>
    %49 = tpu.matmul %47, %48, %cst_45 {dimension_numbers = #tpu.dot_dimension_numbers<[1], [0], [0], [1], [0, 0, 1, 1], [], []>} : vector<1x800xf32>, vector<800x400xf32>, vector<1x400xf32> -> vector<1x400xf32>
    %c0_46 = arith.constant 0 : index
    %c0_47 = arith.constant 0 : index
    %50 = vector.load %arg16[%c0_46, %c0_47] : memref<1x400xf32, #tpu.memory_space<vmem>>, vector<1x400xf32>
    %51 = arith.addf %49, %50 : vector<1x400xf32>
    %cst_48 = arith.constant 0.000000e+00 : f32
    %52 = vector.broadcast %cst_48 : f32 to vector<1x400xf32>
    %53 = arith.maximumf %51, %52 : vector<1x400xf32>
    %c0_49 = arith.constant 0 : index
    %c0_50 = arith.constant 0 : index
    %54 = vector.load %arg17[%c0_49, %c0_50] : memref<400x25xf32, #tpu.memory_space<vmem>>, vector<400x25xf32>
    %cst_51 = arith.constant dense<0.000000e+00> : vector<1x25xf32>
    %55 = tpu.matmul %53, %54, %cst_51 {dimension_numbers = #tpu.dot_dimension_numbers<[1], [0], [0], [1], [0, 0, 1, 1], [], []>} : vector<1x400xf32>, vector<400x25xf32>, vector<1x25xf32> -> vector<1x25xf32>
    %c0_52 = arith.constant 0 : index
    %c0_53 = arith.constant 0 : index
    %56 = vector.load %arg18[%c0_52, %c0_53] : memref<1x25xf32, #tpu.memory_space<vmem>>, vector<1x25xf32>
    %57 = arith.addf %55, %56 : vector<1x25xf32>
    %58 = arith.negf %57 : vector<1x25xf32>
    %59 = math.exp %58 : vector<1x25xf32>
    %cst_54 = arith.constant 1.000000e+00 : f32
    %60 = vector.broadcast %cst_54 : f32 to vector<1x25xf32>
    %61 = arith.addf %60, %59 : vector<1x25xf32>
    %62 = arith.divf %60, %61 : vector<1x25xf32>
    %c0_55 = arith.constant 0 : index
    %c0_56 = arith.constant 0 : index
    %c0_57 = arith.constant 0 : index
    %63 = vector.load %arg19[%c0_55, %c0_56, %c0_57] : memref<1x1x25xf32, #tpu.memory_space<vmem>>, vector<1x1x25xf32>
    %64 = vector.shape_cast %63 : vector<1x1x25xf32> to vector<1x25xf32>
    %65 = vector.shape_cast %62 : vector<1x25xf32> to vector<1x1x25xf32>
    tpu.vector_store %arg19[%c0_55, %c0_56, %c0_57], %65 {strides = array<i32>} : memref<1x1x25xf32, #tpu.memory_space<vmem>>, vector<1x1x25xf32>,
    return
  }
  func.func @transform_0(%arg0: i32) -> (i32, i32, i32) {
    %c0_i32 = arith.constant 0 : i32
    %c0_i32_0 = arith.constant 0 : i32
    %c0_i32_1 = arith.constant 0 : i32
    return %arg0, %c0_i32, %c0_i32_0 : i32, i32, i32
  }
  func.func @transform_1(%arg0: i32) -> (i32, i32, i32) {
    %c0_i32 = arith.constant 0 : i32
    %c0_i32_0 = arith.constant 0 : i32
    %c0_i32_1 = arith.constant 0 : i32
    return %arg0, %c0_i32, %c0_i32_0 : i32, i32, i32
  }
  func.func @transform_2(%arg0: i32) -> (i32, i32) {
    %c0_i32 = arith.constant 0 : i32
    %c0_i32_0 = arith.constant 0 : i32
    %c0_i32_1 = arith.constant 0 : i32
    return %c0_i32, %c0_i32_0 : i32, i32
  }
  func.func @transform_3(%arg0: i32) -> (i32, i32) {
    %c0_i32 = arith.constant 0 : i32
    %c0_i32_0 = arith.constant 0 : i32
    %c0_i32_1 = arith.constant 0 : i32
    return %c0_i32, %c0_i32_0 : i32, i32
  }
  func.func @transform_4(%arg0: i32) -> (i32, i32) {
    %c0_i32 = arith.constant 0 : i32
    %c0_i32_0 = arith.constant 0 : i32
    %c0_i32_1 = arith.constant 0 : i32
    return %c0_i32, %c0_i32_0 : i32, i32
  }
  func.func @transform_5(%arg0: i32) -> (i32, i32) {
    %c0_i32 = arith.constant 0 : i32
    %c0_i32_0 = arith.constant 0 : i32
    %c0_i32_1 = arith.constant 0 : i32
    return %c0_i32, %c0_i32_0 : i32, i32
  }
  func.func @transform_6(%arg0: i32) -> (i32, i32) {
    %c0_i32 = arith.constant 0 : i32
    %c0_i32_0 = arith.constant 0 : i32
    %c0_i32_1 = arith.constant 0 : i32
    return %c0_i32, %c0_i32_0 : i32, i32
  }
  func.func @transform_7(%arg0: i32) -> (i32, i32) {
    %c0_i32 = arith.constant 0 : i32
    %c0_i32_0 = arith.constant 0 : i32
    %c0_i32_1 = arith.constant 0 : i32
    return %c0_i32, %c0_i32_0 : i32, i32
  }
  func.func @transform_8(%arg0: i32) -> (i32, i32) {
    %c0_i32 = arith.constant 0 : i32
    %c0_i32_0 = arith.constant 0 : i32
    %c0_i32_1 = arith.constant 0 : i32
    return %c0_i32, %c0_i32_0 : i32, i32
  }
  func.func @transform_9(%arg0: i32) -> (i32, i32) {
    %c0_i32 = arith.constant 0 : i32
    %c0_i32_0 = arith.constant 0 : i32
    %c0_i32_1 = arith.constant 0 : i32
    return %c0_i32, %c0_i32_0 : i32, i32
  }
  func.func @transform_10(%arg0: i32) -> (i32, i32) {
    %c0_i32 = arith.constant 0 : i32
    %c0_i32_0 = arith.constant 0 : i32
    %c0_i32_1 = arith.constant 0 : i32
    return %c0_i32, %c0_i32_0 : i32, i32
  }
  func.func @transform_11(%arg0: i32) -> (i32, i32) {
    %c0_i32 = arith.constant 0 : i32
    %c0_i32_0 = arith.constant 0 : i32
    %c0_i32_1 = arith.constant 0 : i32
    return %c0_i32, %c0_i32_0 : i32, i32
  }
  func.func @transform_12(%arg0: i32) -> (i32, i32) {
    %c0_i32 = arith.constant 0 : i32
    %c0_i32_0 = arith.constant 0 : i32
    %c0_i32_1 = arith.constant 0 : i32
    return %c0_i32, %c0_i32_0 : i32, i32
  }
  func.func @transform_13(%arg0: i32) -> (i32, i32) {
    %c0_i32 = arith.constant 0 : i32
    %c0_i32_0 = arith.constant 0 : i32
    %c0_i32_1 = arith.constant 0 : i32
    return %c0_i32, %c0_i32_0 : i32, i32
  }
  func.func @transform_14(%arg0: i32) -> (i32, i32) {
    %c0_i32 = arith.constant 0 : i32
    %c0_i32_0 = arith.constant 0 : i32
    %c0_i32_1 = arith.constant 0 : i32
    return %c0_i32, %c0_i32_0 : i32, i32
  }
  func.func @transform_15(%arg0: i32) -> (i32, i32) {
    %c0_i32 = arith.constant 0 : i32
    %c0_i32_0 = arith.constant 0 : i32
    %c0_i32_1 = arith.constant 0 : i32
    return %c0_i32, %c0_i32_0 : i32, i32
  }
  func.func @transform_16(%arg0: i32) -> (i32, i32) {
    %c0_i32 = arith.constant 0 : i32
    %c0_i32_0 = arith.constant 0 : i32
    %c0_i32_1 = arith.constant 0 : i32
    return %c0_i32, %c0_i32_0 : i32, i32
  }
  func.func @transform_17(%arg0: i32) -> (i32, i32) {
    %c0_i32 = arith.constant 0 : i32
    %c0_i32_0 = arith.constant 0 : i32
    %c0_i32_1 = arith.constant 0 : i32
    return %c0_i32, %c0_i32_0 : i32, i32
  }
  func.func @transform_18(%arg0: i32) -> (i32, i32, i32) {
    %c0_i32 = arith.constant 0 : i32
    %c0_i32_0 = arith.constant 0 : i32
    %c0_i32_1 = arith.constant 0 : i32
    return %arg0, %c0_i32, %c0_i32_0 : i32, i32, i32
  }
  func.func @transform_19(%arg0: i32) -> (i32, i32, i32) {
    %c0_i32 = arith.constant 0 : i32
    %c0_i32_0 = arith.constant 0 : i32
    %c0_i32_1 = arith.constant 0 : i32
    return %arg0, %c0_i32, %c0_i32_0 : i32, i32, i32
  }
}

</mosaic_0001>

<llo_original>
// kernel: vae_forward.1
$region0: #{vae_forward.1}
  #allocation0 [shape = 'u32[]', space=smem, size = 0x4, offset = 0x4, fixed_abs, tag = 'smem constant byte address 0x4 - core index']
  #allocation1 [shape = 'u32[144,128]{1,0:T(1,128)}', space=vmem, size = 0x12000, scoped, tag = 'internal scratch']
  %s0 = inlined_call_operand.vmem [shape: f32[2,1,25], index: 0, kind: input, shape index: {}]
  %s1 = inlined_call_operand.vmem [shape: f32[2,1,12], index: 1, kind: input, shape index: {}]
  %s2 = inlined_call_operand.vmem [shape: f32[25,400], index: 2, kind: input, shape index: {}]
  %s3 = inlined_call_operand.vmem [shape: f32[1,400], index: 3, kind: input, shape index: {}]
  %s4 = inlined_call_operand.vmem [shape: f32[400,800], index: 4, kind: input, shape index: {}]
  %s5 = inlined_call_operand.vmem [shape: f32[1,800], index: 5, kind: input, shape index: {}]
  %s6 = inlined_call_operand.vmem [shape: f32[800,128], index: 6, kind: input, shape index: {}]
  %s7 = inlined_call_operand.vmem [shape: f32[1,128], index: 7, kind: input, shape index: {}]
  %s8 = inlined_call_operand.vmem [shape: f32[128,24], index: 8, kind: input, shape index: {}]
  %s9 = inlined_call_operand.vmem [shape: f32[1,24], index: 9, kind: input, shape index: {}]
  %s10 = inlined_call_operand.vmem [shape: f32[12,128], index: 10, kind: input, shape index: {}]
  %s11 = inlined_call_operand.vmem [shape: f32[1,128], index: 11, kind: input, shape index: {}]
  %s12 = inlined_call_operand.vmem [shape: f32[128,800], index: 12, kind: input, shape index: {}]
  %s13 = inlined_call_operand.vmem [shape: f32[1,800], index: 13, kind: input, shape index: {}]
  %s14 = inlined_call_operand.vmem [shape: f32[800,400], index: 14, kind: input, shape index: {}]
  %s15 = inlined_call_operand.vmem [shape: f32[1,400], index: 15, kind: input, shape index: {}]
  %s16 = inlined_call_operand.vmem [shape: f32[400,25], index: 16, kind: input, shape index: {}]
  %s17 = inlined_call_operand.vmem [shape: f32[1,25], index: 17, kind: input, shape index: {}]
  %s18 = inlined_call_operand.vmem [shape: f32[2,1,25], index: 18, kind: output, shape index: {0}]
  %s19 = inlined_call_operand.vmem [shape: f32[2,1,24], index: 19, kind: output, shape index: {1}]
  %20 = xla_tuple %s18, %s19
  %s21 = sld [smem:[#allocation0]]
  $region113: #{vae_forward.1} parent=0
    _
  %s23 = ssub.s32 1, %s21
  %s24 = scalar_select 0, %s23, %s21
  loop: start=0, step=1, limit=4
  $region2: #{vae_forward.1} parent=0 // loop_pre_header
    _
  $region3: #{vae_forward.1} parent=0 // loop_header
    %s26 = sphi 0, %s30
    %p27 = scmp.ge.s32.totalorder %s26, 4
    %s36 = sphi 0, %s38
    %s39 = sphi 0, %s36
    %s40 = sphi 0, %s39
    %s56 = sphi 0, %s40
    %s62 = sphi 0, %s64
    %s65 = sphi 0, %s62
    %s66 = sphi 0, %s65
    %s82 = sphi 0, %s66
    %s86 = sphi 0, %s86
    %s88 = sphi 0, %s86
    %s89 = sphi 0, %s88
    %s103 = sphi 0, %s89
    %s107 = sphi 0, %s107
    %s109 = sphi 0, %s107
    %s110 = sphi 0, %s109
    %s124 = sphi 0, %s110
    %s128 = sphi 0, %s128
    %s130 = sphi 0, %s128
    %s131 = sphi 0, %s130
    %s145 = sphi 0, %s131
    %s149 = sphi 0, %s149
    %s151 = sphi 0, %s149
    %s152 = sphi 0, %s151
    %s166 = sphi 0, %s152
    %s170 = sphi 0, %s170
    %s172 = sphi 0, %s170
    %s173 = sphi 0, %s172
    %s187 = sphi 0, %s173
    %s191 = sphi 0, %s191
    %s193 = sphi 0, %s191
    %s194 = sphi 0, %s193
    %s208 = sphi 0, %s194
    %s212 = sphi 0, %s212
    %s214 = sphi 0, %s212
    %s215 = sphi 0, %s214
    %s229 = sphi 0, %s215
    %s233 = sphi 0, %s233
    %s235 = sphi 0, %s233
    %s236 = sphi 0, %s235
    %s250 = sphi 0, %s236
    %s254 = sphi 0, %s254
    %s256 = sphi 0, %s254
    %s257 = sphi 0, %s256
    %s271 = sphi 0, %s257
    %s275 = sphi 0, %s275
    %s277 = sphi 0, %s275
    %s278 = sphi 0, %s277
    %s292 = sphi 0, %s278
    %s296 = sphi 0, %s296
    %s298 = sphi 0, %s296
    %s299 = sphi 0, %s298
    %s313 = sphi 0, %s299
    %s317 = sphi 0, %s317
    %s319 = sphi 0, %s317
    %s320 = sphi 0, %s319
    %s334 = sphi 0, %s320
    %s338 = sphi 0, %s338
    %s340 = sphi 0, %s338
    %s341 = sphi 0, %s340
    %s355 = sphi 0, %s341
    %s359 = sphi 0, %s359
    %s361 = sphi 0, %s359
    %s362 = sphi 0, %s361
    %s376 = sphi 0, %s362
    %s380 = sphi 0, %s380
    %s382 = sphi 0, %s380
    %s383 = sphi 0, %s382
    %s397 = sphi 0, %s383
    %s401 = sphi 0, %s401
    %s403 = sphi 0, %s401
    %s404 = sphi 0, %s403
    %s418 = sphi 0, %s404
    %s424 = sphi 0, %s426
    %s427 = sphi 0, %s424
    %s428 = sphi 0, %s427
    %s444 = sphi 0, %s428
    %s450 = sphi 0, %s452
    %s453 = sphi 0, %s450
    %s454 = sphi 0, %s453
    %s470 = sphi 0, %s454
  $region4: #{vae_forward.1} parent=0 // loop_header_branch
    %29 = sbr.rel (%p27) target = $region8
  $region5: #{vae_forward.1} parent=0 // loop_body
    %s31 = ssub.s32 %s26, 1
    %s32 = ssub.s32 %s26, 2
    %s33 = sadd.s32 %s26, 1
    %s34 = ssub.s32 %s26, %s33
    %p35 = scmp.eq.s32.totalorder %s34, 0
    %s37 = sadd.s32 %s36, 1
    %s38 = scalar_select %p35, %s36, %s37
    %p41 = pneg %p35
    %p42 = scmp.eq.s32.totalorder %s26, 1
    %p43 = por %p41, %p42
    %p44 = scmp.ne.s32.totalorder %s36, %s39
    %p45 = scmp.eq.s32.totalorder %s26, 0
    %p46 = por %p44, %p45
    %p47 = scmp.ne.s32.totalorder %s36, %s39
    %p48 = scmp.eq.s32.totalorder %s31, 1
    %p49 = por %p47, %p48
    %p50 = scmp.ne.s32.totalorder %s39, %s40
    %p51 = scmp.eq.s32.totalorder %s31, 0
    %p52 = por %p50, %p51
    %p53 = scmp.ne.s32.totalorder %s39, %s40
    %p54 = scmp.eq.s32.totalorder %s32, 1
    %p55 = por %p53, %p54
    %p57 = scmp.ne.s32.totalorder %s40, %s56
    %p58 = scmp.eq.s32.totalorder %s32, 0
    %p59 = por %p57, %p58
    %s60 = ssub.s32 %s26, %s33
    %p61 = scmp.eq.s32.totalorder %s60, 0
    %s63 = sadd.s32 %s62, 1
    %s64 = scalar_select %p61, %s62, %s63
    %p67 = pneg %p61
    %p68 = scmp.eq.s32.totalorder %s26, 1
    %p69 = por %p67, %p68
    %p70 = scmp.ne.s32.totalorder %s62, %s65
    %p71 = scmp.eq.s32.totalorder %s26, 0
    %p72 = por %p70, %p71
    %p73 = scmp.ne.s32.totalorder %s62, %s65
    %p74 = scmp.eq.s32.totalorder %s31, 1
    %p75 = por %p73, %p74
    %p76 = scmp.ne.s32.totalorder %s65, %s66
    %p77 = scmp.eq.s32.totalorder %s31, 0
    %p78 = por %p76, %p77
    %p79 = scmp.ne.s32.totalorder %s65, %s66
    %p80 = scmp.eq.s32.totalorder %s32, 1
    %p81 = por %p79, %p80
    %p83 = scmp.ne.s32.totalorder %s66, %s82
    %p84 = scmp.eq.s32.totalorder %s32, 0
    %p85 = por %p83, %p84
    %s87 = sadd.s32 %s86, 1
    %p90 = scmp.eq.s32.totalorder %s26, 1
    %p91 = scmp.ne.s32.totalorder %s86, %s88
    %p92 = scmp.eq.s32.totalorder %s26, 0
    %p93 = por %p91, %p92
    %p94 = scmp.ne.s32.totalorder %s86, %s88
    %p95 = scmp.eq.s32.totalorder %s31, 1
    %p96 = por %p94, %p95
    %p97 = scmp.ne.s32.totalorder %s88, %s89
    %p98 = scmp.eq.s32.totalorder %s31, 0
    %p99 = por %p97, %p98
    %p100 = scmp.ne.s32.totalorder %s88, %s89
    %p101 = scmp.eq.s32.totalorder %s32, 1
    %p102 = por %p100, %p101
    %p104 = scmp.ne.s32.totalorder %s89, %s103
    %p105 = scmp.eq.s32.totalorder %s32, 0
    %p106 = por %p104, %p105
    %s108 = sadd.s32 %s107, 1
    %p111 = scmp.eq.s32.totalorder %s26, 1
    %p112 = scmp.ne.s32.totalorder %s107, %s109
    %p113 = scmp.eq.s32.totalorder %s26, 0
    %p114 = por %p112, %p113
    %p115 = scmp.ne.s32.totalorder %s107, %s109
    %p116 = scmp.eq.s32.totalorder %s31, 1
    %p117 = por %p115, %p116
    %p118 = scmp.ne.s32.totalorder %s109, %s110
    %p119 = scmp.eq.s32.totalorder %s31, 0
    %p120 = por %p118, %p119
    %p121 = scmp.ne.s32.totalorder %s109, %s110
    %p122 = scmp.eq.s32.totalorder %s32, 1
    %p123 = por %p121, %p122
    %p125 = scmp.ne.s32.totalorder %s110, %s124
    %p126 = scmp.eq.s32.totalorder %s32, 0
    %p127 = por %p125, %p126
    %s129 = sadd.s32 %s128, 1
    %p132 = scmp.eq.s32.totalorder %s26, 1
    %p133 = scmp.ne.s32.totalorder %s128, %s130
    %p134 = scmp.eq.s32.totalorder %s26, 0
    %p135 = por %p133, %p134
    %p136 = scmp.ne.s32.totalorder %s128, %s130
    %p137 = scmp.eq.s32.totalorder %s31, 1
    %p138 = por %p136, %p137
    %p139 = scmp.ne.s32.totalorder %s130, %s131
    %p140 = scmp.eq.s32.totalorder %s31, 0
    %p141 = por %p139, %p140
    %p142 = scmp.ne.s32.totalorder %s130, %s131
    %p143 = scmp.eq.s32.totalorder %s32, 1
    %p144 = por %p142, %p143
    %p146 = scmp.ne.s32.totalorder %s131, %s145
    %p147 = scmp.eq.s32.totalorder %s32, 0
    %p148 = por %p146, %p147
    %s150 = sadd.s32 %s149, 1
    %p153 = scmp.eq.s32.totalorder %s26, 1
    %p154 = scmp.ne.s32.totalorder %s149, %s151
    %p155 = scmp.eq.s32.totalorder %s26, 0
    %p156 = por %p154, %p155
    %p157 = scmp.ne.s32.totalorder %s149, %s151
    %p158 = scmp.eq.s32.totalorder %s31, 1
    %p159 = por %p157, %p158
    %p160 = scmp.ne.s32.totalorder %s151, %s152
    %p161 = scmp.eq.s32.totalorder %s31, 0
    %p162 = por %p160, %p161
    %p163 = scmp.ne.s32.totalorder %s151, %s152
    %p164 = scmp.eq.s32.totalorder %s32, 1
    %p165 = por %p163, %p164
    %p167 = scmp.ne.s32.totalorder %s152, %s166
    %p168 = scmp.eq.s32.totalorder %s32, 0
    %p169 = por %p167, %p168
    %s171 = sadd.s32 %s170, 1
    %p174 = scmp.eq.s32.totalorder %s26, 1
    %p175 = scmp.ne.s32.totalorder %s170, %s172
    %p176 = scmp.eq.s32.totalorder %s26, 0
    %p177 = por %p175, %p176
    %p178 = scmp.ne.s32.totalorder %s170, %s172
    %p179 = scmp.eq.s32.totalorder %s31, 1
    %p180 = por %p178, %p179
    %p181 = scmp.ne.s32.totalorder %s172, %s173
    %p182 = scmp.eq.s32.totalorder %s31, 0
    %p183 = por %p181, %p182
    %p184 = scmp.ne.s32.totalorder %s172, %s173
    %p185 = scmp.eq.s32.totalorder %s32, 1
    %p186 = por %p184, %p185
    %p188 = scmp.ne.s32.totalorder %s173, %s187
    %p189 = scmp.eq.s32.totalorder %s32, 0
    %p190 = por %p188, %p189
    %s192 = sadd.s32 %s191, 1
    %p195 = scmp.eq.s32.totalorder %s26, 1
    %p196 = scmp.ne.s32.totalorder %s191, %s193
    %p197 = scmp.eq.s32.totalorder %s26, 0
    %p198 = por %p196, %p197
    %p199 = scmp.ne.s32.totalorder %s191, %s193
    %p200 = scmp.eq.s32.totalorder %s31, 1
    %p201 = por %p199, %p200
    %p202 = scmp.ne.s32.totalorder %s193, %s194
    %p203 = scmp.eq.s32.totalorder %s31, 0
    %p204 = por %p202, %p203
    %p205 = scmp.ne.s32.totalorder %s193, %s194
    %p206 = scmp.eq.s32.totalorder %s32, 1
    %p207 = por %p205, %p206
    %p209 = scmp.ne.s32.totalorder %s194, %s208
    %p210 = scmp.eq.s32.totalorder %s32, 0
    %p211 = por %p209, %p210
    %s213 = sadd.s32 %s212, 1
    %p216 = scmp.eq.s32.totalorder %s26, 1
    %p217 = scmp.ne.s32.totalorder %s212, %s214
    %p218 = scmp.eq.s32.totalorder %s26, 0
    %p219 = por %p217, %p218
    %p220 = scmp.ne.s32.totalorder %s212, %s214
    %p221 = scmp.eq.s32.totalorder %s31, 1
    %p222 = por %p220, %p221
    %p223 = scmp.ne.s32.totalorder %s214, %s215
    %p224 = scmp.eq.s32.totalorder %s31, 0
    %p225 = por %p223, %p224
    %p226 = scmp.ne.s32.totalorder %s214, %s215
    %p227 = scmp.eq.s32.totalorder %s32, 1
    %p228 = por %p226, %p227
    %p230 = scmp.ne.s32.totalorder %s215, %s229
    %p231 = scmp.eq.s32.totalorder %s32, 0
    %p232 = por %p230, %p231
    %s234 = sadd.s32 %s233, 1
    %p237 = scmp.eq.s32.totalorder %s26, 1
    %p238 = scmp.ne.s32.totalorder %s233, %s235
    %p239 = scmp.eq.s32.totalorder %s26, 0
    %p240 = por %p238, %p239
    %p241 = scmp.ne.s32.totalorder %s233, %s235
    %p242 = scmp.eq.s32.totalorder %s31, 1
    %p243 = por %p241, %p242
    %p244 = scmp.ne.s32.totalorder %s235, %s236
    %p245 = scmp.eq.s32.totalorder %s31, 0
    %p246 = por %p244, %p245
    %p247 = scmp.ne.s32.totalorder %s235, %s236
    %p248 = scmp.eq.s32.totalorder %s32, 1
    %p249 = por %p247, %p248
    %p251 = scmp.ne.s32.totalorder %s236, %s250
    %p252 = scmp.eq.s32.totalorder %s32, 0
    %p253 = por %p251, %p252
    %s255 = sadd.s32 %s254, 1
    %p258 = scmp.eq.s32.totalorder %s26, 1
    %p259 = scmp.ne.s32.totalorder %s254, %s256
    %p260 = scmp.eq.s32.totalorder %s26, 0
    %p261 = por %p259, %p260
    %p262 = scmp.ne.s32.totalorder %s254, %s256
    %p263 = scmp.eq.s32.totalorder %s31, 1
    %p264 = por %p262, %p263
    %p265 = scmp.ne.s32.totalorder %s256, %s257
    %p266 = scmp.eq.s32.totalorder %s31, 0
    %p267 = por %p265, %p266
    %p268 = scmp.ne.s32.totalorder %s256, %s257
    %p269 = scmp.eq.s32.totalorder %s32, 1
    %p270 = por %p268, %p269
    %p272 = scmp.ne.s32.totalorder %s257, %s271
    %p273 = scmp.eq.s32.totalorder %s32, 0
    %p274 = por %p272, %p273
    %s276 = sadd.s32 %s275, 1
    %p279 = scmp.eq.s32.totalorder %s26, 1
    %p280 = scmp.ne.s32.totalorder %s275, %s277
    %p281 = scmp.eq.s32.totalorder %s26, 0
    %p282 = por %p280, %p281
    %p283 = scmp.ne.s32.totalorder %s275, %s277
    %p284 = scmp.eq.s32.totalorder %s31, 1
    %p285 = por %p283, %p284
    %p286 = scmp.ne.s32.totalorder %s277, %s278
    %p287 = scmp.eq.s32.totalorder %s31, 0
    %p288 = por %p286, %p287
    %p289 = scmp.ne.s32.totalorder %s277, %s278
    %p290 = scmp.eq.s32.totalorder %s32, 1
    %p291 = por %p289, %p290
    %p293 = scmp.ne.s32.totalorder %s278, %s292
    %p294 = scmp.eq.s32.totalorder %s32, 0
    %p295 = por %p293, %p294
    %s297 = sadd.s32 %s296, 1
    %p300 = scmp.eq.s32.totalorder %s26, 1
    %p301 = scmp.ne.s32.totalorder %s296, %s298
    %p302 = scmp.eq.s32.totalorder %s26, 0
    %p303 = por %p301, %p302
    %p304 = scmp.ne.s32.totalorder %s296, %s298
    %p305 = scmp.eq.s32.totalorder %s31, 1
    %p306 = por %p304, %p305
    %p307 = scmp.ne.s32.totalorder %s298, %s299
    %p308 = scmp.eq.s32.totalorder %s31, 0
    %p309 = por %p307, %p308
    %p310 = scmp.ne.s32.totalorder %s298, %s299
    %p311 = scmp.eq.s32.totalorder %s32, 1
    %p312 = por %p310, %p311
    %p314 = scmp.ne.s32.totalorder %s299, %s313
    %p315 = scmp.eq.s32.totalorder %s32, 0
    %p316 = por %p314, %p315
    %s318 = sadd.s32 %s317, 1
    %p321 = scmp.eq.s32.totalorder %s26, 1
    %p322 = scmp.ne.s32.totalorder %s317, %s319
    %p323 = scmp.eq.s32.totalorder %s26, 0
    %p324 = por %p322, %p323
    %p325 = scmp.ne.s32.totalorder %s317, %s319
    %p326 = scmp.eq.s32.totalorder %s31, 1
    %p327 = por %p325, %p326
    %p328 = scmp.ne.s32.totalorder %s319, %s320
    %p329 = scmp.eq.s32.totalorder %s31, 0
    %p330 = por %p328, %p329
    %p331 = scmp.ne.s32.totalorder %s319, %s320
    %p332 = scmp.eq.s32.totalorder %s32, 1
    %p333 = por %p331, %p332
    %p335 = scmp.ne.s32.totalorder %s320, %s334
    %p336 = scmp.eq.s32.totalorder %s32, 0
    %p337 = por %p335, %p336
    %s339 = sadd.s32 %s338, 1
    %p342 = scmp.eq.s32.totalorder %s26, 1
    %p343 = scmp.ne.s32.totalorder %s338, %s340
    %p344 = scmp.eq.s32.totalorder %s26, 0
    %p345 = por %p343, %p344
    %p346 = scmp.ne.s32.totalorder %s338, %s340
    %p347 = scmp.eq.s32.totalorder %s31, 1
    %p348 = por %p346, %p347
    %p349 = scmp.ne.s32.totalorder %s340, %s341
    %p350 = scmp.eq.s32.totalorder %s31, 0
    %p351 = por %p349, %p350
    %p352 = scmp.ne.s32.totalorder %s340, %s341
    %p353 = scmp.eq.s32.totalorder %s32, 1
    %p354 = por %p352, %p353
    %p356 = scmp.ne.s32.totalorder %s341, %s355
    %p357 = scmp.eq.s32.totalorder %s32, 0
    %p358 = por %p356, %p357
    %s360 = sadd.s32 %s359, 1
    %p363 = scmp.eq.s32.totalorder %s26, 1
    %p364 = scmp.ne.s32.totalorder %s359, %s361
    %p365 = scmp.eq.s32.totalorder %s26, 0
    %p366 = por %p364, %p365
    %p367 = scmp.ne.s32.totalorder %s359, %s361
    %p368 = scmp.eq.s32.totalorder %s31, 1
    %p369 = por %p367, %p368
    %p370 = scmp.ne.s32.totalorder %s361, %s362
    %p371 = scmp.eq.s32.totalorder %s31, 0
    %p372 = por %p370, %p371
    %p373 = scmp.ne.s32.totalorder %s361, %s362
    %p374 = scmp.eq.s32.totalorder %s32, 1
    %p375 = por %p373, %p374
    %p377 = scmp.ne.s32.totalorder %s362, %s376
    %p378 = scmp.eq.s32.totalorder %s32, 0
    %p379 = por %p377, %p378
    %s381 = sadd.s32 %s380, 1
    %p384 = scmp.eq.s32.totalorder %s26, 1
    %p385 = scmp.ne.s32.totalorder %s380, %s382
    %p386 = scmp.eq.s32.totalorder %s26, 0
    %p387 = por %p385, %p386
    %p388 = scmp.ne.s32.totalorder %s380, %s382
    %p389 = scmp.eq.s32.totalorder %s31, 1
    %p390 = por %p388, %p389
    %p391 = scmp.ne.s32.totalorder %s382, %s383
    %p392 = scmp.eq.s32.totalorder %s31, 0
    %p393 = por %p391, %p392
    %p394 = scmp.ne.s32.totalorder %s382, %s383
    %p395 = scmp.eq.s32.totalorder %s32, 1
    %p396 = por %p394, %p395
    %p398 = scmp.ne.s32.totalorder %s383, %s397
    %p399 = scmp.eq.s32.totalorder %s32, 0
    %p400 = por %p398, %p399
    %s402 = sadd.s32 %s401, 1
    %p405 = scmp.eq.s32.totalorder %s26, 1
    %p406 = scmp.ne.s32.totalorder %s401, %s403
    %p407 = scmp.eq.s32.totalorder %s26, 0
    %p408 = por %p406, %p407
    %p409 = scmp.ne.s32.totalorder %s401, %s403
    %p410 = scmp.eq.s32.totalorder %s31, 1
    %p411 = por %p409, %p410
    %p412 = scmp.ne.s32.totalorder %s403, %s404
    %p413 = scmp.eq.s32.totalorder %s31, 0
    %p414 = por %p412, %p413
    %p415 = scmp.ne.s32.totalorder %s403, %s404
    %p416 = scmp.eq.s32.totalorder %s32, 1
    %p417 = por %p415, %p416
    %p419 = scmp.ne.s32.totalorder %s404, %s418
    %p420 = scmp.eq.s32.totalorder %s32, 0
    %p421 = por %p419, %p420
    %s422 = ssub.s32 %s26, %s33
    %p423 = scmp.eq.s32.totalorder %s422, 0
    %s425 = sadd.s32 %s424, 1
    %s426 = scalar_select %p423, %s424, %s425
    %p429 = pneg %p423
    %p430 = scmp.eq.s32.totalorder %s26, 1
    %p431 = por %p429, %p430
    %p432 = scmp.ne.s32.totalorder %s424, %s427
    %p433 = scmp.eq.s32.totalorder %s26, 0
    %p434 = por %p432, %p433
    %p435 = scmp.ne.s32.totalorder %s424, %s427
    %p436 = scmp.eq.s32.totalorder %s31, 1
    %p437 = por %p435, %p436
    %p438 = scmp.ne.s32.totalorder %s427, %s428
    %p439 = scmp.eq.s32.totalorder %s31, 0
    %p440 = por %p438, %p439
    %p441 = scmp.ne.s32.totalorder %s427, %s428
    %p442 = scmp.eq.s32.totalorder %s32, 1
    %p443 = por %p441, %p442
    %p445 = scmp.ne.s32.totalorder %s428, %s444
    %p446 = scmp.eq.s32.totalorder %s32, 0
    %p447 = por %p445, %p446
    %s448 = ssub.s32 %s26, %s33
    %p449 = scmp.eq.s32.totalorder %s448, 0
    %s451 = sadd.s32 %s450, 1
    %s452 = scalar_select %p449, %s450, %s451
    %p455 = pneg %p449
    %p456 = scmp.eq.s32.totalorder %s26, 1
    %p457 = por %p455, %p456
    %p458 = scmp.ne.s32.totalorder %s450, %s453
    %p459 = scmp.eq.s32.totalorder %s26, 0
    %p460 = por %p458, %p459
    %p461 = scmp.ne.s32.totalorder %s450, %s453
    %p462 = scmp.eq.s32.totalorder %s31, 1
    %p463 = por %p461, %p462
    %p464 = scmp.ne.s32.totalorder %s453, %s454
    %p465 = scmp.eq.s32.totalorder %s31, 0
    %p466 = por %p464, %p465
    %p467 = scmp.ne.s32.totalorder %s453, %s454
    %p468 = scmp.eq.s32.totalorder %s32, 1
    %p469 = por %p467, %p468
    %p471 = scmp.ne.s32.totalorder %s454, %s470
    %p472 = scmp.eq.s32.totalorder %s32, 0
    %p473 = por %p471, %p472
    %p474 = scmp.le.s32.totalorder 1, %s26
    %p475 = scmp.lt.s32.totalorder %s26, 3
    %p476 = pnand %p474, %p475
    %p477 = pneg %p476
    // Predicated region
    $region9: #{vae_forward.1} parent=5 // pred_check
      _
    $region10: #{vae_forward.1} parent=5 // pred_check_branch
      %479 = sbr.rel (%p476) target = $region12
    $region11: #{vae_forward.1} parent=5 // pred_region
      %s480 = ssub.s32 %s26, 1
      // Predicated region
      $region13: #{vae_forward.1} parent=11 // pred_check
        %p481 = pneg %p99
      $region14: #{vae_forward.1} parent=11 // pred_check_branch
        %483 = sbr.rel (%p481) target = $region16
      $region15: #{vae_forward.1} parent=11 // pred_region
        _
      $region16: #{vae_forward.1} parent=11 // pred_fallthru
        _
      // Predicated region
      $region17: #{vae_forward.1} parent=11 // pred_check
        %p484 = pneg %p120
      $region18: #{vae_forward.1} parent=11 // pred_check_branch
        %486 = sbr.rel (%p484) target = $region20
      $region19: #{vae_forward.1} parent=11 // pred_region
        _
      $region20: #{vae_forward.1} parent=11 // pred_fallthru
        _
      // Predicated region
      $region21: #{vae_forward.1} parent=11 // pred_check
        %p487 = pneg %p141
      $region22: #{vae_forward.1} parent=11 // pred_check_branch
        %489 = sbr.rel (%p487) target = $region24
      $region23: #{vae_forward.1} parent=11 // pred_region
        _
      $region24: #{vae_forward.1} parent=11 // pred_fallthru
        _
      // Predicated region
      $region25: #{vae_forward.1} parent=11 // pred_check
        %p490 = pneg %p162
      $region26: #{vae_forward.1} parent=11 // pred_check_branch
        %492 = sbr.rel (%p490) target = $region28
      $region27: #{vae_forward.1} parent=11 // pred_region
        _
      $region28: #{vae_forward.1} parent=11 // pred_fallthru
        _
      // Predicated region
      $region29: #{vae_forward.1} parent=11 // pred_check
        %p493 = pneg %p183
      $region30: #{vae_forward.1} parent=11 // pred_check_branch
        %495 = sbr.rel (%p493) target = $region32
      $region31: #{vae_forward.1} parent=11 // pred_region
        _
      $region32: #{vae_forward.1} parent=11 // pred_fallthru
        _
      // Predicated region
      $region33: #{vae_forward.1} parent=11 // pred_check
        %p496 = pneg %p204
      $region34: #{vae_forward.1} parent=11 // pred_check_branch
        %498 = sbr.rel (%p496) target = $region36
      $region35: #{vae_forward.1} parent=11 // pred_region
        _
      $region36: #{vae_forward.1} parent=11 // pred_fallthru
        _
      // Predicated region
      $region37: #{vae_forward.1} parent=11 // pred_check
        %p499 = pneg %p225
      $region38: #{vae_forward.1} parent=11 // pred_check_branch
        %501 = sbr.rel (%p499) target = $region40
      $region39: #{vae_forward.1} parent=11 // pred_region
        _
      $region40: #{vae_forward.1} parent=11 // pred_fallthru
        _
      // Predicated region
      $region41: #{vae_forward.1} parent=11 // pred_check
        %p502 = pneg %p246
      $region42: #{vae_forward.1} parent=11 // pred_check_branch
        %504 = sbr.rel (%p502) target = $region44
      $region43: #{vae_forward.1} parent=11 // pred_region
        _
      $region44: #{vae_forward.1} parent=11 // pred_fallthru
        _
      // Predicated region
      $region45: #{vae_forward.1} parent=11 // pred_check
        %p505 = pneg %p267
      $region46: #{vae_forward.1} parent=11 // pred_check_branch
        %507 = sbr.rel (%p505) target = $region48
      $region47: #{vae_forward.1} parent=11 // pred_region
        _
      $region48: #{vae_forward.1} parent=11 // pred_fallthru
        _
      // Predicated region
      $region49: #{vae_forward.1} parent=11 // pred_check
        %p508 = pneg %p288
      $region50: #{vae_forward.1} parent=11 // pred_check_branch
        %510 = sbr.rel (%p508) target = $region52
      $region51: #{vae_forward.1} parent=11 // pred_region
        _
      $region52: #{vae_forward.1} parent=11 // pred_fallthru
        _
      // Predicated region
      $region53: #{vae_forward.1} parent=11 // pred_check
        %p511 = pneg %p309
      $region54: #{vae_forward.1} parent=11 // pred_check_branch
        %513 = sbr.rel (%p511) target = $region56
      $region55: #{vae_forward.1} parent=11 // pred_region
        _
      $region56: #{vae_forward.1} parent=11 // pred_fallthru
        _
      // Predicated region
      $region57: #{vae_forward.1} parent=11 // pred_check
        %p514 = pneg %p330
      $region58: #{vae_forward.1} parent=11 // pred_check_branch
        %516 = sbr.rel (%p514) target = $region60
      $region59: #{vae_forward.1} parent=11 // pred_region
        _
      $region60: #{vae_forward.1} parent=11 // pred_fallthru
        _
      // Predicated region
      $region61: #{vae_forward.1} parent=11 // pred_check
        %p517 = pneg %p351
      $region62: #{vae_forward.1} parent=11 // pred_check_branch
        %519 = sbr.rel (%p517) target = $region64
      $region63: #{vae_forward.1} parent=11 // pred_region
        _
      $region64: #{vae_forward.1} parent=11 // pred_fallthru
        _
      // Predicated region
      $region65: #{vae_forward.1} parent=11 // pred_check
        %p520 = pneg %p372
      $region66: #{vae_forward.1} parent=11 // pred_check_branch
        %522 = sbr.rel (%p520) target = $region68
      $region67: #{vae_forward.1} parent=11 // pred_region
        _
      $region68: #{vae_forward.1} parent=11 // pred_fallthru
        _
      // Predicated region
      $region69: #{vae_forward.1} parent=11 // pred_check
        %p523 = pneg %p393
      $region70: #{vae_forward.1} parent=11 // pred_check_branch
        %525 = sbr.rel (%p523) target = $region72
      $region71: #{vae_forward.1} parent=11 // pred_region
        _
      $region72: #{vae_forward.1} parent=11 // pred_fallthru
        _
      // Predicated region
      $region73: #{vae_forward.1} parent=11 // pred_check
        %p526 = pneg %p414
      $region74: #{vae_forward.1} parent=11 // pred_check_branch
        %528 = sbr.rel (%p526) target = $region76
      $region75: #{vae_forward.1} parent=11 // pred_region
        _
      $region76: #{vae_forward.1} parent=11 // pred_fallthru
        _
    $region12: #{vae_forward.1} parent=5 // pred_fallthru
      _
    %p529 = scmp.lt.s32.totalorder %s26, 2
    // Predicated region
    $region77: #{vae_forward.1} parent=5 // pred_check
      %p530 = pneg %p529
    $region78: #{vae_forward.1} parent=5 // pred_check_branch
      %532 = sbr.rel (%p530) target = $region80
    $region79: #{vae_forward.1} parent=5 // pred_region
      // Predicated region
      $region81: #{vae_forward.1} parent=79 // pred_check
        %p533 = pneg %p46
      $region82: #{vae_forward.1} parent=79 // pred_check_branch
        %535 = sbr.rel (%p533) target = $region84
      $region83: #{vae_forward.1} parent=79 // pred_region
        %p536 = scmp.lt.s32.totalorder %s26, 1
        %s537 = scalar_select %p536, %s26, 1
        %s538 = scalar_lea.vmem %s0, %s537
      $region84: #{vae_forward.1} parent=79 // pred_fallthru
        _
      // Predicated region
      $region85: #{vae_forward.1} parent=79 // pred_check
        %p539 = pneg %p72
      $region86: #{vae_forward.1} parent=79 // pred_check_branch
        %541 = sbr.rel (%p539) target = $region88
      $region87: #{vae_forward.1} parent=79 // pred_region
        %p542 = scmp.lt.s32.totalorder %s26, 1
        %s543 = scalar_select %p542, %s26, 1
        %s544 = scalar_lea.vmem %s1, %s543
      $region88: #{vae_forward.1} parent=79 // pred_fallthru
        _
    $region80: #{vae_forward.1} parent=5 // pred_fallthru
      _
    %p545 = scmp.le.s32.totalorder 1, %s26
    %p546 = scmp.lt.s32.totalorder %s26, 3
    %p547 = pnand %p545, %p546
    %p548 = pneg %p547
    // Predicated region
    $region89: #{vae_forward.1} parent=5 // pred_check
      _
    $region90: #{vae_forward.1} parent=5 // pred_check_branch
      %550 = sbr.rel (%p547) target = $region92
    $region91: #{vae_forward.1} parent=5 // pred_region
      %s551 = ssub.s32 %s26, 1
      %p552 = scmp.lt.s32.totalorder %s31, 1
      %s553 = scalar_select %p552, %s31, 1
      %s554 = scalar_lea.vmem %s0, %s553
      %p555 = pneg %p52
      %p556 = pneg %p49
      %p557 = scmp.lt.s32.totalorder %s31, 1
      %s558 = scalar_select %p557, %s31, 1
      %s559 = scalar_lea.vmem %s1, %s558
      %p560 = pneg %p78
      %p561 = pneg %p75
      %p562 = pneg %p99
      %p563 = pneg %p96
      %p564 = pneg %p120
      %p565 = pneg %p117
      %p566 = pneg %p141
      %p567 = pneg %p138
      %p568 = pneg %p162
      %p569 = pneg %p159
      %p570 = pneg %p183
      %p571 = pneg %p180
      %p572 = pneg %p204
      %p573 = pneg %p201
      %p574 = pneg %p225
      %p575 = pneg %p222
      %p576 = pneg %p246
      %p577 = pneg %p243
      %p578 = pneg %p267
      %p579 = pneg %p264
      %p580 = pneg %p288
      %p581 = pneg %p285
      %p582 = pneg %p309
      %p583 = pneg %p306
      %p584 = pneg %p330
      %p585 = pneg %p327
      %p586 = pneg %p351
      %p587 = pneg %p348
      %p588 = pneg %p372
      %p589 = pneg %p369
      %p590 = pneg %p393
      %p591 = pneg %p390
      %p592 = pneg %p414
      %p593 = pneg %p411
      %p594 = pneg %p440
      %p595 = pneg %p437
      %p596 = scmp.lt.s32.totalorder %s31, 1
      %s597 = scalar_select %p596, %s31, 1
      %s598 = scalar_lea.vmem %s18, %s597
      %p599 = pneg %p466
      %p600 = pneg %p463
      %p601 = scmp.lt.s32.totalorder %s31, 1
      %s602 = scalar_select %p601, %s31, 1
      %s603 = scalar_lea.vmem %s19, %s602
      %p604 = scmp.lt.s32.totalorder %s31, 1
      %s605 = scalar_select %p604, %s31, 1
      %s606 = scalar_lea.vmem %s0, %s605
      %p607 = scmp.lt.s32.totalorder %s31, 1
      %s608 = scalar_select %p607, %s31, 1
      %s609 = scalar_lea.vmem %s1, %s608
      %p610 = scmp.lt.s32.totalorder %s31, 1
      %s611 = scalar_select %p610, %s31, 1
      %s612 = scalar_lea.vmem %s18, %s611
      %p613 = scmp.lt.s32.totalorder %s31, 1
      %s614 = scalar_select %p613, %s31, 1
      %s615 = scalar_lea.vmem %s19, %s614
      %v616 = vld [vmem:[%s606] sm:$0x1]
      %v617 = vld [vmem:[%s609] sm:$0x1]
      %v618 = vld [vmem:[%s2] sm:$0xff]
      %v619 = vld [vmem:[%s2 + $0x8] sm:$0xff]
      %v620 = vld [vmem:[%s2 + $0x10] sm:$0xff]
      %v621 = vld [vmem:[%s2 + $0x18] sm:$0xff]
      %v622 = vld [vmem:[%s2 + $0x20] sm:$0xff]
      %v623 = vld [vmem:[%s2 + $0x28] sm:$0xff]
      %v624 = vld [vmem:[%s2 + $0x30] sm:$0xff]
      %v625 = vld [vmem:[%s2 + $0x38] sm:$0xff]
      %v626 = vld [vmem:[%s2 + $0x40] sm:$0xff]
      %v627 = vld [vmem:[%s2 + $0x48] sm:$0xff]
      %v628 = vld [vmem:[%s2 + $0x50] sm:$0xff]
      %v629 = vld [vmem:[%s2 + $0x58] sm:$0xff]
      %v630 = vld [vmem:[%s2 + $0x60] sm:$0x1]
      %v631 = vld [vmem:[%s2 + $0x68] sm:$0x1]
      %v632 = vld [vmem:[%s2 + $0x70] sm:$0x1]
      %v633 = vld [vmem:[%s2 + $0x78] sm:$0x1]
      %v634 = vld [vmem:[%s3] sm:$0xf]
      %v636 = vlaneseq
      %v637 = vshrl.u32 %v636, 7
      %v638 = vsub.s32 0, %v637
      %v639 = vrot.slane %v634, %v638
      %v640 = vlaneseq
      %v641 = vshrl.u32 %v640, 7
      %v642 = vsub.s32 1, %v641
      %v643 = vrot.slane %v634, %v642
      %v644 = vlaneseq
      %v645 = vshrl.u32 %v644, 7
      %v646 = vsub.s32 2, %v645
      %v647 = vrot.slane %v634, %v646
      %v648 = vlaneseq
      %v649 = vshrl.u32 %v648, 7
      %v650 = vsub.s32 3, %v649
      %v651 = vrot.slane %v634, %v650
      %vm656 = vcmask 203776
      %v658 = vsel %vm656, %v616, 0
      %vm660 = vcmask 1040384
      %v662 = vsel %vm660, %v630, 0
      %v665 = vsel %vm660, %v631, 0
      %v668 = vsel %vm660, %v632, 0
      %v671 = vsel %vm660, %v633, 0
      %673 = vmatprep.subr.mxu0 %v619
      %674 = vmatpush1.msra.mxu0 %v618
      %675 = vmatprep.subr.mxu0 %v623
      %676 = vmatpush1.msra.mxu0 %v622
      %677 = vmatprep.subr.mxu0 %v627
      %678 = vmatpush1.msra.mxu0 %v626
      %679 = vmatprep.subr.mxu0 %v665
      %680 = vmatpush1.msra.mxu0 %v662
      %681 = vmatprep.subr.mxu0 0.0
      %682 = vmatpush1.msra.mxu0 0.0
      %683 = vmatprep.subr.mxu0 0.0
      %684 = vmatpush1.msra.mxu0 0.0
      %685 = vmatprep.subr.mxu0 0.0
      %686 = vmatpush1.msra.mxu0 0.0
      %687 = vmatprep.subr.mxu0 0.0
      %688 = vmatpush1.msra.mxu0 0.0
      %689 = vmatprep.subr.mxu0 0.0
      %690 = vmatpush1.msra.mxu0 0.0
      %691 = vmatprep.subr.mxu0 0.0
      %692 = vmatpush1.msra.mxu0 0.0
      %693 = vmatprep.subr.mxu0 0.0
      %694 = vmatpush1.msra.mxu0 0.0
      %695 = vmatprep.subr.mxu0 0.0
      %696 = vmatpush1.msra.mxu0 0.0
      %697 = vmatprep.subr.mxu0 0.0
      %698 = vmatpush1.msra.mxu0 0.0
      %699 = vmatprep.subr.mxu0 0.0
      %700 = vmatpush1.msra.mxu0 0.0
      %701 = vmatprep.subr.mxu0 0.0
      %702 = vmatpush1.msra.mxu0 0.0
      %703 = vmatprep.subr.mxu0 0.0
      %704 = vmatpush1.msra.mxu0 0.0
      %705 = vmatprep.subr.mxu0 0.0
      %706 = vmatpush1.msra.mxu0 0.0
      %707 = vmatprep.subr.mxu0 0.0
      %708 = vmatpush1.msra.mxu0 0.0
      %709 = vmatprep.subr.mxu0 0.0
      %710 = vmatpush1.msra.mxu0 0.0
      %711 = vmatprep.subr.mxu0 0.0
      %712 = vmatpush1.msra.mxu0 0.0
      %713 = vmatprep.subr.mxu0 0.0
      %714 = vmatpush1.msra.mxu0 0.0
      %715 = vmatprep.subr.mxu0 0.0
      %716 = vmatpush1.msra.mxu0 0.0
      %717 = vmatprep.subr.mxu0 0.0
      %718 = vmatpush1.msra.mxu0 0.0
      %719 = vmatprep.subr.mxu0 0.0
      %720 = vmatpush1.msra.mxu0 0.0
      %721 = vmatprep.subr.mxu0 0.0
      %722 = vmatpush1.msra.mxu0 0.0
      %723 = vmatprep.subr.mxu0 0.0
      %724 = vmatpush1.msra.mxu0 0.0
      %725 = vmatprep.subr.mxu0 0.0
      %726 = vmatpush1.msra.mxu0 0.0
      %727 = vmatprep.subr.mxu0 0.0
      %728 = vmatpush1.msra.mxu0 0.0
      %729 = vmatprep.subr.mxu0 0.0
      %730 = vmatpush1.msra.mxu0 0.0
      %731 = vmatprep.subr.mxu0 0.0
      %732 = vmatpush1.msra.mxu0 0.0
      %733 = vmatprep.subr.mxu0 0.0
      %734 = vmatpush1.msra.mxu0 0.0
      %735 = vmatprep.subr.mxu0 0.0
      %736 = vmatpush1.msra.mxu0 0.0
      %737 = vmatprep.mubr.f32.mxu0 0.0
      %738 = vmatmul.mubr.f32.gmra.mrb[0].mxu0 %v658
      %v739 = vpop.f32.mrb[0].mxu0
      %v740 = vadd.f32 %v639, %v739
      %v741 = vpop.f32.mrb[0].mxu0
      %v742 = vadd.f32 %v643, %v741
      %743 = vdwg.mxu0
      %744 = vmatprep.subr.mxu0 %v621
      %745 = vmatpush1.msra.mxu0 %v620
      %746 = vmatprep.subr.mxu0 %v625
      %747 = vmatpush1.msra.mxu0 %v624
      %748 = vmatprep.subr.mxu0 %v629
      %749 = vmatpush1.msra.mxu0 %v628
      %750 = vmatprep.subr.mxu0 %v671
      %751 = vmatpush1.msra.mxu0 %v668
      %752 = vmatprep.subr.mxu0 0.0
      %753 = vmatpush1.msra.mxu0 0.0
      %754 = vmatprep.subr.mxu0 0.0
      %755 = vmatpush1.msra.mxu0 0.0
      %756 = vmatprep.subr.mxu0 0.0
      %757 = vmatpush1.msra.mxu0 0.0
      %758 = vmatprep.subr.mxu0 0.0
      %759 = vmatpush1.msra.mxu0 0.0
      %760 = vmatprep.subr.mxu0 0.0
      %761 = vmatpush1.msra.mxu0 0.0
      %762 = vmatprep.subr.mxu0 0.0
      %763 = vmatpush1.msra.mxu0 0.0
      %764 = vmatprep.subr.mxu0 0.0
      %765 = vmatpush1.msra.mxu0 0.0
      %766 = vmatprep.subr.mxu0 0.0
      %767 = vmatpush1.msra.mxu0 0.0
      %768 = vmatprep.subr.mxu0 0.0
      %769 = vmatpush1.msra.mxu0 0.0
      %770 = vmatprep.subr.mxu0 0.0
      %771 = vmatpush1.msra.mxu0 0.0
      %772 = vmatprep.subr.mxu0 0.0
      %773 = vmatpush1.msra.mxu0 0.0
      %774 = vmatprep.subr.mxu0 0.0
      %775 = vmatpush1.msra.mxu0 0.0
      %776 = vmatprep.subr.mxu0 0.0
      %777 = vmatpush1.msra.mxu0 0.0
      %778 = vmatprep.subr.mxu0 0.0
      %779 = vmatpush1.msra.mxu0 0.0
      %780 = vmatprep.subr.mxu0 0.0
      %781 = vmatpush1.msra.mxu0 0.0
      %782 = vmatprep.subr.mxu0 0.0
      %783 = vmatpush1.msra.mxu0 0.0
      %784 = vmatprep.subr.mxu0 0.0
      %785 = vmatpush1.msra.mxu0 0.0
      %786 = vmatprep.subr.mxu0 0.0
      %787 = vmatpush1.msra.mxu0 0.0
      %788 = vmatprep.subr.mxu0 0.0
      %789 = vmatpush1.msra.mxu0 0.0
      %790 = vmatprep.subr.mxu0 0.0
      %791 = vmatpush1.msra.mxu0 0.0
      %792 = vmatprep.subr.mxu0 0.0
      %793 = vmatpush1.msra.mxu0 0.0
      %794 = vmatprep.subr.mxu0 0.0
      %795 = vmatpush1.msra.mxu0 0.0
      %796 = vmatprep.subr.mxu0 0.0
      %797 = vmatpush1.msra.mxu0 0.0
      %798 = vmatprep.subr.mxu0 0.0
      %799 = vmatpush1.msra.mxu0 0.0
      %800 = vmatprep.subr.mxu0 0.0
      %801 = vmatpush1.msra.mxu0 0.0
      %802 = vmatprep.subr.mxu0 0.0
      %803 = vmatpush1.msra.mxu0 0.0
      %804 = vmatprep.subr.mxu0 0.0
      %805 = vmatpush1.msra.mxu0 0.0
      %806 = vmatprep.subr.mxu0 0.0
      %807 = vmatpush1.msra.mxu0 0.0
      %808 = vmatprep.mubr.f32.mxu0 0.0
      %809 = vmatmul.mubr.f32.gmra.mrb[0].mxu0 %v658
      %v810 = vpop.f32.mrb[0].mxu0
      %v811 = vadd.f32 %v647, %v810
      %v812 = vpop.f32.mrb[0].mxu0
      %v813 = vadd.f32 %v651, %v812
      %814 = vdwg.mxu0
      %v815 = vmax.f32 %v740, 0.0
      %v816 = vmax.f32 %v742, 0.0
      %v817 = vmax.f32 %v811, 0.0
      %v818 = vmax.f32 %v813, 0.0
      %v819 = vld [vmem:[%s4] sm:$0xff]
      %v820 = vld [vmem:[%s4 + $0x8] sm:$0xff]
      %v821 = vld [vmem:[%s4 + $0x10] sm:$0xff]
      %v822 = vld [vmem:[%s4 + $0x18] sm:$0xff]
      %v823 = vld [vmem:[%s4 + $0x20] sm:$0xff]
      %v824 = vld [vmem:[%s4 + $0x28] sm:$0xff]
      %v825 = vld [vmem:[%s4 + $0x30] sm:$0xff]
      %v826 = vld [vmem:[%s4 + $0x38] sm:$0xff]
      %v827 = vld [vmem:[%s4 + $0x40] sm:$0xff]
      %v828 = vld [vmem:[%s4 + $0x48] sm:$0xff]
      %v829 = vld [vmem:[%s4 + $0x50] sm:$0xff]
      %v830 = vld [vmem:[%s4 + $0x58] sm:$0xff]
      %v831 = vld [vmem:[%s4 + $0x60] sm:$0xff]
      %v832 = vld [vmem:[%s4 + $0x68] sm:$0xff]
      %v833 = vld [vmem:[%s4 + $0x70] sm:$0xff]
      %v834 = vld [vmem:[%s4 + $0x78] sm:$0xff]
      %v835 = vld [vmem:[%s4 + $0x80] sm:$0xff]
      %v836 = vld [vmem:[%s4 + $0x88] sm:$0xff]
      %v837 = vld [vmem:[%s4 + $0x90] sm:$0xff]
      %v838 = vld [vmem:[%s4 + $0x98] sm:$0xff]
      %v839 = vld [vmem:[%s4 + $0xa0] sm:$0xff]
      %v840 = vld [vmem:[%s4 + $0xa8] sm:$0xff]
      %v841 = vld [vmem:[%s4 + $0xb0] sm:$0xff]
      %v842 = vld [vmem:[%s4 + $0xb8] sm:$0xff]
      %v843 = vld [vmem:[%s4 + $0xc0] sm:$0xff]
      %v844 = vld [vmem:[%s4 + $0xc8] sm:$0xff]
      %v845 = vld [vmem:[%s4 + $0xd0] sm:$0xff]
      %v846 = vld [vmem:[%s4 + $0xd8] sm:$0xff]
      %v847 = vld [vmem:[%s4 + $0xe0] sm:$0xff]
      %v848 = vld [vmem:[%s4 + $0xe8] sm:$0xff]
      %v849 = vld [vmem:[%s4 + $0xf0] sm:$0xff]
      %v850 = vld [vmem:[%s4 + $0xf8] sm:$0xff]
      %v851 = vld [vmem:[%s4 + $0x100] sm:$0xff]
      %v852 = vld [vmem:[%s4 + $0x108] sm:$0xff]
      %v853 = vld [vmem:[%s4 + $0x110] sm:$0xff]
      %v854 = vld [vmem:[%s4 + $0x118] sm:$0xff]
      %v855 = vld [vmem:[%s4 + $0x120] sm:$0xff]
      %v856 = vld [vmem:[%s4 + $0x128] sm:$0xff]
      %v857 = vld [vmem:[%s4 + $0x130] sm:$0xff]
      %v858 = vld [vmem:[%s4 + $0x138] sm:$0xff]
      %v859 = vld [vmem:[%s4 + $0x140] sm:$0xff]
      %v860 = vld [vmem:[%s4 + $0x148] sm:$0xff]
      %v861 = vld [vmem:[%s4 + $0x150] sm:$0xff]
      %v862 = vld [vmem:[%s4 + $0x158] sm:$0xff]
      %v863 = vld [vmem:[%s4 + $0x160] sm:$0xff]
      %v864 = vld [vmem:[%s4 + $0x168] sm:$0xff]
      %v865 = vld [vmem:[%s4 + $0x170] sm:$0xff]
      %v866 = vld [vmem:[%s4 + $0x178] sm:$0xff]
      %v867 = vld [vmem:[%s4 + $0x180] sm:$0xff]
      %v868 = vld [vmem:[%s4 + $0x188] sm:$0xff]
      %v869 = vld [vmem:[%s4 + $0x190] sm:$0xff]
      %v870 = vld [vmem:[%s4 + $0x198] sm:$0xff]
      %v871 = vld [vmem:[%s4 + $0x1a0] sm:$0xff]
      %v872 = vld [vmem:[%s4 + $0x1a8] sm:$0xff]
      %v873 = vld [vmem:[%s4 + $0x1b0] sm:$0xff]
      %v874 = vld [vmem:[%s4 + $0x1b8] sm:$0xff]
      %v875 = vld [vmem:[%s4 + $0x1c0] sm:$0xff]
      %v876 = vld [vmem:[%s4 + $0x1c8] sm:$0xff]
      %v877 = vld [vmem:[%s4 + $0x1d0] sm:$0xff]
      %v878 = vld [vmem:[%s4 + $0x1d8] sm:$0xff]
      %v879 = vld [vmem:[%s4 + $0x1e0] sm:$0xff]
      %v880 = vld [vmem:[%s4 + $0x1e8] sm:$0xff]
      %v881 = vld [vmem:[%s4 + $0x1f0] sm:$0xff]
      %v882 = vld [vmem:[%s4 + $0x1f8] sm:$0xff]
      %v883 = vld [vmem:[%s4 + $0x200] sm:$0xff]
      %v884 = vld [vmem:[%s4 + $0x208] sm:$0xff]
      %v885 = vld [vmem:[%s4 + $0x210] sm:$0xff]
      %v886 = vld [vmem:[%s4 + $0x218] sm:$0xff]
      %v887 = vld [vmem:[%s4 + $0x220] sm:$0xff]
      %v888 = vld [vmem:[%s4 + $0x228] sm:$0xff]
      %v889 = vld [vmem:[%s4 + $0x230] sm:$0xff]
      %v890 = vld [vmem:[%s4 + $0x238] sm:$0xff]
      %v891 = vld [vmem:[%s4 + $0x240] sm:$0xff]
      %v892 = vld [vmem:[%s4 + $0x248] sm:$0xff]
      %v893 = vld [vmem:[%s4 + $0x250] sm:$0xff]
      %v894 = vld [vmem:[%s4 + $0x258] sm:$0xff]
      %v895 = vld [vmem:[%s4 + $0x260] sm:$0xff]
      %v896 = vld [vmem:[%s4 + $0x268] sm:$0xff]
      %v897 = vld [vmem:[%s4 + $0x270] sm:$0xff]
      %v898 = vld [vmem:[%s4 + $0x278] sm:$0xff]
      %v899 = vld [vmem:[%s4 + $0x280] sm:$0xff]
      %v900 = vld [vmem:[%s4 + $0x288] sm:$0xff]
      %v901 = vld [vmem:[%s4 + $0x290] sm:$0xff]
      %v902 = vld [vmem:[%s4 + $0x298] sm:$0xff]
      %v903 = vld [vmem:[%s4 + $0x2a0] sm:$0xff]
      %v904 = vld [vmem:[%s4 + $0x2a8] sm:$0xff]
      %v905 = vld [vmem:[%s4 + $0x2b0] sm:$0xff]
      %v906 = vld [vmem:[%s4 + $0x2b8] sm:$0xff]
      %v907 = vld [vmem:[%s4 + $0x2c0] sm:$0xff]
      %v908 = vld [vmem:[%s4 + $0x2c8] sm:$0xff]
      %v909 = vld [vmem:[%s4 + $0x2d0] sm:$0xff]
      %v910 = vld [vmem:[%s4 + $0x2d8] sm:$0xff]
      %v911 = vld [vmem:[%s4 + $0x2e0] sm:$0xff]
      %v912 = vld [vmem:[%s4 + $0x2e8] sm:$0xff]
      %v913 = vld [vmem:[%s4 + $0x2f0] sm:$0xff]
      %v914 = vld [vmem:[%s4 + $0x2f8] sm:$0xff]
      %v915 = vld [vmem:[%s4 + $0x300] sm:$0xff]
      %v916 = vld [vmem:[%s4 + $0x308] sm:$0xff]
      %v917 = vld [vmem:[%s4 + $0x310] sm:$0xff]
      %v918 = vld [vmem:[%s4 + $0x318] sm:$0xff]
      %v919 = vld [vmem:[%s4 + $0x320] sm:$0xff]
      %v920 = vld [vmem:[%s4 + $0x328] sm:$0xff]
      %v921 = vld [vmem:[%s4 + $0x330] sm:$0xff]
      %v922 = vld [vmem:[%s4 + $0x338] sm:$0xff]
      %v923 = vld [vmem:[%s4 + $0x340] sm:$0xff]
      %v924 = vld [vmem:[%s4 + $0x348] sm:$0xff]
      %v925 = vld [vmem:[%s4 + $0x350] sm:$0xff]
      %v926 = vld [vmem:[%s4 + $0x358] sm:$0xff]
      %v927 = vld [vmem:[%s4 + $0x360] sm:$0xff]
      %v928 = vld [vmem:[%s4 + $0x368] sm:$0xff]
      %v929 = vld [vmem:[%s4 + $0x370] sm:$0xff]
      %v930 = vld [vmem:[%s4 + $0x378] sm:$0xff]
      %v931 = vld [vmem:[%s4 + $0x380] sm:$0xff]
      %v932 = vld [vmem:[%s4 + $0x388] sm:$0xff]
      %v933 = vld [vmem:[%s4 + $0x390] sm:$0xff]
      %v934 = vld [vmem:[%s4 + $0x398] sm:$0xff]
      %v935 = vld [vmem:[%s4 + $0x3a0] sm:$0xff]
      %v936 = vld [vmem:[%s4 + $0x3a8] sm:$0xff]
      %v937 = vld [vmem:[%s4 + $0x3b0] sm:$0xff]
      %v938 = vld [vmem:[%s4 + $0x3b8] sm:$0xff]
      %v939 = vld [vmem:[%s4 + $0x3c0] sm:$0xff]
      %v940 = vld [vmem:[%s4 + $0x3c8] sm:$0xff]
      %v941 = vld [vmem:[%s4 + $0x3d0] sm:$0xff]
      %v942 = vld [vmem:[%s4 + $0x3d8] sm:$0xff]
      %v943 = vld [vmem:[%s4 + $0x3e0] sm:$0xff]
      %v944 = vld [vmem:[%s4 + $0x3e8] sm:$0xff]
      %v945 = vld [vmem:[%s4 + $0x3f0] sm:$0xff]
      %v946 = vld [vmem:[%s4 + $0x3f8] sm:$0xff]
      %v947 = vld [vmem:[%s4 + $0x400] sm:$0xff]
      %v948 = vld [vmem:[%s4 + $0x408] sm:$0xff]
      %v949 = vld [vmem:[%s4 + $0x410] sm:$0xff]
      %v950 = vld [vmem:[%s4 + $0x418] sm:$0xff]
      %v951 = vld [vmem:[%s4 + $0x420] sm:$0xff]
      %v952 = vld [vmem:[%s4 + $0x428] sm:$0xff]
      %v953 = vld [vmem:[%s4 + $0x430] sm:$0xff]
      %v954 = vld [vmem:[%s4 + $0x438] sm:$0xff]
      %v955 = vld [vmem:[%s4 + $0x440] sm:$0xff]
      %v956 = vld [vmem:[%s4 + $0x448] sm:$0xff]
      %v957 = vld [vmem:[%s4 + $0x450] sm:$0xff]
      %v958 = vld [vmem:[%s4 + $0x458] sm:$0xff]
      %v959 = vld [vmem:[%s4 + $0x460] sm:$0xff]
      %v960 = vld [vmem:[%s4 + $0x468] sm:$0xff]
      %v961 = vld [vmem:[%s4 + $0x470] sm:$0xff]
      %v962 = vld [vmem:[%s4 + $0x478] sm:$0xff]
      %v963 = vld [vmem:[%s4 + $0x480] sm:$0xff]
      %v964 = vld [vmem:[%s4 + $0x488] sm:$0xff]
      %v965 = vld [vmem:[%s4 + $0x490] sm:$0xff]
      %v966 = vld [vmem:[%s4 + $0x498] sm:$0xff]
      %v967 = vld [vmem:[%s4 + $0x4a0] sm:$0xff]
      %v968 = vld [vmem:[%s4 + $0x4a8] sm:$0xff]
      %v969 = vld [vmem:[%s4 + $0x4b0] sm:$0xff]
      %v970 = vld [vmem:[%s4 + $0x4b8] sm:$0xff]
      %v971 = vld [vmem:[%s4 + $0x4c0] sm:$0xff]
      %v972 = vld [vmem:[%s4 + $0x4c8] sm:$0xff]
      %v973 = vld [vmem:[%s4 + $0x4d0] sm:$0xff]
      %v974 = vld [vmem:[%s4 + $0x4d8] sm:$0xff]
      %v975 = vld [vmem:[%s4 + $0x4e0] sm:$0xff]
      %v976 = vld [vmem:[%s4 + $0x4e8] sm:$0xff]
      %v977 = vld [vmem:[%s4 + $0x4f0] sm:$0xff]
      %v978 = vld [vmem:[%s4 + $0x4f8] sm:$0xff]
      %v979 = vld [vmem:[%s4 + $0x500] sm:$0xff]
      %v980 = vld [vmem:[%s4 + $0x508] sm:$0xff]
      %v981 = vld [vmem:[%s4 + $0x510] sm:$0xff]
      %v982 = vld [vmem:[%s4 + $0x518] sm:$0xff]
      %v983 = vld [vmem:[%s4 + $0x520] sm:$0xff]
      %v984 = vld [vmem:[%s4 + $0x528] sm:$0xff]
      %v985 = vld [vmem:[%s4 + $0x530] sm:$0xff]
      %v986 = vld [vmem:[%s4 + $0x538] sm:$0xff]
      %v987 = vld [vmem:[%s4 + $0x540] sm:$0xff]
      %v988 = vld [vmem:[%s4 + $0x548] sm:$0xff]
      %v989 = vld [vmem:[%s4 + $0x550] sm:$0xff]
      %v990 = vld [vmem:[%s4 + $0x558] sm:$0xff]
      %v991 = vld [vmem:[%s4 + $0x560] sm:$0xff]
      %v992 = vld [vmem:[%s4 + $0x568] sm:$0xff]
      %v993 = vld [vmem:[%s4 + $0x570] sm:$0xff]
      %v994 = vld [vmem:[%s4 + $0x578] sm:$0xff]
      %v995 = vld [vmem:[%s4 + $0x580] sm:$0xff]
      %v996 = vld [vmem:[%s4 + $0x588] sm:$0xff]
      %v997 = vld [vmem:[%s4 + $0x590] sm:$0xff]
      %v998 = vld [vmem:[%s4 + $0x598] sm:$0xff]
      %v999 = vld [vmem:[%s4 + $0x5a0] sm:$0xff]
      %v1000 = vld [vmem:[%s4 + $0x5a8] sm:$0xff]
      %v1001 = vld [vmem:[%s4 + $0x5b0] sm:$0xff]
      %v1002 = vld [vmem:[%s4 + $0x5b8] sm:$0xff]
      %v1003 = vld [vmem:[%s4 + $0x5c0] sm:$0xff]
      %v1004 = vld [vmem:[%s4 + $0x5c8] sm:$0xff]
      %v1005 = vld [vmem:[%s4 + $0x5d0] sm:$0xff]
      %v1006 = vld [vmem:[%s4 + $0x5d8] sm:$0xff]
      %v1007 = vld [vmem:[%s4 + $0x5e0] sm:$0xff]
      %v1008 = vld [vmem:[%s4 + $0x5e8] sm:$0xff]
      %v1009 = vld [vmem:[%s4 + $0x5f0] sm:$0xff]
      %v1010 = vld [vmem:[%s4 + $0x5f8] sm:$0xff]
      %v1011 = vld [vmem:[%s4 + $0x600] sm:$0xff]
      %v1012 = vld [vmem:[%s4 + $0x608] sm:$0xff]
      %v1013 = vld [vmem:[%s4 + $0x610] sm:$0xff]
      %v1014 = vld [vmem:[%s4 + $0x618] sm:$0xff]
      %v1015 = vld [vmem:[%s4 + $0x620] sm:$0xff]
      %v1016 = vld [vmem:[%s4 + $0x628] sm:$0xff]
      %v1017 = vld [vmem:[%s4 + $0x630] sm:$0xff]
      %v1018 = vld [vmem:[%s4 + $0x638] sm:$0xff]
      %v1019 = vld [vmem:[%s4 + $0x640] sm:$0xff]
      %v1020 = vld [vmem:[%s4 + $0x648] sm:$0xff]
      %v1021 = vld [vmem:[%s4 + $0x650] sm:$0xff]
      %v1022 = vld [vmem:[%s4 + $0x658] sm:$0xff]
      %v1023 = vld [vmem:[%s4 + $0x660] sm:$0xff]
      %v1024 = vld [vmem:[%s4 + $0x668] sm:$0xff]
      %v1025 = vld [vmem:[%s4 + $0x670] sm:$0xff]
      %v1026 = vld [vmem:[%s4 + $0x678] sm:$0xff]
      %v1027 = vld [vmem:[%s4 + $0x680] sm:$0xff]
      %v1028 = vld [vmem:[%s4 + $0x688] sm:$0xff]
      %v1029 = vld [vmem:[%s4 + $0x690] sm:$0xff]
      %v1030 = vld [vmem:[%s4 + $0x698] sm:$0xff]
      %v1031 = vld [vmem:[%s4 + $0x6a0] sm:$0xff]
      %v1032 = vld [vmem:[%s4 + $0x6a8] sm:$0xff]
      %v1033 = vld [vmem:[%s4 + $0x6b0] sm:$0xff]
      %v1034 = vld [vmem:[%s4 + $0x6b8] sm:$0xff]
      %v1035 = vld [vmem:[%s4 + $0x6c0] sm:$0xff]
      %v1036 = vld [vmem:[%s4 + $0x6c8] sm:$0xff]
      %v1037 = vld [vmem:[%s4 + $0x6d0] sm:$0xff]
      %v1038 = vld [vmem:[%s4 + $0x6d8] sm:$0xff]
      %v1039 = vld [vmem:[%s4 + $0x6e0] sm:$0xff]
      %v1040 = vld [vmem:[%s4 + $0x6e8] sm:$0xff]
      %v1041 = vld [vmem:[%s4 + $0x6f0] sm:$0xff]
      %v1042 = vld [vmem:[%s4 + $0x6f8] sm:$0xff]
      %v1043 = vld [vmem:[%s4 + $0x700] sm:$0xff]
      %v1044 = vld [vmem:[%s4 + $0x708] sm:$0xff]
      %v1045 = vld [vmem:[%s4 + $0x710] sm:$0xff]
      %v1046 = vld [vmem:[%s4 + $0x718] sm:$0xff]
      %v1047 = vld [vmem:[%s4 + $0x720] sm:$0xff]
      %v1048 = vld [vmem:[%s4 + $0x728] sm:$0xff]
      %v1049 = vld [vmem:[%s4 + $0x730] sm:$0xff]
      %v1050 = vld [vmem:[%s4 + $0x738] sm:$0xff]
      %v1051 = vld [vmem:[%s4 + $0x740] sm:$0xff]
      %v1052 = vld [vmem:[%s4 + $0x748] sm:$0xff]
      %v1053 = vld [vmem:[%s4 + $0x750] sm:$0xff]
      %v1054 = vld [vmem:[%s4 + $0x758] sm:$0xff]
      %v1055 = vld [vmem:[%s4 + $0x760] sm:$0xff]
      %v1056 = vld [vmem:[%s4 + $0x768] sm:$0xff]
      %v1057 = vld [vmem:[%s4 + $0x770] sm:$0xff]
      %v1058 = vld [vmem:[%s4 + $0x778] sm:$0xff]
      %v1059 = vld [vmem:[%s4 + $0x780] sm:$0xff]
      %v1060 = vld [vmem:[%s4 + $0x788] sm:$0xff]
      %v1061 = vld [vmem:[%s4 + $0x790] sm:$0xff]
      %v1062 = vld [vmem:[%s4 + $0x798] sm:$0xff]
      %v1063 = vld [vmem:[%s4 + $0x7a0] sm:$0xff]
      %v1064 = vld [vmem:[%s4 + $0x7a8] sm:$0xff]
      %v1065 = vld [vmem:[%s4 + $0x7b0] sm:$0xff]
      %v1066 = vld [vmem:[%s4 + $0x7b8] sm:$0xff]
      %v1067 = vld [vmem:[%s4 + $0x7c0] sm:$0xff]
      %v1068 = vld [vmem:[%s4 + $0x7c8] sm:$0xff]
      %v1069 = vld [vmem:[%s4 + $0x7d0] sm:$0xff]
      %v1070 = vld [vmem:[%s4 + $0x7d8] sm:$0xff]
      %v1071 = vld [vmem:[%s4 + $0x7e0] sm:$0xff]
      %v1072 = vld [vmem:[%s4 + $0x7e8] sm:$0xff]
      %v1073 = vld [vmem:[%s4 + $0x7f0] sm:$0xff]
      %v1074 = vld [vmem:[%s4 + $0x7f8] sm:$0xff]
      %v1075 = vld [vmem:[%s4 + $0x800] sm:$0xff]
      %v1076 = vld [vmem:[%s4 + $0x808] sm:$0xff]
      %v1077 = vld [vmem:[%s4 + $0x810] sm:$0xff]
      %v1078 = vld [vmem:[%s4 + $0x818] sm:$0xff]
      %v1079 = vld [vmem:[%s4 + $0x820] sm:$0xff]
      %v1080 = vld [vmem:[%s4 + $0x828] sm:$0xff]
      %v1081 = vld [vmem:[%s4 + $0x830] sm:$0xff]
      %v1082 = vld [vmem:[%s4 + $0x838] sm:$0xff]
      %v1083 = vld [vmem:[%s4 + $0x840] sm:$0xff]
      %v1084 = vld [vmem:[%s4 + $0x848] sm:$0xff]
      %v1085 = vld [vmem:[%s4 + $0x850] sm:$0xff]
      %v1086 = vld [vmem:[%s4 + $0x858] sm:$0xff]
      %v1087 = vld [vmem:[%s4 + $0x860] sm:$0xff]
      %v1088 = vld [vmem:[%s4 + $0x868] sm:$0xff]
      %v1089 = vld [vmem:[%s4 + $0x870] sm:$0xff]
      %v1090 = vld [vmem:[%s4 + $0x878] sm:$0xff]
      %v1091 = vld [vmem:[%s4 + $0x880] sm:$0xff]
      %v1092 = vld [vmem:[%s4 + $0x888] sm:$0xff]
      %v1093 = vld [vmem:[%s4 + $0x890] sm:$0xff]
      %v1094 = vld [vmem:[%s4 + $0x898] sm:$0xff]
      %v1095 = vld [vmem:[%s4 + $0x8a0] sm:$0xff]
      %v1096 = vld [vmem:[%s4 + $0x8a8] sm:$0xff]
      %v1097 = vld [vmem:[%s4 + $0x8b0] sm:$0xff]
      %v1098 = vld [vmem:[%s4 + $0x8b8] sm:$0xff]
      %v1099 = vld [vmem:[%s4 + $0x8c0] sm:$0xff]
      %v1100 = vld [vmem:[%s4 + $0x8c8] sm:$0xff]
      %v1101 = vld [vmem:[%s4 + $0x8d0] sm:$0xff]
      %v1102 = vld [vmem:[%s4 + $0x8d8] sm:$0xff]
      %v1103 = vld [vmem:[%s4 + $0x8e0] sm:$0xff]
      %v1104 = vld [vmem:[%s4 + $0x8e8] sm:$0xff]
      %v1105 = vld [vmem:[%s4 + $0x8f0] sm:$0xff]
      %v1106 = vld [vmem:[%s4 + $0x8f8] sm:$0xff]
      %v1107 = vld [vmem:[%s4 + $0x900] sm:$0xff]
      %v1108 = vld [vmem:[%s4 + $0x908] sm:$0xff]
      %v1109 = vld [vmem:[%s4 + $0x910] sm:$0xff]
      %v1110 = vld [vmem:[%s4 + $0x918] sm:$0xff]
      %v1111 = vld [vmem:[%s4 + $0x920] sm:$0xff]
      %v1112 = vld [vmem:[%s4 + $0x928] sm:$0xff]
      %v1113 = vld [vmem:[%s4 + $0x930] sm:$0xff]
      %v1114 = vld [vmem:[%s4 + $0x938] sm:$0xff]
      %v1115 = vld [vmem:[%s4 + $0x940] sm:$0xff]
      %v1116 = vld [vmem:[%s4 + $0x948] sm:$0xff]
      %v1117 = vld [vmem:[%s4 + $0x950] sm:$0xff]
      %v1118 = vld [vmem:[%s4 + $0x958] sm:$0xff]
      %v1119 = vld [vmem:[%s4 + $0x960] sm:$0xff]
      %v1120 = vld [vmem:[%s4 + $0x968] sm:$0xff]
      %v1121 = vld [vmem:[%s4 + $0x970] sm:$0xff]
      %v1122 = vld [vmem:[%s4 + $0x978] sm:$0xff]
      %v1123 = vld [vmem:[%s4 + $0x980] sm:$0xff]
      %v1124 = vld [vmem:[%s4 + $0x988] sm:$0xff]
      %v1125 = vld [vmem:[%s4 + $0x990] sm:$0xff]
      %v1126 = vld [vmem:[%s4 + $0x998] sm:$0xff]
      %v1127 = vld [vmem:[%s4 + $0x9a0] sm:$0xff]
      %v1128 = vld [vmem:[%s4 + $0x9a8] sm:$0xff]
      %v1129 = vld [vmem:[%s4 + $0x9b0] sm:$0xff]
      %v1130 = vld [vmem:[%s4 + $0x9b8] sm:$0xff]
      %v1131 = vld [vmem:[%s4 + $0x9c0] sm:$0xff]
      %v1132 = vld [vmem:[%s4 + $0x9c8] sm:$0xff]
      %v1133 = vld [vmem:[%s4 + $0x9d0] sm:$0xff]
      %v1134 = vld [vmem:[%s4 + $0x9d8] sm:$0xff]
      %v1135 = vld [vmem:[%s4 + $0x9e0] sm:$0xff]
      %v1136 = vld [vmem:[%s4 + $0x9e8] sm:$0xff]
      %v1137 = vld [vmem:[%s4 + $0x9f0] sm:$0xff]
      %v1138 = vld [vmem:[%s4 + $0x9f8] sm:$0xff]
      %v1139 = vld [vmem:[%s4 + $0xa00] sm:$0xff]
      %v1140 = vld [vmem:[%s4 + $0xa08] sm:$0xff]
      %v1141 = vld [vmem:[%s4 + $0xa10] sm:$0xff]
      %v1142 = vld [vmem:[%s4 + $0xa18] sm:$0xff]
      %v1143 = vld [vmem:[%s4 + $0xa20] sm:$0xff]
      %v1144 = vld [vmem:[%s4 + $0xa28] sm:$0xff]
      %v1145 = vld [vmem:[%s4 + $0xa30] sm:$0xff]
      %v1146 = vld [vmem:[%s4 + $0xa38] sm:$0xff]
      %v1147 = vld [vmem:[%s4 + $0xa40] sm:$0xff]
      %v1148 = vld [vmem:[%s4 + $0xa48] sm:$0xff]
      %v1149 = vld [vmem:[%s4 + $0xa50] sm:$0xff]
      %v1150 = vld [vmem:[%s4 + $0xa58] sm:$0xff]
      %v1151 = vld [vmem:[%s4 + $0xa60] sm:$0xff]
      %v1152 = vld [vmem:[%s4 + $0xa68] sm:$0xff]
      %v1153 = vld [vmem:[%s4 + $0xa70] sm:$0xff]
      %v1154 = vld [vmem:[%s4 + $0xa78] sm:$0xff]
      %v1155 = vld [vmem:[%s4 + $0xa80] sm:$0xff]
      %v1156 = vld [vmem:[%s4 + $0xa88] sm:$0xff]
      %v1157 = vld [vmem:[%s4 + $0xa90] sm:$0xff]
      %v1158 = vld [vmem:[%s4 + $0xa98] sm:$0xff]
      %v1159 = vld [vmem:[%s4 + $0xaa0] sm:$0xff]
      %v1160 = vld [vmem:[%s4 + $0xaa8] sm:$0xff]
      %v1161 = vld [vmem:[%s4 + $0xab0] sm:$0xff]
      %v1162 = vld [vmem:[%s4 + $0xab8] sm:$0xff]
      %v1163 = vld [vmem:[%s4 + $0xac0] sm:$0xff]
      %v1164 = vld [vmem:[%s4 + $0xac8] sm:$0xff]
      %v1165 = vld [vmem:[%s4 + $0xad0] sm:$0xff]
      %v1166 = vld [vmem:[%s4 + $0xad8] sm:$0xff]
      %v1167 = vld [vmem:[%s4 + $0xae0] sm:$0xff]
      %v1168 = vld [vmem:[%s4 + $0xae8] sm:$0xff]
      %v1169 = vld [vmem:[%s5] sm:$0x7f]
      %v1171 = vlaneseq
      %v1172 = vshrl.u32 %v1171, 7
      %v1173 = vsub.s32 0, %v1172
      %v1174 = vrot.slane %v1169, %v1173
      %v1175 = vlaneseq
      %v1176 = vshrl.u32 %v1175, 7
      %v1177 = vsub.s32 1, %v1176
      %v1178 = vrot.slane %v1169, %v1177
      %v1179 = vlaneseq
      %v1180 = vshrl.u32 %v1179, 7
      %v1181 = vsub.s32 2, %v1180
      %v1182 = vrot.slane %v1169, %v1181
      %v1183 = vlaneseq
      %v1184 = vshrl.u32 %v1183, 7
      %v1185 = vsub.s32 3, %v1184
      %v1186 = vrot.slane %v1169, %v1185
      %v1187 = vlaneseq
      %v1188 = vshrl.u32 %v1187, 7
      %v1189 = vsub.s32 4, %v1188
      %v1190 = vrot.slane %v1169, %v1189
      %v1191 = vlaneseq
      %v1192 = vshrl.u32 %v1191, 7
      %v1193 = vsub.s32 5, %v1192
      %v1194 = vrot.slane %v1169, %v1193
      %v1195 = vlaneseq
      %v1196 = vshrl.u32 %v1195, 7
      %v1197 = vsub.s32 6, %v1196
      %v1198 = vrot.slane %v1169, %v1197
      %vm1206 = vcmask 130048
      %v1208 = vsel %vm1206, %v818, 0
      %1210 = vmatprep.subr.mxu0 %v820
      %1211 = vmatpush1.msra.mxu0 %v819
      %1212 = vmatprep.subr.mxu0 %v827
      %1213 = vmatpush1.msra.mxu0 %v826
      %1214 = vmatprep.subr.mxu0 %v834
      %1215 = vmatpush1.msra.mxu0 %v833
      %1216 = vmatprep.subr.mxu0 %v841
      %1217 = vmatpush1.msra.mxu0 %v840
      %1218 = vmatprep.subr.mxu0 %v848
      %1219 = vmatpush1.msra.mxu0 %v847
      %1220 = vmatprep.subr.mxu0 %v855
      %1221 = vmatpush1.msra.mxu0 %v854
      %1222 = vmatprep.subr.mxu0 %v862
      %1223 = vmatpush1.msra.mxu0 %v861
      %1224 = vmatprep.subr.mxu0 %v869
      %1225 = vmatpush1.msra.mxu0 %v868
      %1226 = vmatprep.subr.mxu0 %v876
      %1227 = vmatpush1.msra.mxu0 %v875
      %1228 = vmatprep.subr.mxu0 %v883
      %1229 = vmatpush1.msra.mxu0 %v882
      %1230 = vmatprep.subr.mxu0 %v890
      %1231 = vmatpush1.msra.mxu0 %v889
      %1232 = vmatprep.subr.mxu0 %v897
      %1233 = vmatpush1.msra.mxu0 %v896
      %1234 = vmatprep.subr.mxu0 %v904
      %1235 = vmatpush1.msra.mxu0 %v903
      %1236 = vmatprep.subr.mxu0 %v911
      %1237 = vmatpush1.msra.mxu0 %v910
      %1238 = vmatprep.subr.mxu0 %v918
      %1239 = vmatpush1.msra.mxu0 %v917
      %1240 = vmatprep.subr.mxu0 %v925
      %1241 = vmatpush1.msra.mxu0 %v924
      %1242 = vmatprep.subr.mxu0 %v932
      %1243 = vmatpush1.msra.mxu0 %v931
      %1244 = vmatprep.subr.mxu0 %v939
      %1245 = vmatpush1.msra.mxu0 %v938
      %1246 = vmatprep.subr.mxu0 %v946
      %1247 = vmatpush1.msra.mxu0 %v945
      %1248 = vmatprep.subr.mxu0 %v953
      %1249 = vmatpush1.msra.mxu0 %v952
      %1250 = vmatprep.subr.mxu0 %v960
      %1251 = vmatpush1.msra.mxu0 %v959
      %1252 = vmatprep.subr.mxu0 %v967
      %1253 = vmatpush1.msra.mxu0 %v966
      %1254 = vmatprep.subr.mxu0 %v974
      %1255 = vmatpush1.msra.mxu0 %v973
      %1256 = vmatprep.subr.mxu0 %v981
      %1257 = vmatpush1.msra.mxu0 %v980
      %1258 = vmatprep.subr.mxu0 %v988
      %1259 = vmatpush1.msra.mxu0 %v987
      %1260 = vmatprep.subr.mxu0 %v995
      %1261 = vmatpush1.msra.mxu0 %v994
      %1262 = vmatprep.subr.mxu0 %v1002
      %1263 = vmatpush1.msra.mxu0 %v1001
      %1264 = vmatprep.subr.mxu0 %v1009
      %1265 = vmatpush1.msra.mxu0 %v1008
      %1266 = vmatprep.subr.mxu0 %v1016
      %1267 = vmatpush1.msra.mxu0 %v1015
      %1268 = vmatprep.subr.mxu0 %v1023
      %1269 = vmatpush1.msra.mxu0 %v1022
      %1270 = vmatprep.subr.mxu0 %v1030
      %1271 = vmatpush1.msra.mxu0 %v1029
      %1272 = vmatprep.subr.mxu0 %v1037
      %1273 = vmatpush1.msra.mxu0 %v1036
      %1274 = vmatprep.mubr.f32.mxu0 %v816
      %1275 = vmatmul.mubr.f32.gmra.mrb[0].mxu0 %v815
      %v1276 = vpop.f32.mrb[0].mxu0
      %v1277 = vadd.f32 %v1174, %v1276
      %v1278 = vpop.f32.mrb[0].mxu0
      %v1279 = vadd.f32 %v1178, %v1278
      %1280 = vdwg.mxu0
      %1281 = vmatprep.subr.mxu0 %v1044
      %1282 = vmatpush1.msra.mxu0 %v1043
      %1283 = vmatprep.subr.mxu0 %v1051
      %1284 = vmatpush1.msra.mxu0 %v1050
      %1285 = vmatprep.subr.mxu0 %v1058
      %1286 = vmatpush1.msra.mxu0 %v1057
      %1287 = vmatprep.subr.mxu0 %v1065
      %1288 = vmatpush1.msra.mxu0 %v1064
      %1289 = vmatprep.subr.mxu0 %v1072
      %1290 = vmatpush1.msra.mxu0 %v1071
      %1291 = vmatprep.subr.mxu0 %v1079
      %1292 = vmatpush1.msra.mxu0 %v1078
      %1293 = vmatprep.subr.mxu0 %v1086
      %1294 = vmatpush1.msra.mxu0 %v1085
      %1295 = vmatprep.subr.mxu0 %v1093
      %1296 = vmatpush1.msra.mxu0 %v1092
      %1297 = vmatprep.subr.mxu0 %v1100
      %1298 = vmatpush1.msra.mxu0 %v1099
      %1299 = vmatprep.subr.mxu0 %v1107
      %1300 = vmatpush1.msra.mxu0 %v1106
      %1301 = vmatprep.subr.mxu0 %v1114
      %1302 = vmatpush1.msra.mxu0 %v1113
      %1303 = vmatprep.subr.mxu0 %v1121
      %1304 = vmatpush1.msra.mxu0 %v1120
      %1305 = vmatprep.subr.mxu0 %v1128
      %1306 = vmatpush1.msra.mxu0 %v1127
      %1307 = vmatprep.subr.mxu0 %v1135
      %1308 = vmatpush1.msra.mxu0 %v1134
      %1309 = vmatprep.subr.mxu0 %v1142
      %1310 = vmatpush1.msra.mxu0 %v1141
      %1311 = vmatprep.subr.mxu0 %v1149
      %1312 = vmatpush1.msra.mxu0 %v1148
      %1313 = vmatprep.subr.mxu0 %v1156
      %1314 = vmatpush1.msra.mxu0 %v1155
      %1315 = vmatprep.subr.mxu0 %v1163
      %1316 = vmatpush1.msra.mxu0 %v1162
      %1317 = vmatprep.subr.mxu0 0.0
      %1318 = vmatpush1.msra.mxu0 0.0
      %1319 = vmatprep.subr.mxu0 0.0
      %1320 = vmatpush1.msra.mxu0 0.0
      %1321 = vmatprep.subr.mxu0 0.0
      %1322 = vmatpush1.msra.mxu0 0.0
      %1323 = vmatprep.subr.mxu0 0.0
      %1324 = vmatpush1.msra.mxu0 0.0
      %1325 = vmatprep.subr.mxu0 0.0
      %1326 = vmatpush1.msra.mxu0 0.0
      %1327 = vmatprep.subr.mxu0 0.0
      %1328 = vmatpush1.msra.mxu0 0.0
      %1329 = vmatprep.subr.mxu0 0.0
      %1330 = vmatpush1.msra.mxu0 0.0
      %1331 = vmatprep.subr.mxu0 0.0
      %1332 = vmatpush1.msra.mxu0 0.0
      %1333 = vmatprep.subr.mxu0 0.0
      %1334 = vmatpush1.msra.mxu0 0.0
      %1335 = vmatprep.subr.mxu0 0.0
      %1336 = vmatpush1.msra.mxu0 0.0
      %1337 = vmatprep.subr.mxu0 0.0
      %1338 = vmatpush1.msra.mxu0 0.0
      %1339 = vmatprep.subr.mxu0 0.0
      %1340 = vmatpush1.msra.mxu0 0.0
      %1341 = vmatprep.subr.mxu0 0.0
      %1342 = vmatpush1.msra.mxu0 0.0
      %1343 = vmatprep.subr.mxu0 0.0
      %1344 = vmatpush1.msra.mxu0 0.0
      %1345 = vmatprep.mubr.f32.mxu0 %v1208
      %1346 = vmatmul.mubr.f32.gmra.mrb[0].mxu0 %v817
      %v1347 = vpop.f32.mrb[0].mxu0
      %v1348 = vadd.f32 %v1277, %v1347
      %v1349 = vpop.f32.mrb[0].mxu0
      %v1350 = vadd.f32 %v1279, %v1349
      %1351 = vdwg.mxu0
      %1352 = vmatprep.subr.mxu0 %v822
      %1353 = vmatpush1.msra.mxu0 %v821
      %1354 = vmatprep.subr.mxu0 %v829
      %1355 = vmatpush1.msra.mxu0 %v828
      %1356 = vmatprep.subr.mxu0 %v836
      %1357 = vmatpush1.msra.mxu0 %v835
      %1358 = vmatprep.subr.mxu0 %v843
      %1359 = vmatpush1.msra.mxu0 %v842
      %1360 = vmatprep.subr.mxu0 %v850
      %1361 = vmatpush1.msra.mxu0 %v849
      %1362 = vmatprep.subr.mxu0 %v857
      %1363 = vmatpush1.msra.mxu0 %v856
      %1364 = vmatprep.subr.mxu0 %v864
      %1365 = vmatpush1.msra.mxu0 %v863
      %1366 = vmatprep.subr.mxu0 %v871
      %1367 = vmatpush1.msra.mxu0 %v870
      %1368 = vmatprep.subr.mxu0 %v878
      %1369 = vmatpush1.msra.mxu0 %v877
      %1370 = vmatprep.subr.mxu0 %v885
      %1371 = vmatpush1.msra.mxu0 %v884
      %1372 = vmatprep.subr.mxu0 %v892
      %1373 = vmatpush1.msra.mxu0 %v891
      %1374 = vmatprep.subr.mxu0 %v899
      %1375 = vmatpush1.msra.mxu0 %v898
      %1376 = vmatprep.subr.mxu0 %v906
      %1377 = vmatpush1.msra.mxu0 %v905
      %1378 = vmatprep.subr.mxu0 %v913
      %1379 = vmatpush1.msra.mxu0 %v912
      %1380 = vmatprep.subr.mxu0 %v920
      %1381 = vmatpush1.msra.mxu0 %v919
      %1382 = vmatprep.subr.mxu0 %v927
      %1383 = vmatpush1.msra.mxu0 %v926
      %1384 = vmatprep.subr.mxu0 %v934
      %1385 = vmatpush1.msra.mxu0 %v933
      %1386 = vmatprep.subr.mxu0 %v941
      %1387 = vmatpush1.msra.mxu0 %v940
      %1388 = vmatprep.subr.mxu0 %v948
      %1389 = vmatpush1.msra.mxu0 %v947
      %1390 = vmatprep.subr.mxu0 %v955
      %1391 = vmatpush1.msra.mxu0 %v954
      %1392 = vmatprep.subr.mxu0 %v962
      %1393 = vmatpush1.msra.mxu0 %v961
      %1394 = vmatprep.subr.mxu0 %v969
      %1395 = vmatpush1.msra.mxu0 %v968
      %1396 = vmatprep.subr.mxu0 %v976
      %1397 = vmatpush1.msra.mxu0 %v975
      %1398 = vmatprep.subr.mxu0 %v983
      %1399 = vmatpush1.msra.mxu0 %v982
      %1400 = vmatprep.subr.mxu0 %v990
      %1401 = vmatpush1.msra.mxu0 %v989
      %1402 = vmatprep.subr.mxu0 %v997
      %1403 = vmatpush1.msra.mxu0 %v996
      %1404 = vmatprep.subr.mxu0 %v1004
      %1405 = vmatpush1.msra.mxu0 %v1003
      %1406 = vmatprep.subr.mxu0 %v1011
      %1407 = vmatpush1.msra.mxu0 %v1010
      %1408 = vmatprep.subr.mxu0 %v1018
      %1409 = vmatpush1.msra.mxu0 %v1017
      %1410 = vmatprep.subr.mxu0 %v1025
      %1411 = vmatpush1.msra.mxu0 %v1024
      %1412 = vmatprep.subr.mxu0 %v1032
      %1413 = vmatpush1.msra.mxu0 %v1031
      %1414 = vmatprep.subr.mxu0 %v1039
      %1415 = vmatpush1.msra.mxu0 %v1038
      %1416 = vmatprep.mubr.f32.mxu0 %v816
      %1417 = vmatmul.mubr.f32.gmra.mrb[0].mxu0 %v815
      %v1418 = vpop.f32.mrb[0].mxu0
      %v1419 = vadd.f32 %v1182, %v1418
      %v1420 = vpop.f32.mrb[0].mxu0
      %v1421 = vadd.f32 %v1186, %v1420
      %1422 = vdwg.mxu0
      %1423 = vmatprep.subr.mxu0 %v1046
      %1424 = vmatpush1.msra.mxu0 %v1045
      %1425 = vmatprep.subr.mxu0 %v1053
      %1426 = vmatpush1.msra.mxu0 %v1052
      %1427 = vmatprep.subr.mxu0 %v1060
      %1428 = vmatpush1.msra.mxu0 %v1059
      %1429 = vmatprep.subr.mxu0 %v1067
      %1430 = vmatpush1.msra.mxu0 %v1066
      %1431 = vmatprep.subr.mxu0 %v1074
      %1432 = vmatpush1.msra.mxu0 %v1073
      %1433 = vmatprep.subr.mxu0 %v1081
      %1434 = vmatpush1.msra.mxu0 %v1080
      %1435 = vmatprep.subr.mxu0 %v1088
      %1436 = vmatpush1.msra.mxu0 %v1087
      %1437 = vmatprep.subr.mxu0 %v1095
      %1438 = vmatpush1.msra.mxu0 %v1094
      %1439 = vmatprep.subr.mxu0 %v1102
      %1440 = vmatpush1.msra.mxu0 %v1101
      %1441 = vmatprep.subr.mxu0 %v1109
      %1442 = vmatpush1.msra.mxu0 %v1108
      %1443 = vmatprep.subr.mxu0 %v1116
      %1444 = vmatpush1.msra.mxu0 %v1115
      %1445 = vmatprep.subr.mxu0 %v1123
      %1446 = vmatpush1.msra.mxu0 %v1122
      %1447 = vmatprep.subr.mxu0 %v1130
      %1448 = vmatpush1.msra.mxu0 %v1129
      %1449 = vmatprep.subr.mxu0 %v1137
      %1450 = vmatpush1.msra.mxu0 %v1136
      %1451 = vmatprep.subr.mxu0 %v1144
      %1452 = vmatpush1.msra.mxu0 %v1143
      %1453 = vmatprep.subr.mxu0 %v1151
      %1454 = vmatpush1.msra.mxu0 %v1150
      %1455 = vmatprep.subr.mxu0 %v1158
      %1456 = vmatpush1.msra.mxu0 %v1157
      %1457 = vmatprep.subr.mxu0 %v1165
      %1458 = vmatpush1.msra.mxu0 %v1164
      %1459 = vmatprep.subr.mxu0 0.0
      %1460 = vmatpush1.msra.mxu0 0.0
      %1461 = vmatprep.subr.mxu0 0.0
      %1462 = vmatpush1.msra.mxu0 0.0
      %1463 = vmatprep.subr.mxu0 0.0
      %1464 = vmatpush1.msra.mxu0 0.0
      %1465 = vmatprep.subr.mxu0 0.0
      %1466 = vmatpush1.msra.mxu0 0.0
      %1467 = vmatprep.subr.mxu0 0.0
      %1468 = vmatpush1.msra.mxu0 0.0
      %1469 = vmatprep.subr.mxu0 0.0
      %1470 = vmatpush1.msra.mxu0 0.0
      %1471 = vmatprep.subr.mxu0 0.0
      %1472 = vmatpush1.msra.mxu0 0.0
      %1473 = vmatprep.subr.mxu0 0.0
      %1474 = vmatpush1.msra.mxu0 0.0
      %1475 = vmatprep.subr.mxu0 0.0
      %1476 = vmatpush1.msra.mxu0 0.0
      %1477 = vmatprep.subr.mxu0 0.0
      %1478 = vmatpush1.msra.mxu0 0.0
      %1479 = vmatprep.subr.mxu0 0.0
      %1480 = vmatpush1.msra.mxu0 0.0
      %1481 = vmatprep.subr.mxu0 0.0
      %1482 = vmatpush1.msra.mxu0 0.0
      %1483 = vmatprep.subr.mxu0 0.0
      %1484 = vmatpush1.msra.mxu0 0.0
      %1485 = vmatprep.subr.mxu0 0.0
      %1486 = vmatpush1.msra.mxu0 0.0
      %1487 = vmatprep.mubr.f32.mxu0 %v1208
      %1488 = vmatmul.mubr.f32.gmra.mrb[0].mxu0 %v817
      %v1489 = vpop.f32.mrb[0].mxu0
      %v1490 = vadd.f32 %v1419, %v1489
      %v1491 = vpop.f32.mrb[0].mxu0
      %v1492 = vadd.f32 %v1421, %v1491
      %1493 = vdwg.mxu0
      %1494 = vmatprep.subr.mxu0 %v824
      %1495 = vmatpush1.msra.mxu0 %v823
      %1496 = vmatprep.subr.mxu0 %v831
      %1497 = vmatpush1.msra.mxu0 %v830
      %1498 = vmatprep.subr.mxu0 %v838
      %1499 = vmatpush1.msra.mxu0 %v837
      %1500 = vmatprep.subr.mxu0 %v845
      %1501 = vmatpush1.msra.mxu0 %v844
      %1502 = vmatprep.subr.mxu0 %v852
      %1503 = vmatpush1.msra.mxu0 %v851
      %1504 = vmatprep.subr.mxu0 %v859
      %1505 = vmatpush1.msra.mxu0 %v858
      %1506 = vmatprep.subr.mxu0 %v866
      %1507 = vmatpush1.msra.mxu0 %v865
      %1508 = vmatprep.subr.mxu0 %v873
      %1509 = vmatpush1.msra.mxu0 %v872
      %1510 = vmatprep.subr.mxu0 %v880
      %1511 = vmatpush1.msra.mxu0 %v879
      %1512 = vmatprep.subr.mxu0 %v887
      %1513 = vmatpush1.msra.mxu0 %v886
      %1514 = vmatprep.subr.mxu0 %v894
      %1515 = vmatpush1.msra.mxu0 %v893
      %1516 = vmatprep.subr.mxu0 %v901
      %1517 = vmatpush1.msra.mxu0 %v900
      %1518 = vmatprep.subr.mxu0 %v908
      %1519 = vmatpush1.msra.mxu0 %v907
      %1520 = vmatprep.subr.mxu0 %v915
      %1521 = vmatpush1.msra.mxu0 %v914
      %1522 = vmatprep.subr.mxu0 %v922
      %1523 = vmatpush1.msra.mxu0 %v921
      %1524 = vmatprep.subr.mxu0 %v929
      %1525 = vmatpush1.msra.mxu0 %v928
      %1526 = vmatprep.subr.mxu0 %v936
      %1527 = vmatpush1.msra.mxu0 %v935
      %1528 = vmatprep.subr.mxu0 %v943
      %1529 = vmatpush1.msra.mxu0 %v942
      %1530 = vmatprep.subr.mxu0 %v950
      %1531 = vmatpush1.msra.mxu0 %v949
      %1532 = vmatprep.subr.mxu0 %v957
      %1533 = vmatpush1.msra.mxu0 %v956
      %1534 = vmatprep.subr.mxu0 %v964
      %1535 = vmatpush1.msra.mxu0 %v963
      %1536 = vmatprep.subr.mxu0 %v971
      %1537 = vmatpush1.msra.mxu0 %v970
      %1538 = vmatprep.subr.mxu0 %v978
      %1539 = vmatpush1.msra.mxu0 %v977
      %1540 = vmatprep.subr.mxu0 %v985
      %1541 = vmatpush1.msra.mxu0 %v984
      %1542 = vmatprep.subr.mxu0 %v992
      %1543 = vmatpush1.msra.mxu0 %v991
      %1544 = vmatprep.subr.mxu0 %v999
      %1545 = vmatpush1.msra.mxu0 %v998
      %1546 = vmatprep.subr.mxu0 %v1006
      %1547 = vmatpush1.msra.mxu0 %v1005
      %1548 = vmatprep.subr.mxu0 %v1013
      %1549 = vmatpush1.msra.mxu0 %v1012
      %1550 = vmatprep.subr.mxu0 %v1020
      %1551 = vmatpush1.msra.mxu0 %v1019
      %1552 = vmatprep.subr.mxu0 %v1027
      %1553 = vmatpush1.msra.mxu0 %v1026
      %1554 = vmatprep.subr.mxu0 %v1034
      %1555 = vmatpush1.msra.mxu0 %v1033
      %1556 = vmatprep.subr.mxu0 %v1041
      %1557 = vmatpush1.msra.mxu0 %v1040
      %1558 = vmatprep.mubr.f32.mxu0 %v816
      %1559 = vmatmul.mubr.f32.gmra.mrb[0].mxu0 %v815
      %v1560 = vpop.f32.mrb[0].mxu0
      %v1561 = vadd.f32 %v1190, %v1560
      %v1562 = vpop.f32.mrb[0].mxu0
      %v1563 = vadd.f32 %v1194, %v1562
      %1564 = vdwg.mxu0
      %1565 = vmatprep.subr.mxu0 %v1048
      %1566 = vmatpush1.msra.mxu0 %v1047
      %1567 = vmatprep.subr.mxu0 %v1055
      %1568 = vmatpush1.msra.mxu0 %v1054
      %1569 = vmatprep.subr.mxu0 %v1062
      %1570 = vmatpush1.msra.mxu0 %v1061
      %1571 = vmatprep.subr.mxu0 %v1069
      %1572 = vmatpush1.msra.mxu0 %v1068
      %1573 = vmatprep.subr.mxu0 %v1076
      %1574 = vmatpush1.msra.mxu0 %v1075
      %1575 = vmatprep.subr.mxu0 %v1083
      %1576 = vmatpush1.msra.mxu0 %v1082
      %1577 = vmatprep.subr.mxu0 %v1090
      %1578 = vmatpush1.msra.mxu0 %v1089
      %1579 = vmatprep.subr.mxu0 %v1097
      %1580 = vmatpush1.msra.mxu0 %v1096
      %1581 = vmatprep.subr.mxu0 %v1104
      %1582 = vmatpush1.msra.mxu0 %v1103
      %1583 = vmatprep.subr.mxu0 %v1111
      %1584 = vmatpush1.msra.mxu0 %v1110
      %1585 = vmatprep.subr.mxu0 %v1118
      %1586 = vmatpush1.msra.mxu0 %v1117
      %1587 = vmatprep.subr.mxu0 %v1125
      %1588 = vmatpush1.msra.mxu0 %v1124
      %1589 = vmatprep.subr.mxu0 %v1132
      %1590 = vmatpush1.msra.mxu0 %v1131
      %1591 = vmatprep.subr.mxu0 %v1139
      %1592 = vmatpush1.msra.mxu0 %v1138
      %1593 = vmatprep.subr.mxu0 %v1146
      %1594 = vmatpush1.msra.mxu0 %v1145
      %1595 = vmatprep.subr.mxu0 %v1153
      %1596 = vmatpush1.msra.mxu0 %v1152
      %1597 = vmatprep.subr.mxu0 %v1160
      %1598 = vmatpush1.msra.mxu0 %v1159
      %1599 = vmatprep.subr.mxu0 %v1167
      %1600 = vmatpush1.msra.mxu0 %v1166
      %1601 = vmatprep.subr.mxu0 0.0
      %1602 = vmatpush1.msra.mxu0 0.0
      %1603 = vmatprep.subr.mxu0 0.0
      %1604 = vmatpush1.msra.mxu0 0.0
      %1605 = vmatprep.subr.mxu0 0.0
      %1606 = vmatpush1.msra.mxu0 0.0
      %1607 = vmatprep.subr.mxu0 0.0
      %1608 = vmatpush1.msra.mxu0 0.0
      %1609 = vmatprep.subr.mxu0 0.0
      %1610 = vmatpush1.msra.mxu0 0.0
      %1611 = vmatprep.subr.mxu0 0.0
      %1612 = vmatpush1.msra.mxu0 0.0
      %1613 = vmatprep.subr.mxu0 0.0
      %1614 = vmatpush1.msra.mxu0 0.0
      %1615 = vmatprep.subr.mxu0 0.0
      %1616 = vmatpush1.msra.mxu0 0.0
      %1617 = vmatprep.subr.mxu0 0.0
      %1618 = vmatpush1.msra.mxu0 0.0
      %1619 = vmatprep.subr.mxu0 0.0
      %1620 = vmatpush1.msra.mxu0 0.0
      %1621 = vmatprep.subr.mxu0 0.0
      %1622 = vmatpush1.msra.mxu0 0.0
      %1623 = vmatprep.subr.mxu0 0.0
      %1624 = vmatpush1.msra.mxu0 0.0
      %1625 = vmatprep.subr.mxu0 0.0
      %1626 = vmatpush1.msra.mxu0 0.0
      %1627 = vmatprep.subr.mxu0 0.0
      %1628 = vmatpush1.msra.mxu0 0.0
      %1629 = vmatprep.mubr.f32.mxu0 %v1208
      %1630 = vmatmul.mubr.f32.gmra.mrb[0].mxu0 %v817
      %v1631 = vpop.f32.mrb[0].mxu0
      %v1632 = vadd.f32 %v1561, %v1631
      %v1633 = vpop.f32.mrb[0].mxu0
      %v1634 = vadd.f32 %v1563, %v1633
      %1635 = vdwg.mxu0
      %1636 = vmatprep.subr.mxu0 0.0
      %1637 = vmatpush1.msra.mxu0 %v825
      %1638 = vmatprep.subr.mxu0 0.0
      %1639 = vmatpush1.msra.mxu0 %v832
      %1640 = vmatprep.subr.mxu0 0.0
      %1641 = vmatpush1.msra.mxu0 %v839
      %1642 = vmatprep.subr.mxu0 0.0
      %1643 = vmatpush1.msra.mxu0 %v846
      %1644 = vmatprep.subr.mxu0 0.0
      %1645 = vmatpush1.msra.mxu0 %v853
      %1646 = vmatprep.subr.mxu0 0.0
      %1647 = vmatpush1.msra.mxu0 %v860
      %1648 = vmatprep.subr.mxu0 0.0
      %1649 = vmatpush1.msra.mxu0 %v867
      %1650 = vmatprep.subr.mxu0 0.0
      %1651 = vmatpush1.msra.mxu0 %v874
      %1652 = vmatprep.subr.mxu0 0.0
      %1653 = vmatpush1.msra.mxu0 %v881
      %1654 = vmatprep.subr.mxu0 0.0
      %1655 = vmatpush1.msra.mxu0 %v888
      %1656 = vmatprep.subr.mxu0 0.0
      %1657 = vmatpush1.msra.mxu0 %v895
      %1658 = vmatprep.subr.mxu0 0.0
      %1659 = vmatpush1.msra.mxu0 %v902
      %1660 = vmatprep.subr.mxu0 0.0
      %1661 = vmatpush1.msra.mxu0 %v909
      %1662 = vmatprep.subr.mxu0 0.0
      %1663 = vmatpush1.msra.mxu0 %v916
      %1664 = vmatprep.subr.mxu0 0.0
      %1665 = vmatpush1.msra.mxu0 %v923
      %1666 = vmatprep.subr.mxu0 0.0
      %1667 = vmatpush1.msra.mxu0 %v930
      %1668 = vmatprep.subr.mxu0 0.0
      %1669 = vmatpush1.msra.mxu0 %v937
      %1670 = vmatprep.subr.mxu0 0.0
      %1671 = vmatpush1.msra.mxu0 %v944
      %1672 = vmatprep.subr.mxu0 0.0
      %1673 = vmatpush1.msra.mxu0 %v951
      %1674 = vmatprep.subr.mxu0 0.0
      %1675 = vmatpush1.msra.mxu0 %v958
      %1676 = vmatprep.subr.mxu0 0.0
      %1677 = vmatpush1.msra.mxu0 %v965
      %1678 = vmatprep.subr.mxu0 0.0
      %1679 = vmatpush1.msra.mxu0 %v972
      %1680 = vmatprep.subr.mxu0 0.0
      %1681 = vmatpush1.msra.mxu0 %v979
      %1682 = vmatprep.subr.mxu0 0.0
      %1683 = vmatpush1.msra.mxu0 %v986
      %1684 = vmatprep.subr.mxu0 0.0
      %1685 = vmatpush1.msra.mxu0 %v993
      %1686 = vmatprep.subr.mxu0 0.0
      %1687 = vmatpush1.msra.mxu0 %v1000
      %1688 = vmatprep.subr.mxu0 0.0
      %1689 = vmatpush1.msra.mxu0 %v1007
      %1690 = vmatprep.subr.mxu0 0.0
      %1691 = vmatpush1.msra.mxu0 %v1014
      %1692 = vmatprep.subr.mxu0 0.0
      %1693 = vmatpush1.msra.mxu0 %v1021
      %1694 = vmatprep.subr.mxu0 0.0
      %1695 = vmatpush1.msra.mxu0 %v1028
      %1696 = vmatprep.subr.mxu0 0.0
      %1697 = vmatpush1.msra.mxu0 %v1035
      %1698 = vmatprep.subr.mxu0 0.0
      %1699 = vmatpush1.msra.mxu0 %v1042
      %1700 = vmatprep.mubr.f32.mxu0 %v816
      %1701 = vmatmul.mubr.f32.gmra.mrb[0].mxu0 %v815
      %v1702 = vpop.f32.mrb[0].mxu0
      %v1703 = vadd.f32 %v1198, %v1702
      %v1704 = vpop.f32.mrb[0].mxu0
      %1705 = vdwg.mxu0
      %1706 = vmatprep.subr.mxu0 0.0
      %1707 = vmatpush1.msra.mxu0 %v1049
      %1708 = vmatprep.subr.mxu0 0.0
      %1709 = vmatpush1.msra.mxu0 %v1056
      %1710 = vmatprep.subr.mxu0 0.0
      %1711 = vmatpush1.msra.mxu0 %v1063
      %1712 = vmatprep.subr.mxu0 0.0
      %1713 = vmatpush1.msra.mxu0 %v1070
      %1714 = vmatprep.subr.mxu0 0.0
      %1715 = vmatpush1.msra.mxu0 %v1077
      %1716 = vmatprep.subr.mxu0 0.0
      %1717 = vmatpush1.msra.mxu0 %v1084
      %1718 = vmatprep.subr.mxu0 0.0
      %1719 = vmatpush1.msra.mxu0 %v1091
      %1720 = vmatprep.subr.mxu0 0.0
      %1721 = vmatpush1.msra.mxu0 %v1098
      %1722 = vmatprep.subr.mxu0 0.0
      %1723 = vmatpush1.msra.mxu0 %v1105
      %1724 = vmatprep.subr.mxu0 0.0
      %1725 = vmatpush1.msra.mxu0 %v1112
      %1726 = vmatprep.subr.mxu0 0.0
      %1727 = vmatpush1.msra.mxu0 %v1119
      %1728 = vmatprep.subr.mxu0 0.0
      %1729 = vmatpush1.msra.mxu0 %v1126
      %1730 = vmatprep.subr.mxu0 0.0
      %1731 = vmatpush1.msra.mxu0 %v1133
      %1732 = vmatprep.subr.mxu0 0.0
      %1733 = vmatpush1.msra.mxu0 %v1140
      %1734 = vmatprep.subr.mxu0 0.0
      %1735 = vmatpush1.msra.mxu0 %v1147
      %1736 = vmatprep.subr.mxu0 0.0
      %1737 = vmatpush1.msra.mxu0 %v1154
      %1738 = vmatprep.subr.mxu0 0.0
      %1739 = vmatpush1.msra.mxu0 %v1161
      %1740 = vmatprep.subr.mxu0 0.0
      %1741 = vmatpush1.msra.mxu0 %v1168
      %1742 = vmatprep.subr.mxu0 0.0
      %1743 = vmatpush1.msra.mxu0 0.0
      %1744 = vmatprep.subr.mxu0 0.0
      %1745 = vmatpush1.msra.mxu0 0.0
      %1746 = vmatprep.subr.mxu0 0.0
      %1747 = vmatpush1.msra.mxu0 0.0
      %1748 = vmatprep.subr.mxu0 0.0
      %1749 = vmatpush1.msra.mxu0 0.0
      %1750 = vmatprep.subr.mxu0 0.0
      %1751 = vmatpush1.msra.mxu0 0.0
      %1752 = vmatprep.subr.mxu0 0.0
      %1753 = vmatpush1.msra.mxu0 0.0
      %1754 = vmatprep.subr.mxu0 0.0
      %1755 = vmatpush1.msra.mxu0 0.0
      %1756 = vmatprep.subr.mxu0 0.0
      %1757 = vmatpush1.msra.mxu0 0.0
      %1758 = vmatprep.subr.mxu0 0.0
      %1759 = vmatpush1.msra.mxu0 0.0
      %1760 = vmatprep.subr.mxu0 0.0
      %1761 = vmatpush1.msra.mxu0 0.0
      %1762 = vmatprep.subr.mxu0 0.0
      %1763 = vmatpush1.msra.mxu0 0.0
      %1764 = vmatprep.subr.mxu0 0.0
      %1765 = vmatpush1.msra.mxu0 0.0
      %1766 = vmatprep.subr.mxu0 0.0
      %1767 = vmatpush1.msra.mxu0 0.0
      %1768 = vmatprep.subr.mxu0 0.0
      %1769 = vmatpush1.msra.mxu0 0.0
      %1770 = vmatprep.mubr.f32.mxu0 %v1208
      %1771 = vmatmul.mubr.f32.gmra.mrb[0].mxu0 %v817
      %v1772 = vpop.f32.mrb[0].mxu0
      %v1773 = vadd.f32 %v1703, %v1772
      %v1774 = vpop.f32.mrb[0].mxu0
      %1775 = vdwg.mxu0
      %v1776 = vmax.f32 %v1348, 0.0
      %v1777 = vmax.f32 %v1350, 0.0
      %v1778 = vmax.f32 %v1490, 0.0
      %v1779 = vmax.f32 %v1492, 0.0
      %v1780 = vmax.f32 %v1632, 0.0
      %v1781 = vmax.f32 %v1634, 0.0
      %v1782 = vmax.f32 %v1773, 0.0
      %v1783 = vld [vmem:[%s6] sm:$0xff]
      %v1784 = vld [vmem:[%s6 + $0x8] sm:$0xff]
      %v1785 = vld [vmem:[%s6 + $0x10] sm:$0xff]
      %v1786 = vld [vmem:[%s6 + $0x18] sm:$0xff]
      %v1787 = vld [vmem:[%s6 + $0x20] sm:$0xff]
      %v1788 = vld [vmem:[%s6 + $0x28] sm:$0xff]
      %v1789 = vld [vmem:[%s6 + $0x30] sm:$0xff]
      %v1790 = vld [vmem:[%s6 + $0x38] sm:$0xff]
      %v1791 = vld [vmem:[%s6 + $0x40] sm:$0xff]
      %v1792 = vld [vmem:[%s6 + $0x48] sm:$0xff]
      %v1793 = vld [vmem:[%s6 + $0x50] sm:$0xff]
      %v1794 = vld [vmem:[%s6 + $0x58] sm:$0xff]
      %v1795 = vld [vmem:[%s6 + $0x60] sm:$0xff]
      %v1796 = vld [vmem:[%s6 + $0x68] sm:$0xff]
      %v1797 = vld [vmem:[%s6 + $0x70] sm:$0xff]
      %v1798 = vld [vmem:[%s6 + $0x78] sm:$0xff]
      %v1799 = vld [vmem:[%s6 + $0x80] sm:$0xff]
      %v1800 = vld [vmem:[%s6 + $0x88] sm:$0xff]
      %v1801 = vld [vmem:[%s6 + $0x90] sm:$0xff]
      %v1802 = vld [vmem:[%s6 + $0x98] sm:$0xff]
      %v1803 = vld [vmem:[%s6 + $0xa0] sm:$0xff]
      %v1804 = vld [vmem:[%s6 + $0xa8] sm:$0xff]
      %v1805 = vld [vmem:[%s6 + $0xb0] sm:$0xff]
      %v1806 = vld [vmem:[%s6 + $0xb8] sm:$0xff]
      %v1807 = vld [vmem:[%s6 + $0xc0] sm:$0xff]
      %v1808 = vld [vmem:[%s6 + $0xc8] sm:$0xff]
      %v1809 = vld [vmem:[%s6 + $0xd0] sm:$0xff]
      %v1810 = vld [vmem:[%s6 + $0xd8] sm:$0xff]
      %v1811 = vld [vmem:[%s6 + $0xe0] sm:$0xff]
      %v1812 = vld [vmem:[%s6 + $0xe8] sm:$0xff]
      %v1813 = vld [vmem:[%s6 + $0xf0] sm:$0xff]
      %v1814 = vld [vmem:[%s6 + $0xf8] sm:$0xff]
      %v1815 = vld [vmem:[%s6 + $0x100] sm:$0xff]
      %v1816 = vld [vmem:[%s6 + $0x108] sm:$0xff]
      %v1817 = vld [vmem:[%s6 + $0x110] sm:$0xff]
      %v1818 = vld [vmem:[%s6 + $0x118] sm:$0xff]
      %v1819 = vld [vmem:[%s6 + $0x120] sm:$0xff]
      %v1820 = vld [vmem:[%s6 + $0x128] sm:$0xff]
      %v1821 = vld [vmem:[%s6 + $0x130] sm:$0xff]
      %v1822 = vld [vmem:[%s6 + $0x138] sm:$0xff]
      %v1823 = vld [vmem:[%s6 + $0x140] sm:$0xff]
      %v1824 = vld [vmem:[%s6 + $0x148] sm:$0xff]
      %v1825 = vld [vmem:[%s6 + $0x150] sm:$0xff]
      %v1826 = vld [vmem:[%s6 + $0x158] sm:$0xff]
      %v1827 = vld [vmem:[%s6 + $0x160] sm:$0xff]
      %v1828 = vld [vmem:[%s6 + $0x168] sm:$0xff]
      %v1829 = vld [vmem:[%s6 + $0x170] sm:$0xff]
      %v1830 = vld [vmem:[%s6 + $0x178] sm:$0xff]
      %v1831 = vld [vmem:[%s6 + $0x180] sm:$0xff]
      %v1832 = vld [vmem:[%s6 + $0x188] sm:$0xff]
      %v1833 = vld [vmem:[%s6 + $0x190] sm:$0xff]
      %v1834 = vld [vmem:[%s6 + $0x198] sm:$0xff]
      %v1835 = vld [vmem:[%s6 + $0x1a0] sm:$0xff]
      %v1836 = vld [vmem:[%s6 + $0x1a8] sm:$0xff]
      %v1837 = vld [vmem:[%s6 + $0x1b0] sm:$0xff]
      %v1838 = vld [vmem:[%s6 + $0x1b8] sm:$0xff]
      %v1839 = vld [vmem:[%s6 + $0x1c0] sm:$0xff]
      %v1840 = vld [vmem:[%s6 + $0x1c8] sm:$0xff]
      %v1841 = vld [vmem:[%s6 + $0x1d0] sm:$0xff]
      %v1842 = vld [vmem:[%s6 + $0x1d8] sm:$0xff]
      %v1843 = vld [vmem:[%s6 + $0x1e0] sm:$0xff]
      %v1844 = vld [vmem:[%s6 + $0x1e8] sm:$0xff]
      %v1845 = vld [vmem:[%s6 + $0x1f0] sm:$0xff]
      %v1846 = vld [vmem:[%s6 + $0x1f8] sm:$0xff]
      %v1847 = vld [vmem:[%s6 + $0x200] sm:$0xff]
      %v1848 = vld [vmem:[%s6 + $0x208] sm:$0xff]
      %v1849 = vld [vmem:[%s6 + $0x210] sm:$0xff]
      %v1850 = vld [vmem:[%s6 + $0x218] sm:$0xff]
      %v1851 = vld [vmem:[%s6 + $0x220] sm:$0xff]
      %v1852 = vld [vmem:[%s6 + $0x228] sm:$0xff]
      %v1853 = vld [vmem:[%s6 + $0x230] sm:$0xff]
      %v1854 = vld [vmem:[%s6 + $0x238] sm:$0xff]
      %v1855 = vld [vmem:[%s6 + $0x240] sm:$0xff]
      %v1856 = vld [vmem:[%s6 + $0x248] sm:$0xff]
      %v1857 = vld [vmem:[%s6 + $0x250] sm:$0xff]
      %v1858 = vld [vmem:[%s6 + $0x258] sm:$0xff]
      %v1859 = vld [vmem:[%s6 + $0x260] sm:$0xff]
      %v1860 = vld [vmem:[%s6 + $0x268] sm:$0xff]
      %v1861 = vld [vmem:[%s6 + $0x270] sm:$0xff]
      %v1862 = vld [vmem:[%s6 + $0x278] sm:$0xff]
      %v1863 = vld [vmem:[%s6 + $0x280] sm:$0xff]
      %v1864 = vld [vmem:[%s6 + $0x288] sm:$0xff]
      %v1865 = vld [vmem:[%s6 + $0x290] sm:$0xff]
      %v1866 = vld [vmem:[%s6 + $0x298] sm:$0xff]
      %v1867 = vld [vmem:[%s6 + $0x2a0] sm:$0xff]
      %v1868 = vld [vmem:[%s6 + $0x2a8] sm:$0xff]
      %v1869 = vld [vmem:[%s6 + $0x2b0] sm:$0xff]
      %v1870 = vld [vmem:[%s6 + $0x2b8] sm:$0xff]
      %v1871 = vld [vmem:[%s6 + $0x2c0] sm:$0xff]
      %v1872 = vld [vmem:[%s6 + $0x2c8] sm:$0xff]
      %v1873 = vld [vmem:[%s6 + $0x2d0] sm:$0xff]
      %v1874 = vld [vmem:[%s6 + $0x2d8] sm:$0xff]
      %v1875 = vld [vmem:[%s6 + $0x2e0] sm:$0xff]
      %v1876 = vld [vmem:[%s6 + $0x2e8] sm:$0xff]
      %v1877 = vld [vmem:[%s6 + $0x2f0] sm:$0xff]
      %v1878 = vld [vmem:[%s6 + $0x2f8] sm:$0xff]
      %v1879 = vld [vmem:[%s6 + $0x300] sm:$0xff]
      %v1880 = vld [vmem:[%s6 + $0x308] sm:$0xff]
      %v1881 = vld [vmem:[%s6 + $0x310] sm:$0xff]
      %v1882 = vld [vmem:[%s6 + $0x318] sm:$0xff]
      %v1883 = vld [vmem:[%s7] sm:$0x1]
      %vm1884 = vcmask 261120
      %v1886 = vsel %vm1884, %v1782, 0
      %1888 = vmatprep.subr.mxu0 0.0
      %1889 = vmatpush1.msra.mxu0 %v1783
      %1890 = vmatprep.subr.mxu0 0.0
      %1891 = vmatpush1.msra.mxu0 %v1784
      %1892 = vmatprep.subr.mxu0 0.0
      %1893 = vmatpush1.msra.mxu0 %v1785
      %1894 = vmatprep.subr.mxu0 0.0
      %1895 = vmatpush1.msra.mxu0 %v1786
      %1896 = vmatprep.subr.mxu0 0.0
      %1897 = vmatpush1.msra.mxu0 %v1787
      %1898 = vmatprep.subr.mxu0 0.0
      %1899 = vmatpush1.msra.mxu0 %v1788
      %1900 = vmatprep.subr.mxu0 0.0
      %1901 = vmatpush1.msra.mxu0 %v1789
      %1902 = vmatprep.subr.mxu0 0.0
      %1903 = vmatpush1.msra.mxu0 %v1790
      %1904 = vmatprep.subr.mxu0 0.0
      %1905 = vmatpush1.msra.mxu0 %v1791
      %1906 = vmatprep.subr.mxu0 0.0
      %1907 = vmatpush1.msra.mxu0 %v1792
      %1908 = vmatprep.subr.mxu0 0.0
      %1909 = vmatpush1.msra.mxu0 %v1793
      %1910 = vmatprep.subr.mxu0 0.0
      %1911 = vmatpush1.msra.mxu0 %v1794
      %1912 = vmatprep.subr.mxu0 0.0
      %1913 = vmatpush1.msra.mxu0 %v1795
      %1914 = vmatprep.subr.mxu0 0.0
      %1915 = vmatpush1.msra.mxu0 %v1796
      %1916 = vmatprep.subr.mxu0 0.0
      %1917 = vmatpush1.msra.mxu0 %v1797
      %1918 = vmatprep.subr.mxu0 0.0
      %1919 = vmatpush1.msra.mxu0 %v1798
      %1920 = vmatprep.subr.mxu0 0.0
      %1921 = vmatpush1.msra.mxu0 %v1799
      %1922 = vmatprep.subr.mxu0 0.0
      %1923 = vmatpush1.msra.mxu0 %v1800
      %1924 = vmatprep.subr.mxu0 0.0
      %1925 = vmatpush1.msra.mxu0 %v1801
      %1926 = vmatprep.subr.mxu0 0.0
      %1927 = vmatpush1.msra.mxu0 %v1802
      %1928 = vmatprep.subr.mxu0 0.0
      %1929 = vmatpush1.msra.mxu0 %v1803
      %1930 = vmatprep.subr.mxu0 0.0
      %1931 = vmatpush1.msra.mxu0 %v1804
      %1932 = vmatprep.subr.mxu0 0.0
      %1933 = vmatpush1.msra.mxu0 %v1805
      %1934 = vmatprep.subr.mxu0 0.0
      %1935 = vmatpush1.msra.mxu0 %v1806
      %1936 = vmatprep.subr.mxu0 0.0
      %1937 = vmatpush1.msra.mxu0 %v1807
      %1938 = vmatprep.subr.mxu0 0.0
      %1939 = vmatpush1.msra.mxu0 %v1808
      %1940 = vmatprep.subr.mxu0 0.0
      %1941 = vmatpush1.msra.mxu0 %v1809
      %1942 = vmatprep.subr.mxu0 0.0
      %1943 = vmatpush1.msra.mxu0 %v1810
      %1944 = vmatprep.subr.mxu0 0.0
      %1945 = vmatpush1.msra.mxu0 %v1811
      %1946 = vmatprep.subr.mxu0 0.0
      %1947 = vmatpush1.msra.mxu0 %v1812
      %1948 = vmatprep.subr.mxu0 0.0
      %1949 = vmatpush1.msra.mxu0 %v1813
      %1950 = vmatprep.subr.mxu0 0.0
      %1951 = vmatpush1.msra.mxu0 %v1814
      %1952 = vmatprep.mubr.f32.mxu0 %v1777
      %1953 = vmatmul.mubr.f32.gmra.mrb[0].mxu0 %v1776
      %v1954 = vpop.f32.mrb[0].mxu0
      %v1955 = vadd.f32 %v1883, %v1954
      %v1956 = vpop.f32.mrb[0].mxu0
      %1957 = vdwg.mxu0
      %1958 = vmatprep.subr.mxu0 0.0
      %1959 = vmatpush1.msra.mxu0 %v1815
      %1960 = vmatprep.subr.mxu0 0.0
      %1961 = vmatpush1.msra.mxu0 %v1816
      %1962 = vmatprep.subr.mxu0 0.0
      %1963 = vmatpush1.msra.mxu0 %v1817
      %1964 = vmatprep.subr.mxu0 0.0
      %1965 = vmatpush1.msra.mxu0 %v1818
      %1966 = vmatprep.subr.mxu0 0.0
      %1967 = vmatpush1.msra.mxu0 %v1819
      %1968 = vmatprep.subr.mxu0 0.0
      %1969 = vmatpush1.msra.mxu0 %v1820
      %1970 = vmatprep.subr.mxu0 0.0
      %1971 = vmatpush1.msra.mxu0 %v1821
      %1972 = vmatprep.subr.mxu0 0.0
      %1973 = vmatpush1.msra.mxu0 %v1822
      %1974 = vmatprep.subr.mxu0 0.0
      %1975 = vmatpush1.msra.mxu0 %v1823
      %1976 = vmatprep.subr.mxu0 0.0
      %1977 = vmatpush1.msra.mxu0 %v1824
      %1978 = vmatprep.subr.mxu0 0.0
      %1979 = vmatpush1.msra.mxu0 %v1825
      %1980 = vmatprep.subr.mxu0 0.0
      %1981 = vmatpush1.msra.mxu0 %v1826
      %1982 = vmatprep.subr.mxu0 0.0
      %1983 = vmatpush1.msra.mxu0 %v1827
      %1984 = vmatprep.subr.mxu0 0.0
      %1985 = vmatpush1.msra.mxu0 %v1828
      %1986 = vmatprep.subr.mxu0 0.0
      %1987 = vmatpush1.msra.mxu0 %v1829
      %1988 = vmatprep.subr.mxu0 0.0
      %1989 = vmatpush1.msra.mxu0 %v1830
      %1990 = vmatprep.subr.mxu0 0.0
      %1991 = vmatpush1.msra.mxu0 %v1831
      %1992 = vmatprep.subr.mxu0 0.0
      %1993 = vmatpush1.msra.mxu0 %v1832
      %1994 = vmatprep.subr.mxu0 0.0
      %1995 = vmatpush1.msra.mxu0 %v1833
      %1996 = vmatprep.subr.mxu0 0.0
      %1997 = vmatpush1.msra.mxu0 %v1834
      %1998 = vmatprep.subr.mxu0 0.0
      %1999 = vmatpush1.msra.mxu0 %v1835
      %2000 = vmatprep.subr.mxu0 0.0
      %2001 = vmatpush1.msra.mxu0 %v1836
      %2002 = vmatprep.subr.mxu0 0.0
      %2003 = vmatpush1.msra.mxu0 %v1837
      %2004 = vmatprep.subr.mxu0 0.0
      %2005 = vmatpush1.msra.mxu0 %v1838
      %2006 = vmatprep.subr.mxu0 0.0
      %2007 = vmatpush1.msra.mxu0 %v1839
      %2008 = vmatprep.subr.mxu0 0.0
      %2009 = vmatpush1.msra.mxu0 %v1840
      %2010 = vmatprep.subr.mxu0 0.0
      %2011 = vmatpush1.msra.mxu0 %v1841
      %2012 = vmatprep.subr.mxu0 0.0
      %2013 = vmatpush1.msra.mxu0 %v1842
      %2014 = vmatprep.subr.mxu0 0.0
      %2015 = vmatpush1.msra.mxu0 %v1843
      %2016 = vmatprep.subr.mxu0 0.0
      %2017 = vmatpush1.msra.mxu0 %v1844
      %2018 = vmatprep.subr.mxu0 0.0
      %2019 = vmatpush1.msra.mxu0 %v1845
      %2020 = vmatprep.subr.mxu0 0.0
      %2021 = vmatpush1.msra.mxu0 %v1846
      %2022 = vmatprep.mubr.f32.mxu0 %v1779
      %2023 = vmatmul.mubr.f32.gmra.mrb[0].mxu0 %v1778
      %v2024 = vpop.f32.mrb[0].mxu0
      %v2025 = vadd.f32 %v1955, %v2024
      %v2026 = vpop.f32.mrb[0].mxu0
      %2027 = vdwg.mxu0
      %2028 = vmatprep.subr.mxu0 0.0
      %2029 = vmatpush1.msra.mxu0 %v1847
      %2030 = vmatprep.subr.mxu0 0.0
      %2031 = vmatpush1.msra.mxu0 %v1848
      %2032 = vmatprep.subr.mxu0 0.0
      %2033 = vmatpush1.msra.mxu0 %v1849
      %2034 = vmatprep.subr.mxu0 0.0
      %2035 = vmatpush1.msra.mxu0 %v1850
      %2036 = vmatprep.subr.mxu0 0.0
      %2037 = vmatpush1.msra.mxu0 %v1851
      %2038 = vmatprep.subr.mxu0 0.0
      %2039 = vmatpush1.msra.mxu0 %v1852
      %2040 = vmatprep.subr.mxu0 0.0
      %2041 = vmatpush1.msra.mxu0 %v1853
      %2042 = vmatprep.subr.mxu0 0.0
      %2043 = vmatpush1.msra.mxu0 %v1854
      %2044 = vmatprep.subr.mxu0 0.0
      %2045 = vmatpush1.msra.mxu0 %v1855
      %2046 = vmatprep.subr.mxu0 0.0
      %2047 = vmatpush1.msra.mxu0 %v1856
      %2048 = vmatprep.subr.mxu0 0.0
      %2049 = vmatpush1.msra.mxu0 %v1857
      %2050 = vmatprep.subr.mxu0 0.0
      %2051 = vmatpush1.msra.mxu0 %v1858
      %2052 = vmatprep.subr.mxu0 0.0
      %2053 = vmatpush1.msra.mxu0 %v1859
      %2054 = vmatprep.subr.mxu0 0.0
      %2055 = vmatpush1.msra.mxu0 %v1860
      %2056 = vmatprep.subr.mxu0 0.0
      %2057 = vmatpush1.msra.mxu0 %v1861
      %2058 = vmatprep.subr.mxu0 0.0
      %2059 = vmatpush1.msra.mxu0 %v1862
      %2060 = vmatprep.subr.mxu0 0.0
      %2061 = vmatpush1.msra.mxu0 %v1863
      %2062 = vmatprep.subr.mxu0 0.0
      %2063 = vmatpush1.msra.mxu0 %v1864
      %2064 = vmatprep.subr.mxu0 0.0
      %2065 = vmatpush1.msra.mxu0 %v1865
      %2066 = vmatprep.subr.mxu0 0.0
      %2067 = vmatpush1.msra.mxu0 %v1866
      %2068 = vmatprep.subr.mxu0 0.0
      %2069 = vmatpush1.msra.mxu0 %v1867
      %2070 = vmatprep.subr.mxu0 0.0
      %2071 = vmatpush1.msra.mxu0 %v1868
      %2072 = vmatprep.subr.mxu0 0.0
      %2073 = vmatpush1.msra.mxu0 %v1869
      %2074 = vmatprep.subr.mxu0 0.0
      %2075 = vmatpush1.msra.mxu0 %v1870
      %2076 = vmatprep.subr.mxu0 0.0
      %2077 = vmatpush1.msra.mxu0 %v1871
      %2078 = vmatprep.subr.mxu0 0.0
      %2079 = vmatpush1.msra.mxu0 %v1872
      %2080 = vmatprep.subr.mxu0 0.0
      %2081 = vmatpush1.msra.mxu0 %v1873
      %2082 = vmatprep.subr.mxu0 0.0
      %2083 = vmatpush1.msra.mxu0 %v1874
      %2084 = vmatprep.subr.mxu0 0.0
      %2085 = vmatpush1.msra.mxu0 %v1875
      %2086 = vmatprep.subr.mxu0 0.0
      %2087 = vmatpush1.msra.mxu0 %v1876
      %2088 = vmatprep.subr.mxu0 0.0
      %2089 = vmatpush1.msra.mxu0 %v1877
      %2090 = vmatprep.subr.mxu0 0.0
      %2091 = vmatpush1.msra.mxu0 %v1878
      %2092 = vmatprep.mubr.f32.mxu0 %v1781
      %2093 = vmatmul.mubr.f32.gmra.mrb[0].mxu0 %v1780
      %v2094 = vpop.f32.mrb[0].mxu0
      %v2095 = vadd.f32 %v2025, %v2094
      %v2096 = vpop.f32.mrb[0].mxu0
      %2097 = vdwg.mxu0
      %2098 = vmatprep.subr.mxu0 0.0
      %2099 = vmatpush1.msra.mxu0 %v1879
      %2100 = vmatprep.subr.mxu0 0.0
      %2101 = vmatpush1.msra.mxu0 %v1880
      %2102 = vmatprep.subr.mxu0 0.0
      %2103 = vmatpush1.msra.mxu0 %v1881
      %2104 = vmatprep.subr.mxu0 0.0
      %2105 = vmatpush1.msra.mxu0 %v1882
      %2106 = vmatprep.subr.mxu0 0.0
      %2107 = vmatpush1.msra.mxu0 0.0
      %2108 = vmatprep.subr.mxu0 0.0
      %2109 = vmatpush1.msra.mxu0 0.0
      %2110 = vmatprep.subr.mxu0 0.0
      %2111 = vmatpush1.msra.mxu0 0.0
      %2112 = vmatprep.subr.mxu0 0.0
      %2113 = vmatpush1.msra.mxu0 0.0
      %2114 = vmatprep.subr.mxu0 0.0
      %2115 = vmatpush1.msra.mxu0 0.0
      %2116 = vmatprep.subr.mxu0 0.0
      %2117 = vmatpush1.msra.mxu0 0.0
      %2118 = vmatprep.subr.mxu0 0.0
      %2119 = vmatpush1.msra.mxu0 0.0
      %2120 = vmatprep.subr.mxu0 0.0
      %2121 = vmatpush1.msra.mxu0 0.0
      %2122 = vmatprep.subr.mxu0 0.0
      %2123 = vmatpush1.msra.mxu0 0.0
      %2124 = vmatprep.subr.mxu0 0.0
      %2125 = vmatpush1.msra.mxu0 0.0
      %2126 = vmatprep.subr.mxu0 0.0
      %2127 = vmatpush1.msra.mxu0 0.0
      %2128 = vmatprep.subr.mxu0 0.0
      %2129 = vmatpush1.msra.mxu0 0.0
      %2130 = vmatprep.subr.mxu0 0.0
      %2131 = vmatpush1.msra.mxu0 0.0
      %2132 = vmatprep.subr.mxu0 0.0
      %2133 = vmatpush1.msra.mxu0 0.0
      %2134 = vmatprep.subr.mxu0 0.0
      %2135 = vmatpush1.msra.mxu0 0.0
      %2136 = vmatprep.subr.mxu0 0.0
      %2137 = vmatpush1.msra.mxu0 0.0
      %2138 = vmatprep.subr.mxu0 0.0
      %2139 = vmatpush1.msra.mxu0 0.0
      %2140 = vmatprep.subr.mxu0 0.0
      %2141 = vmatpush1.msra.mxu0 0.0
      %2142 = vmatprep.subr.mxu0 0.0
      %2143 = vmatpush1.msra.mxu0 0.0
      %2144 = vmatprep.subr.mxu0 0.0
      %2145 = vmatpush1.msra.mxu0 0.0
      %2146 = vmatprep.subr.mxu0 0.0
      %2147 = vmatpush1.msra.mxu0 0.0
      %2148 = vmatprep.subr.mxu0 0.0
      %2149 = vmatpush1.msra.mxu0 0.0
      %2150 = vmatprep.subr.mxu0 0.0
      %2151 = vmatpush1.msra.mxu0 0.0
      %2152 = vmatprep.subr.mxu0 0.0
      %2153 = vmatpush1.msra.mxu0 0.0
      %2154 = vmatprep.subr.mxu0 0.0
      %2155 = vmatpush1.msra.mxu0 0.0
      %2156 = vmatprep.subr.mxu0 0.0
      %2157 = vmatpush1.msra.mxu0 0.0
      %2158 = vmatprep.subr.mxu0 0.0
      %2159 = vmatpush1.msra.mxu0 0.0
      %2160 = vmatprep.subr.mxu0 0.0
      %2161 = vmatpush1.msra.mxu0 0.0
      %2162 = vmatprep.mubr.f32.mxu0 0.0
      %2163 = vmatmul.mubr.f32.gmra.mrb[0].mxu0 %v1886
      %v2164 = vpop.f32.mrb[0].mxu0
      %v2165 = vadd.f32 %v2095, %v2164
      %v2166 = vpop.f32.mrb[0].mxu0
      %2167 = vdwg.mxu0
      %v2168 = vmax.f32 %v2165, 0.0
      %v2169 = vld [vmem:[%s8] sm:$0xff]
      %v2170 = vld [vmem:[%s8 + $0x8] sm:$0xff]
      %v2171 = vld [vmem:[%s8 + $0x10] sm:$0xff]
      %v2172 = vld [vmem:[%s8 + $0x18] sm:$0xff]
      %v2173 = vld [vmem:[%s8 + $0x20] sm:$0xff]
      %v2174 = vld [vmem:[%s8 + $0x28] sm:$0xff]
      %v2175 = vld [vmem:[%s8 + $0x30] sm:$0xff]
      %v2176 = vld [vmem:[%s8 + $0x38] sm:$0xff]
      %v2177 = vld [vmem:[%s8 + $0x40] sm:$0xff]
      %v2178 = vld [vmem:[%s8 + $0x48] sm:$0xff]
      %v2179 = vld [vmem:[%s8 + $0x50] sm:$0xff]
      %v2180 = vld [vmem:[%s8 + $0x58] sm:$0xff]
      %v2181 = vld [vmem:[%s8 + $0x60] sm:$0xff]
      %v2182 = vld [vmem:[%s8 + $0x68] sm:$0xff]
      %v2183 = vld [vmem:[%s8 + $0x70] sm:$0xff]
      %v2184 = vld [vmem:[%s8 + $0x78] sm:$0xff]
      %v2185 = vld [vmem:[%s9] sm:$0x1]
      %2186 = vmatprep.subr.mxu0 0.0
      %2187 = vmatpush1.msra.mxu0 %v2169
      %2188 = vmatprep.subr.mxu0 0.0
      %2189 = vmatpush1.msra.mxu0 %v2170
      %2190 = vmatprep.subr.mxu0 0.0
      %2191 = vmatpush1.msra.mxu0 %v2171
      %2192 = vmatprep.subr.mxu0 0.0
      %2193 = vmatpush1.msra.mxu0 %v2172
      %2194 = vmatprep.subr.mxu0 0.0
      %2195 = vmatpush1.msra.mxu0 %v2173
      %2196 = vmatprep.subr.mxu0 0.0
      %2197 = vmatpush1.msra.mxu0 %v2174
      %2198 = vmatprep.subr.mxu0 0.0
      %2199 = vmatpush1.msra.mxu0 %v2175
      %2200 = vmatprep.subr.mxu0 0.0
      %2201 = vmatpush1.msra.mxu0 %v2176
      %2202 = vmatprep.subr.mxu0 0.0
      %2203 = vmatpush1.msra.mxu0 %v2177
      %2204 = vmatprep.subr.mxu0 0.0
      %2205 = vmatpush1.msra.mxu0 %v2178
      %2206 = vmatprep.subr.mxu0 0.0
      %2207 = vmatpush1.msra.mxu0 %v2179
      %2208 = vmatprep.subr.mxu0 0.0
      %2209 = vmatpush1.msra.mxu0 %v2180
      %2210 = vmatprep.subr.mxu0 0.0
      %2211 = vmatpush1.msra.mxu0 %v2181
      %2212 = vmatprep.subr.mxu0 0.0
      %2213 = vmatpush1.msra.mxu0 %v2182
      %2214 = vmatprep.subr.mxu0 0.0
      %2215 = vmatpush1.msra.mxu0 %v2183
      %2216 = vmatprep.subr.mxu0 0.0
      %2217 = vmatpush1.msra.mxu0 %v2184
      %2218 = vmatprep.subr.mxu0 0.0
      %2219 = vmatpush1.msra.mxu0 0.0
      %2220 = vmatprep.subr.mxu0 0.0
      %2221 = vmatpush1.msra.mxu0 0.0
      %2222 = vmatprep.subr.mxu0 0.0
      %2223 = vmatpush1.msra.mxu0 0.0
      %2224 = vmatprep.subr.mxu0 0.0
      %2225 = vmatpush1.msra.mxu0 0.0
      %2226 = vmatprep.subr.mxu0 0.0
      %2227 = vmatpush1.msra.mxu0 0.0
      %2228 = vmatprep.subr.mxu0 0.0
      %2229 = vmatpush1.msra.mxu0 0.0
      %2230 = vmatprep.subr.mxu0 0.0
      %2231 = vmatpush1.msra.mxu0 0.0
      %2232 = vmatprep.subr.mxu0 0.0
      %2233 = vmatpush1.msra.mxu0 0.0
      %2234 = vmatprep.subr.mxu0 0.0
      %2235 = vmatpush1.msra.mxu0 0.0
      %2236 = vmatprep.subr.mxu0 0.0
      %2237 = vmatpush1.msra.mxu0 0.0
      %2238 = vmatprep.subr.mxu0 0.0
      %2239 = vmatpush1.msra.mxu0 0.0
      %2240 = vmatprep.subr.mxu0 0.0
      %2241 = vmatpush1.msra.mxu0 0.0
      %2242 = vmatprep.subr.mxu0 0.0
      %2243 = vmatpush1.msra.mxu0 0.0
      %2244 = vmatprep.subr.mxu0 0.0
      %2245 = vmatpush1.msra.mxu0 0.0
      %2246 = vmatprep.subr.mxu0 0.0
      %2247 = vmatpush1.msra.mxu0 0.0
      %2248 = vmatprep.subr.mxu0 0.0
      %2249 = vmatpush1.msra.mxu0 0.0
      %2250 = vmatprep.mubr.f32.mxu0 0.0
      %2251 = vmatmul.mubr.f32.gmra.mrb[0].mxu0 %v2168
      %v2252 = vpop.f32.mrb[0].mxu0
      %v2253 = vadd.f32 %v2185, %v2252
      %v2254 = vpop.f32.mrb[0].mxu0
      %2255 = vdwg.mxu0
      %vm2256 = vcmask 188416
      %2257 = vst.msk [vmem:[%s615] sm:$0x1] %vm2256, %v2253
      %v2258 = vmul.f32 %v2253, 0.5
      %v2259 = vmul.f32 %v2258, 1.442695
      %v2260 = vpow.pop %v2259
      %v2263 = vunpack.c.l.s4 1966171168
      %v2264 = vunpack.c.0.s8 %v2263
      %v2265 = vlaneseq
      %v2266 = vshrl.u32 %v2265, 7
      %v2267 = vsub.s32 %v2264, %v2266
      %v2268 = vrot.slane %v2260, %v2267
      %v2270 = vunpack.c.l.s4 1966171168
      %v2271 = vunpack.c.0.s8 %v2270
      %v2272 = vlaneseq
      %v2273 = vshrl.u32 %v2272, 7
      %v2274 = vsub.s32 %v2271, %v2273
      %v2275 = vrot.slane %v2268, %v2274
      %2276 = vrot.lane.b32.xlu0 %v2275, 116
      %v2277 = vpop.permute.xlu0 %2276
      %v2279 = vmul.f32 %v617, %v2277
      %v2280 = vadd.f32 %v2253, %v2279
      %v2281 = vld [vmem:[%s10] sm:$0xff]
      %v2282 = vld [vmem:[%s10 + $0x8] sm:$0xf]
      %v2283 = vld [vmem:[%s11] sm:$0x1]
      %vm2284 = vcmask 97280
      %v2286 = vsel %vm2284, %v2280, 0
      %vm2288 = vcmask 1043456
      %v2290 = vsel %vm2288, %v2282, 0
      %2292 = vmatprep.subr.mxu0 0.0
      %2293 = vmatpush1.msra.mxu0 %v2281
      %2294 = vmatprep.subr.mxu0 0.0
      %2295 = vmatpush1.msra.mxu0 %v2290
      %2296 = vmatprep.subr.mxu0 0.0
      %2297 = vmatpush1.msra.mxu0 0.0
      %2298 = vmatprep.subr.mxu0 0.0
      %2299 = vmatpush1.msra.mxu0 0.0
      %2300 = vmatprep.subr.mxu0 0.0
      %2301 = vmatpush1.msra.mxu0 0.0
      %2302 = vmatprep.subr.mxu0 0.0
      %2303 = vmatpush1.msra.mxu0 0.0
      %2304 = vmatprep.subr.mxu0 0.0
      %2305 = vmatpush1.msra.mxu0 0.0
      %2306 = vmatprep.subr.mxu0 0.0
      %2307 = vmatpush1.msra.mxu0 0.0
      %2308 = vmatprep.subr.mxu0 0.0
      %2309 = vmatpush1.msra.mxu0 0.0
      %2310 = vmatprep.subr.mxu0 0.0
      %2311 = vmatpush1.msra.mxu0 0.0
      %2312 = vmatprep.subr.mxu0 0.0
      %2313 = vmatpush1.msra.mxu0 0.0
      %2314 = vmatprep.subr.mxu0 0.0
      %2315 = vmatpush1.msra.mxu0 0.0
      %2316 = vmatprep.subr.mxu0 0.0
      %2317 = vmatpush1.msra.mxu0 0.0
      %2318 = vmatprep.subr.mxu0 0.0
      %2319 = vmatpush1.msra.mxu0 0.0
      %2320 = vmatprep.subr.mxu0 0.0
      %2321 = vmatpush1.msra.mxu0 0.0
      %2322 = vmatprep.subr.mxu0 0.0
      %2323 = vmatpush1.msra.mxu0 0.0
      %2324 = vmatprep.subr.mxu0 0.0
      %2325 = vmatpush1.msra.mxu0 0.0
      %2326 = vmatprep.subr.mxu0 0.0
      %2327 = vmatpush1.msra.mxu0 0.0
      %2328 = vmatprep.subr.mxu0 0.0
      %2329 = vmatpush1.msra.mxu0 0.0
      %2330 = vmatprep.subr.mxu0 0.0
      %2331 = vmatpush1.msra.mxu0 0.0
      %2332 = vmatprep.subr.mxu0 0.0
      %2333 = vmatpush1.msra.mxu0 0.0
      %2334 = vmatprep.subr.mxu0 0.0
      %2335 = vmatpush1.msra.mxu0 0.0
      %2336 = vmatprep.subr.mxu0 0.0
      %2337 = vmatpush1.msra.mxu0 0.0
      %2338 = vmatprep.subr.mxu0 0.0
      %2339 = vmatpush1.msra.mxu0 0.0
      %2340 = vmatprep.subr.mxu0 0.0
      %2341 = vmatpush1.msra.mxu0 0.0
      %2342 = vmatprep.subr.mxu0 0.0
      %2343 = vmatpush1.msra.mxu0 0.0
      %2344 = vmatprep.subr.mxu0 0.0
      %2345 = vmatpush1.msra.mxu0 0.0
      %2346 = vmatprep.subr.mxu0 0.0
      %2347 = vmatpush1.msra.mxu0 0.0
      %2348 = vmatprep.subr.mxu0 0.0
      %2349 = vmatpush1.msra.mxu0 0.0
      %2350 = vmatprep.subr.mxu0 0.0
      %2351 = vmatpush1.msra.mxu0 0.0
      %2352 = vmatprep.subr.mxu0 0.0
      %2353 = vmatpush1.msra.mxu0 0.0
      %2354 = vmatprep.subr.mxu0 0.0
      %2355 = vmatpush1.msra.mxu0 0.0
      %2356 = vmatprep.mubr.f32.mxu0 0.0
      %2357 = vmatmul.mubr.f32.gmra.mrb[0].mxu0 %v2286
      %v2358 = vpop.f32.mrb[0].mxu0
      %v2359 = vadd.f32 %v2283, %v2358
      %v2360 = vpop.f32.mrb[0].mxu0
      %2361 = vdwg.mxu0
      %v2362 = vmax.f32 %v2359, 0.0
      %v2363 = vld [vmem:[%s12] sm:$0xff]
      %v2364 = vld [vmem:[%s12 + $0x8] sm:$0xff]
      %v2365 = vld [vmem:[%s12 + $0x10] sm:$0xff]
      %v2366 = vld [vmem:[%s12 + $0x18] sm:$0xff]
      %v2367 = vld [vmem:[%s12 + $0x20] sm:$0xff]
      %v2368 = vld [vmem:[%s12 + $0x28] sm:$0xff]
      %v2369 = vld [vmem:[%s12 + $0x30] sm:$0xff]
      %v2370 = vld [vmem:[%s12 + $0x38] sm:$0xff]
      %v2371 = vld [vmem:[%s12 + $0x40] sm:$0xff]
      %v2372 = vld [vmem:[%s12 + $0x48] sm:$0xff]
      %v2373 = vld [vmem:[%s12 + $0x50] sm:$0xff]
      %v2374 = vld [vmem:[%s12 + $0x58] sm:$0xff]
      %v2375 = vld [vmem:[%s12 + $0x60] sm:$0xff]
      %v2376 = vld [vmem:[%s12 + $0x68] sm:$0xff]
      %v2377 = vld [vmem:[%s12 + $0x70] sm:$0xff]
      %v2378 = vld [vmem:[%s12 + $0x78] sm:$0xff]
      %v2379 = vld [vmem:[%s12 + $0x80] sm:$0xff]
      %v2380 = vld [vmem:[%s12 + $0x88] sm:$0xff]
      %v2381 = vld [vmem:[%s12 + $0x90] sm:$0xff]
      %v2382 = vld [vmem:[%s12 + $0x98] sm:$0xff]
      %v2383 = vld [vmem:[%s12 + $0xa0] sm:$0xff]
      %v2384 = vld [vmem:[%s12 + $0xa8] sm:$0xff]
      %v2385 = vld [vmem:[%s12 + $0xb0] sm:$0xff]
      %v2386 = vld [vmem:[%s12 + $0xb8] sm:$0xff]
      %v2387 = vld [vmem:[%s12 + $0xc0] sm:$0xff]
      %v2388 = vld [vmem:[%s12 + $0xc8] sm:$0xff]
      %v2389 = vld [vmem:[%s12 + $0xd0] sm:$0xff]
      %v2390 = vld [vmem:[%s12 + $0xd8] sm:$0xff]
      %v2391 = vld [vmem:[%s12 + $0xe0] sm:$0xff]
      %v2392 = vld [vmem:[%s12 + $0xe8] sm:$0xff]
      %v2393 = vld [vmem:[%s12 + $0xf0] sm:$0xff]
      %v2394 = vld [vmem:[%s12 + $0xf8] sm:$0xff]
      %v2395 = vld [vmem:[%s12 + $0x100] sm:$0xff]
      %v2396 = vld [vmem:[%s12 + $0x108] sm:$0xff]
      %v2397 = vld [vmem:[%s12 + $0x110] sm:$0xff]
      %v2398 = vld [vmem:[%s12 + $0x118] sm:$0xff]
      %v2399 = vld [vmem:[%s12 + $0x120] sm:$0xff]
      %v2400 = vld [vmem:[%s12 + $0x128] sm:$0xff]
      %v2401 = vld [vmem:[%s12 + $0x130] sm:$0xff]
      %v2402 = vld [vmem:[%s12 + $0x138] sm:$0xff]
      %v2403 = vld [vmem:[%s12 + $0x140] sm:$0xff]
      %v2404 = vld [vmem:[%s12 + $0x148] sm:$0xff]
      %v2405 = vld [vmem:[%s12 + $0x150] sm:$0xff]
      %v2406 = vld [vmem:[%s12 + $0x158] sm:$0xff]
      %v2407 = vld [vmem:[%s12 + $0x160] sm:$0xff]
      %v2408 = vld [vmem:[%s12 + $0x168] sm:$0xff]
      %v2409 = vld [vmem:[%s12 + $0x170] sm:$0xff]
      %v2410 = vld [vmem:[%s12 + $0x178] sm:$0xff]
      %v2411 = vld [vmem:[%s12 + $0x180] sm:$0xff]
      %v2412 = vld [vmem:[%s12 + $0x188] sm:$0xff]
      %v2413 = vld [vmem:[%s12 + $0x190] sm:$0xff]
      %v2414 = vld [vmem:[%s12 + $0x198] sm:$0xff]
      %v2415 = vld [vmem:[%s12 + $0x1a0] sm:$0xff]
      %v2416 = vld [vmem:[%s12 + $0x1a8] sm:$0xff]
      %v2417 = vld [vmem:[%s12 + $0x1b0] sm:$0xff]
      %v2418 = vld [vmem:[%s12 + $0x1b8] sm:$0xff]
      %v2419 = vld [vmem:[%s12 + $0x1c0] sm:$0xff]
      %v2420 = vld [vmem:[%s12 + $0x1c8] sm:$0xff]
      %v2421 = vld [vmem:[%s12 + $0x1d0] sm:$0xff]
      %v2422 = vld [vmem:[%s12 + $0x1d8] sm:$0xff]
      %v2423 = vld [vmem:[%s12 + $0x1e0] sm:$0xff]
      %v2424 = vld [vmem:[%s12 + $0x1e8] sm:$0xff]
      %v2425 = vld [vmem:[%s12 + $0x1f0] sm:$0xff]
      %v2426 = vld [vmem:[%s12 + $0x1f8] sm:$0xff]
      %v2427 = vld [vmem:[%s12 + $0x200] sm:$0xff]
      %v2428 = vld [vmem:[%s12 + $0x208] sm:$0xff]
      %v2429 = vld [vmem:[%s12 + $0x210] sm:$0xff]
      %v2430 = vld [vmem:[%s12 + $0x218] sm:$0xff]
      %v2431 = vld [vmem:[%s12 + $0x220] sm:$0xff]
      %v2432 = vld [vmem:[%s12 + $0x228] sm:$0xff]
      %v2433 = vld [vmem:[%s12 + $0x230] sm:$0xff]
      %v2434 = vld [vmem:[%s12 + $0x238] sm:$0xff]
      %v2435 = vld [vmem:[%s12 + $0x240] sm:$0xff]
      %v2436 = vld [vmem:[%s12 + $0x248] sm:$0xff]
      %v2437 = vld [vmem:[%s12 + $0x250] sm:$0xff]
      %v2438 = vld [vmem:[%s12 + $0x258] sm:$0xff]
      %v2439 = vld [vmem:[%s12 + $0x260] sm:$0xff]
      %v2440 = vld [vmem:[%s12 + $0x268] sm:$0xff]
      %v2441 = vld [vmem:[%s12 + $0x270] sm:$0xff]
      %v2442 = vld [vmem:[%s12 + $0x278] sm:$0xff]
      %v2443 = vld [vmem:[%s12 + $0x280] sm:$0xff]
      %v2444 = vld [vmem:[%s12 + $0x288] sm:$0xff]
      %v2445 = vld [vmem:[%s12 + $0x290] sm:$0xff]
      %v2446 = vld [vmem:[%s12 + $0x298] sm:$0xff]
      %v2447 = vld [vmem:[%s12 + $0x2a0] sm:$0xff]
      %v2448 = vld [vmem:[%s12 + $0x2a8] sm:$0xff]
      %v2449 = vld [vmem:[%s12 + $0x2b0] sm:$0xff]
      %v2450 = vld [vmem:[%s12 + $0x2b8] sm:$0xff]
      %v2451 = vld [vmem:[%s12 + $0x2c0] sm:$0xff]
      %v2452 = vld [vmem:[%s12 + $0x2c8] sm:$0xff]
      %v2453 = vld [vmem:[%s12 + $0x2d0] sm:$0xff]
      %v2454 = vld [vmem:[%s12 + $0x2d8] sm:$0xff]
      %v2455 = vld [vmem:[%s12 + $0x2e0] sm:$0xff]
      %v2456 = vld [vmem:[%s12 + $0x2e8] sm:$0xff]
      %v2457 = vld [vmem:[%s12 + $0x2f0] sm:$0xff]
      %v2458 = vld [vmem:[%s12 + $0x2f8] sm:$0xff]
      %v2459 = vld [vmem:[%s12 + $0x300] sm:$0xff]
      %v2460 = vld [vmem:[%s12 + $0x308] sm:$0xff]
      %v2461 = vld [vmem:[%s12 + $0x310] sm:$0xff]
      %v2462 = vld [vmem:[%s12 + $0x318] sm:$0xff]
      %v2463 = vld [vmem:[%s12 + $0x320] sm:$0xff]
      %v2464 = vld [vmem:[%s12 + $0x328] sm:$0xff]
      %v2465 = vld [vmem:[%s12 + $0x330] sm:$0xff]
      %v2466 = vld [vmem:[%s12 + $0x338] sm:$0xff]
      %v2467 = vld [vmem:[%s12 + $0x340] sm:$0xff]
      %v2468 = vld [vmem:[%s12 + $0x348] sm:$0xff]
      %v2469 = vld [vmem:[%s12 + $0x350] sm:$0xff]
      %v2470 = vld [vmem:[%s12 + $0x358] sm:$0xff]
      %v2471 = vld [vmem:[%s12 + $0x360] sm:$0xff]
      %v2472 = vld [vmem:[%s12 + $0x368] sm:$0xff]
      %v2473 = vld [vmem:[%s12 + $0x370] sm:$0xff]
      %v2474 = vld [vmem:[%s12 + $0x378] sm:$0xff]
      %v2475 = vld [vmem:[%s13] sm:$0x7f]
      %v2477 = vlaneseq
      %v2478 = vshrl.u32 %v2477, 7
      %v2479 = vsub.s32 0, %v2478
      %v2480 = vrot.slane %v2475, %v2479
      %v2481 = vlaneseq
      %v2482 = vshrl.u32 %v2481, 7
      %v2483 = vsub.s32 1, %v2482
      %v2484 = vrot.slane %v2475, %v2483
      %v2485 = vlaneseq
      %v2486 = vshrl.u32 %v2485, 7
      %v2487 = vsub.s32 2, %v2486
      %v2488 = vrot.slane %v2475, %v2487
      %v2489 = vlaneseq
      %v2490 = vshrl.u32 %v2489, 7
      %v2491 = vsub.s32 3, %v2490
      %v2492 = vrot.slane %v2475, %v2491
      %v2493 = vlaneseq
      %v2494 = vshrl.u32 %v2493, 7
      %v2495 = vsub.s32 4, %v2494
      %v2496 = vrot.slane %v2475, %v2495
      %v2497 = vlaneseq
      %v2498 = vshrl.u32 %v2497, 7
      %v2499 = vsub.s32 5, %v2498
      %v2500 = vrot.slane %v2475, %v2499
      %v2501 = vlaneseq
      %v2502 = vshrl.u32 %v2501, 7
      %v2503 = vsub.s32 6, %v2502
      %v2504 = vrot.slane %v2475, %v2503
      %2512 = vmatprep.subr.mxu0 %v2364
      %2513 = vmatpush1.msra.mxu0 %v2363
      %2514 = vmatprep.subr.mxu0 %v2371
      %2515 = vmatpush1.msra.mxu0 %v2370
      %2516 = vmatprep.subr.mxu0 %v2378
      %2517 = vmatpush1.msra.mxu0 %v2377
      %2518 = vmatprep.subr.mxu0 %v2385
      %2519 = vmatpush1.msra.mxu0 %v2384
      %2520 = vmatprep.subr.mxu0 %v2392
      %2521 = vmatpush1.msra.mxu0 %v2391
      %2522 = vmatprep.subr.mxu0 %v2399
      %2523 = vmatpush1.msra.mxu0 %v2398
      %2524 = vmatprep.subr.mxu0 %v2406
      %2525 = vmatpush1.msra.mxu0 %v2405
      %2526 = vmatprep.subr.mxu0 %v2413
      %2527 = vmatpush1.msra.mxu0 %v2412
      %2528 = vmatprep.subr.mxu0 %v2420
      %2529 = vmatpush1.msra.mxu0 %v2419
      %2530 = vmatprep.subr.mxu0 %v2427
      %2531 = vmatpush1.msra.mxu0 %v2426
      %2532 = vmatprep.subr.mxu0 %v2434
      %2533 = vmatpush1.msra.mxu0 %v2433
      %2534 = vmatprep.subr.mxu0 %v2441
      %2535 = vmatpush1.msra.mxu0 %v2440
      %2536 = vmatprep.subr.mxu0 %v2448
      %2537 = vmatpush1.msra.mxu0 %v2447
      %2538 = vmatprep.subr.mxu0 %v2455
      %2539 = vmatpush1.msra.mxu0 %v2454
      %2540 = vmatprep.subr.mxu0 %v2462
      %2541 = vmatpush1.msra.mxu0 %v2461
      %2542 = vmatprep.subr.mxu0 %v2469
      %2543 = vmatpush1.msra.mxu0 %v2468
      %2544 = vmatprep.subr.mxu0 0.0
      %2545 = vmatpush1.msra.mxu0 0.0
      %2546 = vmatprep.subr.mxu0 0.0
      %2547 = vmatpush1.msra.mxu0 0.0
      %2548 = vmatprep.subr.mxu0 0.0
      %2549 = vmatpush1.msra.mxu0 0.0
      %2550 = vmatprep.subr.mxu0 0.0
      %2551 = vmatpush1.msra.mxu0 0.0
      %2552 = vmatprep.subr.mxu0 0.0
      %2553 = vmatpush1.msra.mxu0 0.0
      %2554 = vmatprep.subr.mxu0 0.0
      %2555 = vmatpush1.msra.mxu0 0.0
      %2556 = vmatprep.subr.mxu0 0.0
      %2557 = vmatpush1.msra.mxu0 0.0
      %2558 = vmatprep.subr.mxu0 0.0
      %2559 = vmatpush1.msra.mxu0 0.0
      %2560 = vmatprep.subr.mxu0 0.0
      %2561 = vmatpush1.msra.mxu0 0.0
      %2562 = vmatprep.subr.mxu0 0.0
      %2563 = vmatpush1.msra.mxu0 0.0
      %2564 = vmatprep.subr.mxu0 0.0
      %2565 = vmatpush1.msra.mxu0 0.0
      %2566 = vmatprep.subr.mxu0 0.0
      %2567 = vmatpush1.msra.mxu0 0.0
      %2568 = vmatprep.subr.mxu0 0.0
      %2569 = vmatpush1.msra.mxu0 0.0
      %2570 = vmatprep.subr.mxu0 0.0
      %2571 = vmatpush1.msra.mxu0 0.0
      %2572 = vmatprep.subr.mxu0 0.0
      %2573 = vmatpush1.msra.mxu0 0.0
      %2574 = vmatprep.subr.mxu0 0.0
      %2575 = vmatpush1.msra.mxu0 0.0
      %2576 = vmatprep.mubr.f32.mxu0 0.0
      %2577 = vmatmul.mubr.f32.gmra.mrb[0].mxu0 %v2362
      %v2578 = vpop.f32.mrb[0].mxu0
      %v2579 = vadd.f32 %v2480, %v2578
      %v2580 = vpop.f32.mrb[0].mxu0
      %v2581 = vadd.f32 %v2484, %v2580
      %2582 = vdwg.mxu0
      %2583 = vmatprep.subr.mxu0 %v2366
      %2584 = vmatpush1.msra.mxu0 %v2365
      %2585 = vmatprep.subr.mxu0 %v2373
      %2586 = vmatpush1.msra.mxu0 %v2372
      %2587 = vmatprep.subr.mxu0 %v2380
      %2588 = vmatpush1.msra.mxu0 %v2379
      %2589 = vmatprep.subr.mxu0 %v2387
      %2590 = vmatpush1.msra.mxu0 %v2386
      %2591 = vmatprep.subr.mxu0 %v2394
      %2592 = vmatpush1.msra.mxu0 %v2393
      %2593 = vmatprep.subr.mxu0 %v2401
      %2594 = vmatpush1.msra.mxu0 %v2400
      %2595 = vmatprep.subr.mxu0 %v2408
      %2596 = vmatpush1.msra.mxu0 %v2407
      %2597 = vmatprep.subr.mxu0 %v2415
      %2598 = vmatpush1.msra.mxu0 %v2414
      %2599 = vmatprep.subr.mxu0 %v2422
      %2600 = vmatpush1.msra.mxu0 %v2421
      %2601 = vmatprep.subr.mxu0 %v2429
      %2602 = vmatpush1.msra.mxu0 %v2428
      %2603 = vmatprep.subr.mxu0 %v2436
      %2604 = vmatpush1.msra.mxu0 %v2435
      %2605 = vmatprep.subr.mxu0 %v2443
      %2606 = vmatpush1.msra.mxu0 %v2442
      %2607 = vmatprep.subr.mxu0 %v2450
      %2608 = vmatpush1.msra.mxu0 %v2449
      %2609 = vmatprep.subr.mxu0 %v2457
      %2610 = vmatpush1.msra.mxu0 %v2456
      %2611 = vmatprep.subr.mxu0 %v2464
      %2612 = vmatpush1.msra.mxu0 %v2463
      %2613 = vmatprep.subr.mxu0 %v2471
      %2614 = vmatpush1.msra.mxu0 %v2470
      %2615 = vmatprep.subr.mxu0 0.0
      %2616 = vmatpush1.msra.mxu0 0.0
      %2617 = vmatprep.subr.mxu0 0.0
      %2618 = vmatpush1.msra.mxu0 0.0
      %2619 = vmatprep.subr.mxu0 0.0
      %2620 = vmatpush1.msra.mxu0 0.0
      %2621 = vmatprep.subr.mxu0 0.0
      %2622 = vmatpush1.msra.mxu0 0.0
      %2623 = vmatprep.subr.mxu0 0.0
      %2624 = vmatpush1.msra.mxu0 0.0
      %2625 = vmatprep.subr.mxu0 0.0
      %2626 = vmatpush1.msra.mxu0 0.0
      %2627 = vmatprep.subr.mxu0 0.0
      %2628 = vmatpush1.msra.mxu0 0.0
      %2629 = vmatprep.subr.mxu0 0.0
      %2630 = vmatpush1.msra.mxu0 0.0
      %2631 = vmatprep.subr.mxu0 0.0
      %2632 = vmatpush1.msra.mxu0 0.0
      %2633 = vmatprep.subr.mxu0 0.0
      %2634 = vmatpush1.msra.mxu0 0.0
      %2635 = vmatprep.subr.mxu0 0.0
      %2636 = vmatpush1.msra.mxu0 0.0
      %2637 = vmatprep.subr.mxu0 0.0
      %2638 = vmatpush1.msra.mxu0 0.0
      %2639 = vmatprep.subr.mxu0 0.0
      %2640 = vmatpush1.msra.mxu0 0.0
      %2641 = vmatprep.subr.mxu0 0.0
      %2642 = vmatpush1.msra.mxu0 0.0
      %2643 = vmatprep.subr.mxu0 0.0
      %2644 = vmatpush1.msra.mxu0 0.0
      %2645 = vmatprep.subr.mxu0 0.0
      %2646 = vmatpush1.msra.mxu0 0.0
      %2647 = vmatprep.mubr.f32.mxu0 0.0
      %2648 = vmatmul.mubr.f32.gmra.mrb[0].mxu0 %v2362
      %v2649 = vpop.f32.mrb[0].mxu0
      %v2650 = vadd.f32 %v2488, %v2649
      %v2651 = vpop.f32.mrb[0].mxu0
      %v2652 = vadd.f32 %v2492, %v2651
      %2653 = vdwg.mxu0
      %2654 = vmatprep.subr.mxu0 %v2368
      %2655 = vmatpush1.msra.mxu0 %v2367
      %2656 = vmatprep.subr.mxu0 %v2375
      %2657 = vmatpush1.msra.mxu0 %v2374
      %2658 = vmatprep.subr.mxu0 %v2382
      %2659 = vmatpush1.msra.mxu0 %v2381
      %2660 = vmatprep.subr.mxu0 %v2389
      %2661 = vmatpush1.msra.mxu0 %v2388
      %2662 = vmatprep.subr.mxu0 %v2396
      %2663 = vmatpush1.msra.mxu0 %v2395
      %2664 = vmatprep.subr.mxu0 %v2403
      %2665 = vmatpush1.msra.mxu0 %v2402
      %2666 = vmatprep.subr.mxu0 %v2410
      %2667 = vmatpush1.msra.mxu0 %v2409
      %2668 = vmatprep.subr.mxu0 %v2417
      %2669 = vmatpush1.msra.mxu0 %v2416
      %2670 = vmatprep.subr.mxu0 %v2424
      %2671 = vmatpush1.msra.mxu0 %v2423
      %2672 = vmatprep.subr.mxu0 %v2431
      %2673 = vmatpush1.msra.mxu0 %v2430
      %2674 = vmatprep.subr.mxu0 %v2438
      %2675 = vmatpush1.msra.mxu0 %v2437
      %2676 = vmatprep.subr.mxu0 %v2445
      %2677 = vmatpush1.msra.mxu0 %v2444
      %2678 = vmatprep.subr.mxu0 %v2452
      %2679 = vmatpush1.msra.mxu0 %v2451
      %2680 = vmatprep.subr.mxu0 %v2459
      %2681 = vmatpush1.msra.mxu0 %v2458
      %2682 = vmatprep.subr.mxu0 %v2466
      %2683 = vmatpush1.msra.mxu0 %v2465
      %2684 = vmatprep.subr.mxu0 %v2473
      %2685 = vmatpush1.msra.mxu0 %v2472
      %2686 = vmatprep.subr.mxu0 0.0
      %2687 = vmatpush1.msra.mxu0 0.0
      %2688 = vmatprep.subr.mxu0 0.0
      %2689 = vmatpush1.msra.mxu0 0.0
      %2690 = vmatprep.subr.mxu0 0.0
      %2691 = vmatpush1.msra.mxu0 0.0
      %2692 = vmatprep.subr.mxu0 0.0
      %2693 = vmatpush1.msra.mxu0 0.0
      %2694 = vmatprep.subr.mxu0 0.0
      %2695 = vmatpush1.msra.mxu0 0.0
      %2696 = vmatprep.subr.mxu0 0.0
      %2697 = vmatpush1.msra.mxu0 0.0
      %2698 = vmatprep.subr.mxu0 0.0
      %2699 = vmatpush1.msra.mxu0 0.0
      %2700 = vmatprep.subr.mxu0 0.0
      %2701 = vmatpush1.msra.mxu0 0.0
      %2702 = vmatprep.subr.mxu0 0.0
      %2703 = vmatpush1.msra.mxu0 0.0
      %2704 = vmatprep.subr.mxu0 0.0
      %2705 = vmatpush1.msra.mxu0 0.0
      %2706 = vmatprep.subr.mxu0 0.0
      %2707 = vmatpush1.msra.mxu0 0.0
      %2708 = vmatprep.subr.mxu0 0.0
      %2709 = vmatpush1.msra.mxu0 0.0
      %2710 = vmatprep.subr.mxu0 0.0
      %2711 = vmatpush1.msra.mxu0 0.0
      %2712 = vmatprep.subr.mxu0 0.0
      %2713 = vmatpush1.msra.mxu0 0.0
      %2714 = vmatprep.subr.mxu0 0.0
      %2715 = vmatpush1.msra.mxu0 0.0
      %2716 = vmatprep.subr.mxu0 0.0
      %2717 = vmatpush1.msra.mxu0 0.0
      %2718 = vmatprep.mubr.f32.mxu0 0.0
      %2719 = vmatmul.mubr.f32.gmra.mrb[0].mxu0 %v2362
      %v2720 = vpop.f32.mrb[0].mxu0
      %v2721 = vadd.f32 %v2496, %v2720
      %v2722 = vpop.f32.mrb[0].mxu0
      %v2723 = vadd.f32 %v2500, %v2722
      %2724 = vdwg.mxu0
      %2725 = vmatprep.subr.mxu0 0.0
      %2726 = vmatpush1.msra.mxu0 %v2369
      %2727 = vmatprep.subr.mxu0 0.0
      %2728 = vmatpush1.msra.mxu0 %v2376
      %2729 = vmatprep.subr.mxu0 0.0
      %2730 = vmatpush1.msra.mxu0 %v2383
      %2731 = vmatprep.subr.mxu0 0.0
      %2732 = vmatpush1.msra.mxu0 %v2390
      %2733 = vmatprep.subr.mxu0 0.0
      %2734 = vmatpush1.msra.mxu0 %v2397
      %2735 = vmatprep.subr.mxu0 0.0
      %2736 = vmatpush1.msra.mxu0 %v2404
      %2737 = vmatprep.subr.mxu0 0.0
      %2738 = vmatpush1.msra.mxu0 %v2411
      %2739 = vmatprep.subr.mxu0 0.0
      %2740 = vmatpush1.msra.mxu0 %v2418
      %2741 = vmatprep.subr.mxu0 0.0
      %2742 = vmatpush1.msra.mxu0 %v2425
      %2743 = vmatprep.subr.mxu0 0.0
      %2744 = vmatpush1.msra.mxu0 %v2432
      %2745 = vmatprep.subr.mxu0 0.0
      %2746 = vmatpush1.msra.mxu0 %v2439
      %2747 = vmatprep.subr.mxu0 0.0
      %2748 = vmatpush1.msra.mxu0 %v2446
      %2749 = vmatprep.subr.mxu0 0.0
      %2750 = vmatpush1.msra.mxu0 %v2453
      %2751 = vmatprep.subr.mxu0 0.0
      %2752 = vmatpush1.msra.mxu0 %v2460
      %2753 = vmatprep.subr.mxu0 0.0
      %2754 = vmatpush1.msra.mxu0 %v2467
      %2755 = vmatprep.subr.mxu0 0.0
      %2756 = vmatpush1.msra.mxu0 %v2474
      %2757 = vmatprep.subr.mxu0 0.0
      %2758 = vmatpush1.msra.mxu0 0.0
      %2759 = vmatprep.subr.mxu0 0.0
      %2760 = vmatpush1.msra.mxu0 0.0
      %2761 = vmatprep.subr.mxu0 0.0
      %2762 = vmatpush1.msra.mxu0 0.0
      %2763 = vmatprep.subr.mxu0 0.0
      %2764 = vmatpush1.msra.mxu0 0.0
      %2765 = vmatprep.subr.mxu0 0.0
      %2766 = vmatpush1.msra.mxu0 0.0
      %2767 = vmatprep.subr.mxu0 0.0
      %2768 = vmatpush1.msra.mxu0 0.0
      %2769 = vmatprep.subr.mxu0 0.0
      %2770 = vmatpush1.msra.mxu0 0.0
      %2771 = vmatprep.subr.mxu0 0.0
      %2772 = vmatpush1.msra.mxu0 0.0
      %2773 = vmatprep.subr.mxu0 0.0
      %2774 = vmatpush1.msra.mxu0 0.0
      %2775 = vmatprep.subr.mxu0 0.0
      %2776 = vmatpush1.msra.mxu0 0.0
      %2777 = vmatprep.subr.mxu0 0.0
      %2778 = vmatpush1.msra.mxu0 0.0
      %2779 = vmatprep.subr.mxu0 0.0
      %2780 = vmatpush1.msra.mxu0 0.0
      %2781 = vmatprep.subr.mxu0 0.0
      %2782 = vmatpush1.msra.mxu0 0.0
      %2783 = vmatprep.subr.mxu0 0.0
      %2784 = vmatpush1.msra.mxu0 0.0
      %2785 = vmatprep.subr.mxu0 0.0
      %2786 = vmatpush1.msra.mxu0 0.0
      %2787 = vmatprep.subr.mxu0 0.0
      %2788 = vmatpush1.msra.mxu0 0.0
      %2789 = vmatprep.mubr.f32.mxu0 0.0
      %2790 = vmatmul.mubr.f32.gmra.mrb[0].mxu0 %v2362
      %v2791 = vpop.f32.mrb[0].mxu0
      %v2792 = vadd.f32 %v2504, %v2791
      %v2793 = vpop.f32.mrb[0].mxu0
      %2794 = vdwg.mxu0
      %v2795 = vmax.f32 %v2579, 0.0
      %v2796 = vmax.f32 %v2581, 0.0
      %v2797 = vmax.f32 %v2650, 0.0
      %v2798 = vmax.f32 %v2652, 0.0
      %v2799 = vmax.f32 %v2721, 0.0
      %v2800 = vmax.f32 %v2723, 0.0
      %v2801 = vmax.f32 %v2792, 0.0
      %v2802 = vld [vmem:[%s14] sm:$0xff]
      %v2803 = vld [vmem:[%s14 + $0x8] sm:$0xff]
      %v2804 = vld [vmem:[%s14 + $0x10] sm:$0xff]
      %v2805 = vld [vmem:[%s14 + $0x18] sm:$0xff]
      %v2806 = vld [vmem:[%s14 + $0x20] sm:$0xff]
      %v2807 = vld [vmem:[%s14 + $0x28] sm:$0xff]
      %v2808 = vld [vmem:[%s14 + $0x30] sm:$0xff]
      %v2809 = vld [vmem:[%s14 + $0x38] sm:$0xff]
      %v2810 = vld [vmem:[%s14 + $0x40] sm:$0xff]
      %v2811 = vld [vmem:[%s14 + $0x48] sm:$0xff]
      %v2812 = vld [vmem:[%s14 + $0x50] sm:$0xff]
      %v2813 = vld [vmem:[%s14 + $0x58] sm:$0xff]
      %v2814 = vld [vmem:[%s14 + $0x60] sm:$0xff]
      %v2815 = vld [vmem:[%s14 + $0x68] sm:$0xff]
      %v2816 = vld [vmem:[%s14 + $0x70] sm:$0xff]
      %v2817 = vld [vmem:[%s14 + $0x78] sm:$0xff]
      %v2818 = vld [vmem:[%s14 + $0x80] sm:$0xff]
      %v2819 = vld [vmem:[%s14 + $0x88] sm:$0xff]
      %v2820 = vld [vmem:[%s14 + $0x90] sm:$0xff]
      %v2821 = vld [vmem:[%s14 + $0x98] sm:$0xff]
      %v2822 = vld [vmem:[%s14 + $0xa0] sm:$0xff]
      %v2823 = vld [vmem:[%s14 + $0xa8] sm:$0xff]
      %v2824 = vld [vmem:[%s14 + $0xb0] sm:$0xff]
      %v2825 = vld [vmem:[%s14 + $0xb8] sm:$0xff]
      %v2826 = vld [vmem:[%s14 + $0xc0] sm:$0xff]
      %v2827 = vld [vmem:[%s14 + $0xc8] sm:$0xff]
      %v2828 = vld [vmem:[%s14 + $0xd0] sm:$0xff]
      %v2829 = vld [vmem:[%s14 + $0xd8] sm:$0xff]
      %v2830 = vld [vmem:[%s14 + $0xe0] sm:$0xff]
      %v2831 = vld [vmem:[%s14 + $0xe8] sm:$0xff]
      %v2832 = vld [vmem:[%s14 + $0xf0] sm:$0xff]
      %v2833 = vld [vmem:[%s14 + $0xf8] sm:$0xff]
      %v2834 = vld [vmem:[%s14 + $0x100] sm:$0xff]
      %v2835 = vld [vmem:[%s14 + $0x108] sm:$0xff]
      %v2836 = vld [vmem:[%s14 + $0x110] sm:$0xff]
      %v2837 = vld [vmem:[%s14 + $0x118] sm:$0xff]
      %v2838 = vld [vmem:[%s14 + $0x120] sm:$0xff]
      %v2839 = vld [vmem:[%s14 + $0x128] sm:$0xff]
      %v2840 = vld [vmem:[%s14 + $0x130] sm:$0xff]
      %v2841 = vld [vmem:[%s14 + $0x138] sm:$0xff]
      %v2842 = vld [vmem:[%s14 + $0x140] sm:$0xff]
      %v2843 = vld [vmem:[%s14 + $0x148] sm:$0xff]
      %v2844 = vld [vmem:[%s14 + $0x150] sm:$0xff]
      %v2845 = vld [vmem:[%s14 + $0x158] sm:$0xff]
      %v2846 = vld [vmem:[%s14 + $0x160] sm:$0xff]
      %v2847 = vld [vmem:[%s14 + $0x168] sm:$0xff]
      %v2848 = vld [vmem:[%s14 + $0x170] sm:$0xff]
      %v2849 = vld [vmem:[%s14 + $0x178] sm:$0xff]
      %v2850 = vld [vmem:[%s14 + $0x180] sm:$0xff]
      %v2851 = vld [vmem:[%s14 + $0x188] sm:$0xff]
      %v2852 = vld [vmem:[%s14 + $0x190] sm:$0xff]
      %v2853 = vld [vmem:[%s14 + $0x198] sm:$0xff]
      %v2854 = vld [vmem:[%s14 + $0x1a0] sm:$0xff]
      %v2855 = vld [vmem:[%s14 + $0x1a8] sm:$0xff]
      %v2856 = vld [vmem:[%s14 + $0x1b0] sm:$0xff]
      %v2857 = vld [vmem:[%s14 + $0x1b8] sm:$0xff]
      %v2858 = vld [vmem:[%s14 + $0x1c0] sm:$0xff]
      %v2859 = vld [vmem:[%s14 + $0x1c8] sm:$0xff]
      %v2860 = vld [vmem:[%s14 + $0x1d0] sm:$0xff]
      %v2861 = vld [vmem:[%s14 + $0x1d8] sm:$0xff]
      %v2862 = vld [vmem:[%s14 + $0x1e0] sm:$0xff]
      %v2863 = vld [vmem:[%s14 + $0x1e8] sm:$0xff]
      %v2864 = vld [vmem:[%s14 + $0x1f0] sm:$0xff]
      %v2865 = vld [vmem:[%s14 + $0x1f8] sm:$0xff]
      %v2866 = vld [vmem:[%s14 + $0x200] sm:$0xff]
      %v2867 = vld [vmem:[%s14 + $0x208] sm:$0xff]
      %v2868 = vld [vmem:[%s14 + $0x210] sm:$0xff]
      %v2869 = vld [vmem:[%s14 + $0x218] sm:$0xff]
      %v2870 = vld [vmem:[%s14 + $0x220] sm:$0xff]
      %v2871 = vld [vmem:[%s14 + $0x228] sm:$0xff]
      %v2872 = vld [vmem:[%s14 + $0x230] sm:$0xff]
      %v2873 = vld [vmem:[%s14 + $0x238] sm:$0xff]
      %v2874 = vld [vmem:[%s14 + $0x240] sm:$0xff]
      %v2875 = vld [vmem:[%s14 + $0x248] sm:$0xff]
      %v2876 = vld [vmem:[%s14 + $0x250] sm:$0xff]
      %v2877 = vld [vmem:[%s14 + $0x258] sm:$0xff]
      %v2878 = vld [vmem:[%s14 + $0x260] sm:$0xff]
      %v2879 = vld [vmem:[%s14 + $0x268] sm:$0xff]
      %v2880 = vld [vmem:[%s14 + $0x270] sm:$0xff]
      %v2881 = vld [vmem:[%s14 + $0x278] sm:$0xff]
      %v2882 = vld [vmem:[%s14 + $0x280] sm:$0xff]
      %v2883 = vld [vmem:[%s14 + $0x288] sm:$0xff]
      %v2884 = vld [vmem:[%s14 + $0x290] sm:$0xff]
      %v2885 = vld [vmem:[%s14 + $0x298] sm:$0xff]
      %v2886 = vld [vmem:[%s14 + $0x2a0] sm:$0xff]
      %v2887 = vld [vmem:[%s14 + $0x2a8] sm:$0xff]
      %v2888 = vld [vmem:[%s14 + $0x2b0] sm:$0xff]
      %v2889 = vld [vmem:[%s14 + $0x2b8] sm:$0xff]
      %v2890 = vld [vmem:[%s14 + $0x2c0] sm:$0xff]
      %v2891 = vld [vmem:[%s14 + $0x2c8] sm:$0xff]
      %v2892 = vld [vmem:[%s14 + $0x2d0] sm:$0xff]
      %v2893 = vld [vmem:[%s14 + $0x2d8] sm:$0xff]
      %v2894 = vld [vmem:[%s14 + $0x2e0] sm:$0xff]
      %v2895 = vld [vmem:[%s14 + $0x2e8] sm:$0xff]
      %v2896 = vld [vmem:[%s14 + $0x2f0] sm:$0xff]
      %v2897 = vld [vmem:[%s14 + $0x2f8] sm:$0xff]
      %v2898 = vld [vmem:[%s14 + $0x300] sm:$0xff]
      %v2899 = vld [vmem:[%s14 + $0x308] sm:$0xff]
      %v2900 = vld [vmem:[%s14 + $0x310] sm:$0xff]
      %v2901 = vld [vmem:[%s14 + $0x318] sm:$0xff]
      %v2902 = vld [vmem:[%s14 + $0x320] sm:$0xff]
      %v2903 = vld [vmem:[%s14 + $0x328] sm:$0xff]
      %v2904 = vld [vmem:[%s14 + $0x330] sm:$0xff]
      %v2905 = vld [vmem:[%s14 + $0x338] sm:$0xff]
      %v2906 = vld [vmem:[%s14 + $0x340] sm:$0xff]
      %v2907 = vld [vmem:[%s14 + $0x348] sm:$0xff]
      %v2908 = vld [vmem:[%s14 + $0x350] sm:$0xff]
      %v2909 = vld [vmem:[%s14 + $0x358] sm:$0xff]
      %v2910 = vld [vmem:[%s14 + $0x360] sm:$0xff]
      %v2911 = vld [vmem:[%s14 + $0x368] sm:$0xff]
      %v2912 = vld [vmem:[%s14 + $0x370] sm:$0xff]
      %v2913 = vld [vmem:[%s14 + $0x378] sm:$0xff]
      %v2914 = vld [vmem:[%s14 + $0x380] sm:$0xff]
      %v2915 = vld [vmem:[%s14 + $0x388] sm:$0xff]
      %v2916 = vld [vmem:[%s14 + $0x390] sm:$0xff]
      %v2917 = vld [vmem:[%s14 + $0x398] sm:$0xff]
      %v2918 = vld [vmem:[%s14 + $0x3a0] sm:$0xff]
      %v2919 = vld [vmem:[%s14 + $0x3a8] sm:$0xff]
      %v2920 = vld [vmem:[%s14 + $0x3b0] sm:$0xff]
      %v2921 = vld [vmem:[%s14 + $0x3b8] sm:$0xff]
      %v2922 = vld [vmem:[%s14 + $0x3c0] sm:$0xff]
      %v2923 = vld [vmem:[%s14 + $0x3c8] sm:$0xff]
      %v2924 = vld [vmem:[%s14 + $0x3d0] sm:$0xff]
      %v2925 = vld [vmem:[%s14 + $0x3d8] sm:$0xff]
      %v2926 = vld [vmem:[%s14 + $0x3e0] sm:$0xff]
      %v2927 = vld [vmem:[%s14 + $0x3e8] sm:$0xff]
      %v2928 = vld [vmem:[%s14 + $0x3f0] sm:$0xff]
      %v2929 = vld [vmem:[%s14 + $0x3f8] sm:$0xff]
      %v2930 = vld [vmem:[%s14 + $0x400] sm:$0xff]
      %v2931 = vld [vmem:[%s14 + $0x408] sm:$0xff]
      %v2932 = vld [vmem:[%s14 + $0x410] sm:$0xff]
      %v2933 = vld [vmem:[%s14 + $0x418] sm:$0xff]
      %v2934 = vld [vmem:[%s14 + $0x420] sm:$0xff]
      %v2935 = vld [vmem:[%s14 + $0x428] sm:$0xff]
      %v2936 = vld [vmem:[%s14 + $0x430] sm:$0xff]
      %v2937 = vld [vmem:[%s14 + $0x438] sm:$0xff]
      %v2938 = vld [vmem:[%s14 + $0x440] sm:$0xff]
      %v2939 = vld [vmem:[%s14 + $0x448] sm:$0xff]
      %v2940 = vld [vmem:[%s14 + $0x450] sm:$0xff]
      %v2941 = vld [vmem:[%s14 + $0x458] sm:$0xff]
      %v2942 = vld [vmem:[%s14 + $0x460] sm:$0xff]
      %v2943 = vld [vmem:[%s14 + $0x468] sm:$0xff]
      %v2944 = vld [vmem:[%s14 + $0x470] sm:$0xff]
      %v2945 = vld [vmem:[%s14 + $0x478] sm:$0xff]
      %v2946 = vld [vmem:[%s14 + $0x480] sm:$0xff]
      %v2947 = vld [vmem:[%s14 + $0x488] sm:$0xff]
      %v2948 = vld [vmem:[%s14 + $0x490] sm:$0xff]
      %v2949 = vld [vmem:[%s14 + $0x498] sm:$0xff]
      %v2950 = vld [vmem:[%s14 + $0x4a0] sm:$0xff]
      %v2951 = vld [vmem:[%s14 + $0x4a8] sm:$0xff]
      %v2952 = vld [vmem:[%s14 + $0x4b0] sm:$0xff]
      %v2953 = vld [vmem:[%s14 + $0x4b8] sm:$0xff]
      %v2954 = vld [vmem:[%s14 + $0x4c0] sm:$0xff]
      %v2955 = vld [vmem:[%s14 + $0x4c8] sm:$0xff]
      %v2956 = vld [vmem:[%s14 + $0x4d0] sm:$0xff]
      %v2957 = vld [vmem:[%s14 + $0x4d8] sm:$0xff]
      %v2958 = vld [vmem:[%s14 + $0x4e0] sm:$0xff]
      %v2959 = vld [vmem:[%s14 + $0x4e8] sm:$0xff]
      %v2960 = vld [vmem:[%s14 + $0x4f0] sm:$0xff]
      %v2961 = vld [vmem:[%s14 + $0x4f8] sm:$0xff]
      %v2962 = vld [vmem:[%s14 + $0x500] sm:$0xff]
      %v2963 = vld [vmem:[%s14 + $0x508] sm:$0xff]
      %v2964 = vld [vmem:[%s14 + $0x510] sm:$0xff]
      %v2965 = vld [vmem:[%s14 + $0x518] sm:$0xff]
      %v2966 = vld [vmem:[%s14 + $0x520] sm:$0xff]
      %v2967 = vld [vmem:[%s14 + $0x528] sm:$0xff]
      %v2968 = vld [vmem:[%s14 + $0x530] sm:$0xff]
      %v2969 = vld [vmem:[%s14 + $0x538] sm:$0xff]
      %v2970 = vld [vmem:[%s14 + $0x540] sm:$0xff]
      %v2971 = vld [vmem:[%s14 + $0x548] sm:$0xff]
      %v2972 = vld [vmem:[%s14 + $0x550] sm:$0xff]
      %v2973 = vld [vmem:[%s14 + $0x558] sm:$0xff]
      %v2974 = vld [vmem:[%s14 + $0x560] sm:$0xff]
      %v2975 = vld [vmem:[%s14 + $0x568] sm:$0xff]
      %v2976 = vld [vmem:[%s14 + $0x570] sm:$0xff]
      %v2977 = vld [vmem:[%s14 + $0x578] sm:$0xff]
      %v2978 = vld [vmem:[%s14 + $0x580] sm:$0xff]
      %v2979 = vld [vmem:[%s14 + $0x588] sm:$0xff]
      %v2980 = vld [vmem:[%s14 + $0x590] sm:$0xff]
      %v2981 = vld [vmem:[%s14 + $0x598] sm:$0xff]
      %v2982 = vld [vmem:[%s14 + $0x5a0] sm:$0xff]
      %v2983 = vld [vmem:[%s14 + $0x5a8] sm:$0xff]
      %v2984 = vld [vmem:[%s14 + $0x5b0] sm:$0xff]
      %v2985 = vld [vmem:[%s14 + $0x5b8] sm:$0xff]
      %v2986 = vld [vmem:[%s14 + $0x5c0] sm:$0xff]
      %v2987 = vld [vmem:[%s14 + $0x5c8] sm:$0xff]
      %v2988 = vld [vmem:[%s14 + $0x5d0] sm:$0xff]
      %v2989 = vld [vmem:[%s14 + $0x5d8] sm:$0xff]
      %v2990 = vld [vmem:[%s14 + $0x5e0] sm:$0xff]
      %v2991 = vld [vmem:[%s14 + $0x5e8] sm:$0xff]
      %v2992 = vld [vmem:[%s14 + $0x5f0] sm:$0xff]
      %v2993 = vld [vmem:[%s14 + $0x5f8] sm:$0xff]
      %v2994 = vld [vmem:[%s14 + $0x600] sm:$0xff]
      %v2995 = vld [vmem:[%s14 + $0x608] sm:$0xff]
      %v2996 = vld [vmem:[%s14 + $0x610] sm:$0xff]
      %v2997 = vld [vmem:[%s14 + $0x618] sm:$0xff]
      %v2998 = vld [vmem:[%s14 + $0x620] sm:$0xff]
      %v2999 = vld [vmem:[%s14 + $0x628] sm:$0xff]
      %v3000 = vld [vmem:[%s14 + $0x630] sm:$0xff]
      %v3001 = vld [vmem:[%s14 + $0x638] sm:$0xff]
      %v3002 = vld [vmem:[%s14 + $0x640] sm:$0xff]
      %v3003 = vld [vmem:[%s14 + $0x648] sm:$0xff]
      %v3004 = vld [vmem:[%s14 + $0x650] sm:$0xff]
      %v3005 = vld [vmem:[%s14 + $0x658] sm:$0xff]
      %v3006 = vld [vmem:[%s14 + $0x660] sm:$0xff]
      %v3007 = vld [vmem:[%s14 + $0x668] sm:$0xff]
      %v3008 = vld [vmem:[%s14 + $0x670] sm:$0xff]
      %v3009 = vld [vmem:[%s14 + $0x678] sm:$0xff]
      %v3010 = vld [vmem:[%s14 + $0x680] sm:$0xff]
      %v3011 = vld [vmem:[%s14 + $0x688] sm:$0xff]
      %v3012 = vld [vmem:[%s14 + $0x690] sm:$0xff]
      %v3013 = vld [vmem:[%s14 + $0x698] sm:$0xff]
      %v3014 = vld [vmem:[%s14 + $0x6a0] sm:$0xff]
      %v3015 = vld [vmem:[%s14 + $0x6a8] sm:$0xff]
      %v3016 = vld [vmem:[%s14 + $0x6b0] sm:$0xff]
      %v3017 = vld [vmem:[%s14 + $0x6b8] sm:$0xff]
      %v3018 = vld [vmem:[%s14 + $0x6c0] sm:$0xff]
      %v3019 = vld [vmem:[%s14 + $0x6c8] sm:$0xff]
      %v3020 = vld [vmem:[%s14 + $0x6d0] sm:$0xff]
      %v3021 = vld [vmem:[%s14 + $0x6d8] sm:$0xff]
      %v3022 = vld [vmem:[%s14 + $0x6e0] sm:$0xff]
      %v3023 = vld [vmem:[%s14 + $0x6e8] sm:$0xff]
      %v3024 = vld [vmem:[%s14 + $0x6f0] sm:$0xff]
      %v3025 = vld [vmem:[%s14 + $0x6f8] sm:$0xff]
      %v3026 = vld [vmem:[%s14 + $0x700] sm:$0xff]
      %v3027 = vld [vmem:[%s14 + $0x708] sm:$0xff]
      %v3028 = vld [vmem:[%s14 + $0x710] sm:$0xff]
      %v3029 = vld [vmem:[%s14 + $0x718] sm:$0xff]
      %v3030 = vld [vmem:[%s14 + $0x720] sm:$0xff]
      %v3031 = vld [vmem:[%s14 + $0x728] sm:$0xff]
      %v3032 = vld [vmem:[%s14 + $0x730] sm:$0xff]
      %v3033 = vld [vmem:[%s14 + $0x738] sm:$0xff]
      %v3034 = vld [vmem:[%s14 + $0x740] sm:$0xff]
      %v3035 = vld [vmem:[%s14 + $0x748] sm:$0xff]
      %v3036 = vld [vmem:[%s14 + $0x750] sm:$0xff]
      %v3037 = vld [vmem:[%s14 + $0x758] sm:$0xff]
      %v3038 = vld [vmem:[%s14 + $0x760] sm:$0xff]
      %v3039 = vld [vmem:[%s14 + $0x768] sm:$0xff]
      %v3040 = vld [vmem:[%s14 + $0x770] sm:$0xff]
      %v3041 = vld [vmem:[%s14 + $0x778] sm:$0xff]
      %v3042 = vld [vmem:[%s14 + $0x780] sm:$0xff]
      %v3043 = vld [vmem:[%s14 + $0x788] sm:$0xff]
      %v3044 = vld [vmem:[%s14 + $0x790] sm:$0xff]
      %v3045 = vld [vmem:[%s14 + $0x798] sm:$0xff]
      %v3046 = vld [vmem:[%s14 + $0x7a0] sm:$0xff]
      %v3047 = vld [vmem:[%s14 + $0x7a8] sm:$0xff]
      %v3048 = vld [vmem:[%s14 + $0x7b0] sm:$0xff]
      %v3049 = vld [vmem:[%s14 + $0x7b8] sm:$0xff]
      %v3050 = vld [vmem:[%s14 + $0x7c0] sm:$0xff]
      %v3051 = vld [vmem:[%s14 + $0x7c8] sm:$0xff]
      %v3052 = vld [vmem:[%s14 + $0x7d0] sm:$0xff]
      %v3053 = vld [vmem:[%s14 + $0x7d8] sm:$0xff]
      %v3054 = vld [vmem:[%s14 + $0x7e0] sm:$0xff]
      %v3055 = vld [vmem:[%s14 + $0x7e8] sm:$0xff]
      %v3056 = vld [vmem:[%s14 + $0x7f0] sm:$0xff]
      %v3057 = vld [vmem:[%s14 + $0x7f8] sm:$0xff]
      %v3058 = vld [vmem:[%s14 + $0x800] sm:$0xff]
      %v3059 = vld [vmem:[%s14 + $0x808] sm:$0xff]
      %v3060 = vld [vmem:[%s14 + $0x810] sm:$0xff]
      %v3061 = vld [vmem:[%s14 + $0x818] sm:$0xff]
      %v3062 = vld [vmem:[%s14 + $0x820] sm:$0xff]
      %v3063 = vld [vmem:[%s14 + $0x828] sm:$0xff]
      %v3064 = vld [vmem:[%s14 + $0x830] sm:$0xff]
      %v3065 = vld [vmem:[%s14 + $0x838] sm:$0xff]
      %v3066 = vld [vmem:[%s14 + $0x840] sm:$0xff]
      %v3067 = vld [vmem:[%s14 + $0x848] sm:$0xff]
      %v3068 = vld [vmem:[%s14 + $0x850] sm:$0xff]
      %v3069 = vld [vmem:[%s14 + $0x858] sm:$0xff]
      %v3070 = vld [vmem:[%s14 + $0x860] sm:$0xff]
      %v3071 = vld [vmem:[%s14 + $0x868] sm:$0xff]
      %v3072 = vld [vmem:[%s14 + $0x870] sm:$0xff]
      %v3073 = vld [vmem:[%s14 + $0x878] sm:$0xff]
      %v3074 = vld [vmem:[%s14 + $0x880] sm:$0xff]
      %v3075 = vld [vmem:[%s14 + $0x888] sm:$0xff]
      %v3076 = vld [vmem:[%s14 + $0x890] sm:$0xff]
      %v3077 = vld [vmem:[%s14 + $0x898] sm:$0xff]
      %v3078 = vld [vmem:[%s14 + $0x8a0] sm:$0xff]
      %v3079 = vld [vmem:[%s14 + $0x8a8] sm:$0xff]
      %v3080 = vld [vmem:[%s14 + $0x8b0] sm:$0xff]
      %v3081 = vld [vmem:[%s14 + $0x8b8] sm:$0xff]
      %v3082 = vld [vmem:[%s14 + $0x8c0] sm:$0xff]
      %v3083 = vld [vmem:[%s14 + $0x8c8] sm:$0xff]
      %v3084 = vld [vmem:[%s14 + $0x8d0] sm:$0xff]
      %v3085 = vld [vmem:[%s14 + $0x8d8] sm:$0xff]
      %v3086 = vld [vmem:[%s14 + $0x8e0] sm:$0xff]
      %v3087 = vld [vmem:[%s14 + $0x8e8] sm:$0xff]
      %v3088 = vld [vmem:[%s14 + $0x8f0] sm:$0xff]
      %v3089 = vld [vmem:[%s14 + $0x8f8] sm:$0xff]
      %v3090 = vld [vmem:[%s14 + $0x900] sm:$0xff]
      %v3091 = vld [vmem:[%s14 + $0x908] sm:$0xff]
      %v3092 = vld [vmem:[%s14 + $0x910] sm:$0xff]
      %v3093 = vld [vmem:[%s14 + $0x918] sm:$0xff]
      %v3094 = vld [vmem:[%s14 + $0x920] sm:$0xff]
      %v3095 = vld [vmem:[%s14 + $0x928] sm:$0xff]
      %v3096 = vld [vmem:[%s14 + $0x930] sm:$0xff]
      %v3097 = vld [vmem:[%s14 + $0x938] sm:$0xff]
      %v3098 = vld [vmem:[%s14 + $0x940] sm:$0xff]
      %v3099 = vld [vmem:[%s14 + $0x948] sm:$0xff]
      %v3100 = vld [vmem:[%s14 + $0x950] sm:$0xff]
      %v3101 = vld [vmem:[%s14 + $0x958] sm:$0xff]
      %v3102 = vld [vmem:[%s14 + $0x960] sm:$0xff]
      %v3103 = vld [vmem:[%s14 + $0x968] sm:$0xff]
      %v3104 = vld [vmem:[%s14 + $0x970] sm:$0xff]
      %v3105 = vld [vmem:[%s14 + $0x978] sm:$0xff]
      %v3106 = vld [vmem:[%s14 + $0x980] sm:$0xff]
      %v3107 = vld [vmem:[%s14 + $0x988] sm:$0xff]
      %v3108 = vld [vmem:[%s14 + $0x990] sm:$0xff]
      %v3109 = vld [vmem:[%s14 + $0x998] sm:$0xff]
      %v3110 = vld [vmem:[%s14 + $0x9a0] sm:$0xff]
      %v3111 = vld [vmem:[%s14 + $0x9a8] sm:$0xff]
      %v3112 = vld [vmem:[%s14 + $0x9b0] sm:$0xff]
      %v3113 = vld [vmem:[%s14 + $0x9b8] sm:$0xff]
      %v3114 = vld [vmem:[%s14 + $0x9c0] sm:$0xff]
      %v3115 = vld [vmem:[%s14 + $0x9c8] sm:$0xff]
      %v3116 = vld [vmem:[%s14 + $0x9d0] sm:$0xff]
      %v3117 = vld [vmem:[%s14 + $0x9d8] sm:$0xff]
      %v3118 = vld [vmem:[%s14 + $0x9e0] sm:$0xff]
      %v3119 = vld [vmem:[%s14 + $0x9e8] sm:$0xff]
      %v3120 = vld [vmem:[%s14 + $0x9f0] sm:$0xff]
      %v3121 = vld [vmem:[%s14 + $0x9f8] sm:$0xff]
      %v3122 = vld [vmem:[%s14 + $0xa00] sm:$0xff]
      %v3123 = vld [vmem:[%s14 + $0xa08] sm:$0xff]
      %v3124 = vld [vmem:[%s14 + $0xa10] sm:$0xff]
      %v3125 = vld [vmem:[%s14 + $0xa18] sm:$0xff]
      %v3126 = vld [vmem:[%s14 + $0xa20] sm:$0xff]
      %v3127 = vld [vmem:[%s14 + $0xa28] sm:$0xff]
      %v3128 = vld [vmem:[%s14 + $0xa30] sm:$0xff]
      %v3129 = vld [vmem:[%s14 + $0xa38] sm:$0xff]
      %v3130 = vld [vmem:[%s14 + $0xa40] sm:$0xff]
      %v3131 = vld [vmem:[%s14 + $0xa48] sm:$0xff]
      %v3132 = vld [vmem:[%s14 + $0xa50] sm:$0xff]
      %v3133 = vld [vmem:[%s14 + $0xa58] sm:$0xff]
      %v3134 = vld [vmem:[%s14 + $0xa60] sm:$0xff]
      %v3135 = vld [vmem:[%s14 + $0xa68] sm:$0xff]
      %v3136 = vld [vmem:[%s14 + $0xa70] sm:$0xff]
      %v3137 = vld [vmem:[%s14 + $0xa78] sm:$0xff]
      %v3138 = vld [vmem:[%s14 + $0xa80] sm:$0xff]
      %v3139 = vld [vmem:[%s14 + $0xa88] sm:$0xff]
      %v3140 = vld [vmem:[%s14 + $0xa90] sm:$0xff]
      %v3141 = vld [vmem:[%s14 + $0xa98] sm:$0xff]
      %v3142 = vld [vmem:[%s14 + $0xaa0] sm:$0xff]
      %v3143 = vld [vmem:[%s14 + $0xaa8] sm:$0xff]
      %v3144 = vld [vmem:[%s14 + $0xab0] sm:$0xff]
      %v3145 = vld [vmem:[%s14 + $0xab8] sm:$0xff]
      %v3146 = vld [vmem:[%s14 + $0xac0] sm:$0xff]
      %v3147 = vld [vmem:[%s14 + $0xac8] sm:$0xff]
      %v3148 = vld [vmem:[%s14 + $0xad0] sm:$0xff]
      %v3149 = vld [vmem:[%s14 + $0xad8] sm:$0xff]
      %v3150 = vld [vmem:[%s14 + $0xae0] sm:$0xff]
      %v3151 = vld [vmem:[%s14 + $0xae8] sm:$0xff]
      %v3152 = vld [vmem:[%s14 + $0xaf0] sm:$0xff]
      %v3153 = vld [vmem:[%s14 + $0xaf8] sm:$0xff]
      %v3154 = vld [vmem:[%s14 + $0xb00] sm:$0xff]
      %v3155 = vld [vmem:[%s14 + $0xb08] sm:$0xff]
      %v3156 = vld [vmem:[%s14 + $0xb10] sm:$0xff]
      %v3157 = vld [vmem:[%s14 + $0xb18] sm:$0xff]
      %v3158 = vld [vmem:[%s14 + $0xb20] sm:$0xff]
      %v3159 = vld [vmem:[%s14 + $0xb28] sm:$0xff]
      %v3160 = vld [vmem:[%s14 + $0xb30] sm:$0xff]
      %v3161 = vld [vmem:[%s14 + $0xb38] sm:$0xff]
      %v3162 = vld [vmem:[%s14 + $0xb40] sm:$0xff]
      %v3163 = vld [vmem:[%s14 + $0xb48] sm:$0xff]
      %v3164 = vld [vmem:[%s14 + $0xb50] sm:$0xff]
      %v3165 = vld [vmem:[%s14 + $0xb58] sm:$0xff]
      %v3166 = vld [vmem:[%s14 + $0xb60] sm:$0xff]
      %v3167 = vld [vmem:[%s14 + $0xb68] sm:$0xff]
      %v3168 = vld [vmem:[%s14 + $0xb70] sm:$0xff]
      %v3169 = vld [vmem:[%s14 + $0xb78] sm:$0xff]
      %v3170 = vld [vmem:[%s14 + $0xb80] sm:$0xff]
      %v3171 = vld [vmem:[%s14 + $0xb88] sm:$0xff]
      %v3172 = vld [vmem:[%s14 + $0xb90] sm:$0xff]
      %v3173 = vld [vmem:[%s14 + $0xb98] sm:$0xff]
      %v3174 = vld [vmem:[%s14 + $0xba0] sm:$0xff]
      %v3175 = vld [vmem:[%s14 + $0xba8] sm:$0xff]
      %v3176 = vld [vmem:[%s14 + $0xbb0] sm:$0xff]
      %v3177 = vld [vmem:[%s14 + $0xbb8] sm:$0xff]
      %v3178 = vld [vmem:[%s14 + $0xbc0] sm:$0xff]
      %v3179 = vld [vmem:[%s14 + $0xbc8] sm:$0xff]
      %v3180 = vld [vmem:[%s14 + $0xbd0] sm:$0xff]
      %v3181 = vld [vmem:[%s14 + $0xbd8] sm:$0xff]
      %v3182 = vld [vmem:[%s14 + $0xbe0] sm:$0xff]
      %v3183 = vld [vmem:[%s14 + $0xbe8] sm:$0xff]
      %v3184 = vld [vmem:[%s14 + $0xbf0] sm:$0xff]
      %v3185 = vld [vmem:[%s14 + $0xbf8] sm:$0xff]
      %v3186 = vld [vmem:[%s14 + $0xc00] sm:$0xff]
      %v3187 = vld [vmem:[%s14 + $0xc08] sm:$0xff]
      %v3188 = vld [vmem:[%s14 + $0xc10] sm:$0xff]
      %v3189 = vld [vmem:[%s14 + $0xc18] sm:$0xff]
      %v3190 = vld [vmem:[%s14 + $0xc20] sm:$0xff]
      %v3191 = vld [vmem:[%s14 + $0xc28] sm:$0xff]
      %v3192 = vld [vmem:[%s14 + $0xc30] sm:$0xff]
      %v3193 = vld [vmem:[%s14 + $0xc38] sm:$0xff]
      %v3194 = vld [vmem:[%s14 + $0xc40] sm:$0xff]
      %v3195 = vld [vmem:[%s14 + $0xc48] sm:$0xff]
      %v3196 = vld [vmem:[%s14 + $0xc50] sm:$0xff]
      %v3197 = vld [vmem:[%s14 + $0xc58] sm:$0xff]
      %v3198 = vld [vmem:[%s14 + $0xc60] sm:$0xff]
      %v3199 = vld [vmem:[%s14 + $0xc68] sm:$0xff]
      %v3200 = vld [vmem:[%s14 + $0xc70] sm:$0xff]
      %v3201 = vld [vmem:[%s14 + $0xc78] sm:$0xff]
      %v3202 = vld [vmem:[%s15] sm:$0xf]
      %v3204 = vlaneseq
      %v3205 = vshrl.u32 %v3204, 7
      %v3206 = vsub.s32 0, %v3205
      %v3207 = vrot.slane %v3202, %v3206
      %v3208 = vlaneseq
      %v3209 = vshrl.u32 %v3208, 7
      %v3210 = vsub.s32 1, %v3209
      %v3211 = vrot.slane %v3202, %v3210
      %v3212 = vlaneseq
      %v3213 = vshrl.u32 %v3212, 7
      %v3214 = vsub.s32 2, %v3213
      %v3215 = vrot.slane %v3202, %v3214
      %v3216 = vlaneseq
      %v3217 = vshrl.u32 %v3216, 7
      %v3218 = vsub.s32 3, %v3217
      %v3219 = vrot.slane %v3202, %v3218
      %v3225 = vsel %vm1884, %v2801, 0
      %3227 = vmatprep.subr.mxu0 %v2803
      %3228 = vmatpush1.msra.mxu0 %v2802
      %3229 = vmatprep.subr.mxu0 %v2807
      %3230 = vmatpush1.msra.mxu0 %v2806
      %3231 = vmatprep.subr.mxu0 %v2811
      %3232 = vmatpush1.msra.mxu0 %v2810
      %3233 = vmatprep.subr.mxu0 %v2815
      %3234 = vmatpush1.msra.mxu0 %v2814
      %3235 = vmatprep.subr.mxu0 %v2819
      %3236 = vmatpush1.msra.mxu0 %v2818
      %3237 = vmatprep.subr.mxu0 %v2823
      %3238 = vmatpush1.msra.mxu0 %v2822
      %3239 = vmatprep.subr.mxu0 %v2827
      %3240 = vmatpush1.msra.mxu0 %v2826
      %3241 = vmatprep.subr.mxu0 %v2831
      %3242 = vmatpush1.msra.mxu0 %v2830
      %3243 = vmatprep.subr.mxu0 %v2835
      %3244 = vmatpush1.msra.mxu0 %v2834
      %3245 = vmatprep.subr.mxu0 %v2839
      %3246 = vmatpush1.msra.mxu0 %v2838
      %3247 = vmatprep.subr.mxu0 %v2843
      %3248 = vmatpush1.msra.mxu0 %v2842
      %3249 = vmatprep.subr.mxu0 %v2847
      %3250 = vmatpush1.msra.mxu0 %v2846
      %3251 = vmatprep.subr.mxu0 %v2851
      %3252 = vmatpush1.msra.mxu0 %v2850
      %3253 = vmatprep.subr.mxu0 %v2855
      %3254 = vmatpush1.msra.mxu0 %v2854
      %3255 = vmatprep.subr.mxu0 %v2859
      %3256 = vmatpush1.msra.mxu0 %v2858
      %3257 = vmatprep.subr.mxu0 %v2863
      %3258 = vmatpush1.msra.mxu0 %v2862
      %3259 = vmatprep.subr.mxu0 %v2867
      %3260 = vmatpush1.msra.mxu0 %v2866
      %3261 = vmatprep.subr.mxu0 %v2871
      %3262 = vmatpush1.msra.mxu0 %v2870
      %3263 = vmatprep.subr.mxu0 %v2875
      %3264 = vmatpush1.msra.mxu0 %v2874
      %3265 = vmatprep.subr.mxu0 %v2879
      %3266 = vmatpush1.msra.mxu0 %v2878
      %3267 = vmatprep.subr.mxu0 %v2883
      %3268 = vmatpush1.msra.mxu0 %v2882
      %3269 = vmatprep.subr.mxu0 %v2887
      %3270 = vmatpush1.msra.mxu0 %v2886
      %3271 = vmatprep.subr.mxu0 %v2891
      %3272 = vmatpush1.msra.mxu0 %v2890
      %3273 = vmatprep.subr.mxu0 %v2895
      %3274 = vmatpush1.msra.mxu0 %v2894
      %3275 = vmatprep.subr.mxu0 %v2899
      %3276 = vmatpush1.msra.mxu0 %v2898
      %3277 = vmatprep.subr.mxu0 %v2903
      %3278 = vmatpush1.msra.mxu0 %v2902
      %3279 = vmatprep.subr.mxu0 %v2907
      %3280 = vmatpush1.msra.mxu0 %v2906
      %3281 = vmatprep.subr.mxu0 %v2911
      %3282 = vmatpush1.msra.mxu0 %v2910
      %3283 = vmatprep.subr.mxu0 %v2915
      %3284 = vmatpush1.msra.mxu0 %v2914
      %3285 = vmatprep.subr.mxu0 %v2919
      %3286 = vmatpush1.msra.mxu0 %v2918
      %3287 = vmatprep.subr.mxu0 %v2923
      %3288 = vmatpush1.msra.mxu0 %v2922
      %3289 = vmatprep.subr.mxu0 %v2927
      %3290 = vmatpush1.msra.mxu0 %v2926
      %3291 = vmatprep.mubr.f32.mxu0 %v2796
      %3292 = vmatmul.mubr.f32.gmra.mrb[0].mxu0 %v2795
      %v3293 = vpop.f32.mrb[0].mxu0
      %v3294 = vadd.f32 %v3207, %v3293
      %v3295 = vpop.f32.mrb[0].mxu0
      %v3296 = vadd.f32 %v3211, %v3295
      %3297 = vdwg.mxu0
      %3298 = vmatprep.subr.mxu0 %v2931
      %3299 = vmatpush1.msra.mxu0 %v2930
      %3300 = vmatprep.subr.mxu0 %v2935
      %3301 = vmatpush1.msra.mxu0 %v2934
      %3302 = vmatprep.subr.mxu0 %v2939
      %3303 = vmatpush1.msra.mxu0 %v2938
      %3304 = vmatprep.subr.mxu0 %v2943
      %3305 = vmatpush1.msra.mxu0 %v2942
      %3306 = vmatprep.subr.mxu0 %v2947
      %3307 = vmatpush1.msra.mxu0 %v2946
      %3308 = vmatprep.subr.mxu0 %v2951
      %3309 = vmatpush1.msra.mxu0 %v2950
      %3310 = vmatprep.subr.mxu0 %v2955
      %3311 = vmatpush1.msra.mxu0 %v2954
      %3312 = vmatprep.subr.mxu0 %v2959
      %3313 = vmatpush1.msra.mxu0 %v2958
      %3314 = vmatprep.subr.mxu0 %v2963
      %3315 = vmatpush1.msra.mxu0 %v2962
      %3316 = vmatprep.subr.mxu0 %v2967
      %3317 = vmatpush1.msra.mxu0 %v2966
      %3318 = vmatprep.subr.mxu0 %v2971
      %3319 = vmatpush1.msra.mxu0 %v2970
      %3320 = vmatprep.subr.mxu0 %v2975
      %3321 = vmatpush1.msra.mxu0 %v2974
      %3322 = vmatprep.subr.mxu0 %v2979
      %3323 = vmatpush1.msra.mxu0 %v2978
      %3324 = vmatprep.subr.mxu0 %v2983
      %3325 = vmatpush1.msra.mxu0 %v2982
      %3326 = vmatprep.subr.mxu0 %v2987
      %3327 = vmatpush1.msra.mxu0 %v2986
      %3328 = vmatprep.subr.mxu0 %v2991
      %3329 = vmatpush1.msra.mxu0 %v2990
      %3330 = vmatprep.subr.mxu0 %v2995
      %3331 = vmatpush1.msra.mxu0 %v2994
      %3332 = vmatprep.subr.mxu0 %v2999
      %3333 = vmatpush1.msra.mxu0 %v2998
      %3334 = vmatprep.subr.mxu0 %v3003
      %3335 = vmatpush1.msra.mxu0 %v3002
      %3336 = vmatprep.subr.mxu0 %v3007
      %3337 = vmatpush1.msra.mxu0 %v3006
      %3338 = vmatprep.subr.mxu0 %v3011
      %3339 = vmatpush1.msra.mxu0 %v3010
      %3340 = vmatprep.subr.mxu0 %v3015
      %3341 = vmatpush1.msra.mxu0 %v3014
      %3342 = vmatprep.subr.mxu0 %v3019
      %3343 = vmatpush1.msra.mxu0 %v3018
      %3344 = vmatprep.subr.mxu0 %v3023
      %3345 = vmatpush1.msra.mxu0 %v3022
      %3346 = vmatprep.subr.mxu0 %v3027
      %3347 = vmatpush1.msra.mxu0 %v3026
      %3348 = vmatprep.subr.mxu0 %v3031
      %3349 = vmatpush1.msra.mxu0 %v3030
      %3350 = vmatprep.subr.mxu0 %v3035
      %3351 = vmatpush1.msra.mxu0 %v3034
      %3352 = vmatprep.subr.mxu0 %v3039
      %3353 = vmatpush1.msra.mxu0 %v3038
      %3354 = vmatprep.subr.mxu0 %v3043
      %3355 = vmatpush1.msra.mxu0 %v3042
      %3356 = vmatprep.subr.mxu0 %v3047
      %3357 = vmatpush1.msra.mxu0 %v3046
      %3358 = vmatprep.subr.mxu0 %v3051
      %3359 = vmatpush1.msra.mxu0 %v3050
      %3360 = vmatprep.subr.mxu0 %v3055
      %3361 = vmatpush1.msra.mxu0 %v3054
      %3362 = vmatprep.mubr.f32.mxu0 %v2798
      %3363 = vmatmul.mubr.f32.gmra.mrb[0].mxu0 %v2797
      %v3364 = vpop.f32.mrb[0].mxu0
      %v3365 = vadd.f32 %v3294, %v3364
      %v3366 = vpop.f32.mrb[0].mxu0
      %v3367 = vadd.f32 %v3296, %v3366
      %3368 = vdwg.mxu0
      %3369 = vmatprep.subr.mxu0 %v3059
      %3370 = vmatpush1.msra.mxu0 %v3058
      %3371 = vmatprep.subr.mxu0 %v3063
      %3372 = vmatpush1.msra.mxu0 %v3062
      %3373 = vmatprep.subr.mxu0 %v3067
      %3374 = vmatpush1.msra.mxu0 %v3066
      %3375 = vmatprep.subr.mxu0 %v3071
      %3376 = vmatpush1.msra.mxu0 %v3070
      %3377 = vmatprep.subr.mxu0 %v3075
      %3378 = vmatpush1.msra.mxu0 %v3074
      %3379 = vmatprep.subr.mxu0 %v3079
      %3380 = vmatpush1.msra.mxu0 %v3078
      %3381 = vmatprep.subr.mxu0 %v3083
      %3382 = vmatpush1.msra.mxu0 %v3082
      %3383 = vmatprep.subr.mxu0 %v3087
      %3384 = vmatpush1.msra.mxu0 %v3086
      %3385 = vmatprep.subr.mxu0 %v3091
      %3386 = vmatpush1.msra.mxu0 %v3090
      %3387 = vmatprep.subr.mxu0 %v3095
      %3388 = vmatpush1.msra.mxu0 %v3094
      %3389 = vmatprep.subr.mxu0 %v3099
      %3390 = vmatpush1.msra.mxu0 %v3098
      %3391 = vmatprep.subr.mxu0 %v3103
      %3392 = vmatpush1.msra.mxu0 %v3102
      %3393 = vmatprep.subr.mxu0 %v3107
      %3394 = vmatpush1.msra.mxu0 %v3106
      %3395 = vmatprep.subr.mxu0 %v3111
      %3396 = vmatpush1.msra.mxu0 %v3110
      %3397 = vmatprep.subr.mxu0 %v3115
      %3398 = vmatpush1.msra.mxu0 %v3114
      %3399 = vmatprep.subr.mxu0 %v3119
      %3400 = vmatpush1.msra.mxu0 %v3118
      %3401 = vmatprep.subr.mxu0 %v3123
      %3402 = vmatpush1.msra.mxu0 %v3122
      %3403 = vmatprep.subr.mxu0 %v3127
      %3404 = vmatpush1.msra.mxu0 %v3126
      %3405 = vmatprep.subr.mxu0 %v3131
      %3406 = vmatpush1.msra.mxu0 %v3130
      %3407 = vmatprep.subr.mxu0 %v3135
      %3408 = vmatpush1.msra.mxu0 %v3134
      %3409 = vmatprep.subr.mxu0 %v3139
      %3410 = vmatpush1.msra.mxu0 %v3138
      %3411 = vmatprep.subr.mxu0 %v3143
      %3412 = vmatpush1.msra.mxu0 %v3142
      %3413 = vmatprep.subr.mxu0 %v3147
      %3414 = vmatpush1.msra.mxu0 %v3146
      %3415 = vmatprep.subr.mxu0 %v3151
      %3416 = vmatpush1.msra.mxu0 %v3150
      %3417 = vmatprep.subr.mxu0 %v3155
      %3418 = vmatpush1.msra.mxu0 %v3154
      %3419 = vmatprep.subr.mxu0 %v3159
      %3420 = vmatpush1.msra.mxu0 %v3158
      %3421 = vmatprep.subr.mxu0 %v3163
      %3422 = vmatpush1.msra.mxu0 %v3162
      %3423 = vmatprep.subr.mxu0 %v3167
      %3424 = vmatpush1.msra.mxu0 %v3166
      %3425 = vmatprep.subr.mxu0 %v3171
      %3426 = vmatpush1.msra.mxu0 %v3170
      %3427 = vmatprep.subr.mxu0 %v3175
      %3428 = vmatpush1.msra.mxu0 %v3174
      %3429 = vmatprep.subr.mxu0 %v3179
      %3430 = vmatpush1.msra.mxu0 %v3178
      %3431 = vmatprep.subr.mxu0 %v3183
      %3432 = vmatpush1.msra.mxu0 %v3182
      %3433 = vmatprep.mubr.f32.mxu0 %v2800
      %3434 = vmatmul.mubr.f32.gmra.mrb[0].mxu0 %v2799
      %v3435 = vpop.f32.mrb[0].mxu0
      %v3436 = vadd.f32 %v3365, %v3435
      %v3437 = vpop.f32.mrb[0].mxu0
      %v3438 = vadd.f32 %v3367, %v3437
      %3439 = vdwg.mxu0
      %3440 = vmatprep.subr.mxu0 %v3187
      %3441 = vmatpush1.msra.mxu0 %v3186
      %3442 = vmatprep.subr.mxu0 %v3191
      %3443 = vmatpush1.msra.mxu0 %v3190
      %3444 = vmatprep.subr.mxu0 %v3195
      %3445 = vmatpush1.msra.mxu0 %v3194
      %3446 = vmatprep.subr.mxu0 %v3199
      %3447 = vmatpush1.msra.mxu0 %v3198
      %3448 = vmatprep.subr.mxu0 0.0
      %3449 = vmatpush1.msra.mxu0 0.0
      %3450 = vmatprep.subr.mxu0 0.0
      %3451 = vmatpush1.msra.mxu0 0.0
      %3452 = vmatprep.subr.mxu0 0.0
      %3453 = vmatpush1.msra.mxu0 0.0
      %3454 = vmatprep.subr.mxu0 0.0
      %3455 = vmatpush1.msra.mxu0 0.0
      %3456 = vmatprep.subr.mxu0 0.0
      %3457 = vmatpush1.msra.mxu0 0.0
      %3458 = vmatprep.subr.mxu0 0.0
      %3459 = vmatpush1.msra.mxu0 0.0
      %3460 = vmatprep.subr.mxu0 0.0
      %3461 = vmatpush1.msra.mxu0 0.0
      %3462 = vmatprep.subr.mxu0 0.0
      %3463 = vmatpush1.msra.mxu0 0.0
      %3464 = vmatprep.subr.mxu0 0.0
      %3465 = vmatpush1.msra.mxu0 0.0
      %3466 = vmatprep.subr.mxu0 0.0
      %3467 = vmatpush1.msra.mxu0 0.0
      %3468 = vmatprep.subr.mxu0 0.0
      %3469 = vmatpush1.msra.mxu0 0.0
      %3470 = vmatprep.subr.mxu0 0.0
      %3471 = vmatpush1.msra.mxu0 0.0
      %3472 = vmatprep.subr.mxu0 0.0
      %3473 = vmatpush1.msra.mxu0 0.0
      %3474 = vmatprep.subr.mxu0 0.0
      %3475 = vmatpush1.msra.mxu0 0.0
      %3476 = vmatprep.subr.mxu0 0.0
      %3477 = vmatpush1.msra.mxu0 0.0
      %3478 = vmatprep.subr.mxu0 0.0
      %3479 = vmatpush1.msra.mxu0 0.0
      %3480 = vmatprep.subr.mxu0 0.0
      %3481 = vmatpush1.msra.mxu0 0.0
      %3482 = vmatprep.subr.mxu0 0.0
      %3483 = vmatpush1.msra.mxu0 0.0
      %3484 = vmatprep.subr.mxu0 0.0
      %3485 = vmatpush1.msra.mxu0 0.0
      %3486 = vmatprep.subr.mxu0 0.0
      %3487 = vmatpush1.msra.mxu0 0.0
      %3488 = vmatprep.subr.mxu0 0.0
      %3489 = vmatpush1.msra.mxu0 0.0
      %3490 = vmatprep.subr.mxu0 0.0
      %3491 = vmatpush1.msra.mxu0 0.0
      %3492 = vmatprep.subr.mxu0 0.0
      %3493 = vmatpush1.msra.mxu0 0.0
      %3494 = vmatprep.subr.mxu0 0.0
      %3495 = vmatpush1.msra.mxu0 0.0
      %3496 = vmatprep.subr.mxu0 0.0
      %3497 = vmatpush1.msra.mxu0 0.0
      %3498 = vmatprep.subr.mxu0 0.0
      %3499 = vmatpush1.msra.mxu0 0.0
      %3500 = vmatprep.subr.mxu0 0.0
      %3501 = vmatpush1.msra.mxu0 0.0
      %3502 = vmatprep.subr.mxu0 0.0
      %3503 = vmatpush1.msra.mxu0 0.0
      %3504 = vmatprep.mubr.f32.mxu0 0.0
      %3505 = vmatmul.mubr.f32.gmra.mrb[0].mxu0 %v3225
      %v3506 = vpop.f32.mrb[0].mxu0
      %v3507 = vadd.f32 %v3436, %v3506
      %v3508 = vpop.f32.mrb[0].mxu0
      %v3509 = vadd.f32 %v3438, %v3508
      %3510 = vdwg.mxu0
      %3511 = vmatprep.subr.mxu0 %v2805
      %3512 = vmatpush1.msra.mxu0 %v2804
      %3513 = vmatprep.subr.mxu0 %v2809
      %3514 = vmatpush1.msra.mxu0 %v2808
      %3515 = vmatprep.subr.mxu0 %v2813
      %3516 = vmatpush1.msra.mxu0 %v2812
      %3517 = vmatprep.subr.mxu0 %v2817
      %3518 = vmatpush1.msra.mxu0 %v2816
      %3519 = vmatprep.subr.mxu0 %v2821
      %3520 = vmatpush1.msra.mxu0 %v2820
      %3521 = vmatprep.subr.mxu0 %v2825
      %3522 = vmatpush1.msra.mxu0 %v2824
      %3523 = vmatprep.subr.mxu0 %v2829
      %3524 = vmatpush1.msra.mxu0 %v2828
      %3525 = vmatprep.subr.mxu0 %v2833
      %3526 = vmatpush1.msra.mxu0 %v2832
      %3527 = vmatprep.subr.mxu0 %v2837
      %3528 = vmatpush1.msra.mxu0 %v2836
      %3529 = vmatprep.subr.mxu0 %v2841
      %3530 = vmatpush1.msra.mxu0 %v2840
      %3531 = vmatprep.subr.mxu0 %v2845
      %3532 = vmatpush1.msra.mxu0 %v2844
      %3533 = vmatprep.subr.mxu0 %v2849
      %3534 = vmatpush1.msra.mxu0 %v2848
      %3535 = vmatprep.subr.mxu0 %v2853
      %3536 = vmatpush1.msra.mxu0 %v2852
      %3537 = vmatprep.subr.mxu0 %v2857
      %3538 = vmatpush1.msra.mxu0 %v2856
      %3539 = vmatprep.subr.mxu0 %v2861
      %3540 = vmatpush1.msra.mxu0 %v2860
      %3541 = vmatprep.subr.mxu0 %v2865
      %3542 = vmatpush1.msra.mxu0 %v2864
      %3543 = vmatprep.subr.mxu0 %v2869
      %3544 = vmatpush1.msra.mxu0 %v2868
      %3545 = vmatprep.subr.mxu0 %v2873
      %3546 = vmatpush1.msra.mxu0 %v2872
      %3547 = vmatprep.subr.mxu0 %v2877
      %3548 = vmatpush1.msra.mxu0 %v2876
      %3549 = vmatprep.subr.mxu0 %v2881
      %3550 = vmatpush1.msra.mxu0 %v2880
      %3551 = vmatprep.subr.mxu0 %v2885
      %3552 = vmatpush1.msra.mxu0 %v2884
      %3553 = vmatprep.subr.mxu0 %v2889
      %3554 = vmatpush1.msra.mxu0 %v2888
      %3555 = vmatprep.subr.mxu0 %v2893
      %3556 = vmatpush1.msra.mxu0 %v2892
      %3557 = vmatprep.subr.mxu0 %v2897
      %3558 = vmatpush1.msra.mxu0 %v2896
      %3559 = vmatprep.subr.mxu0 %v2901
      %3560 = vmatpush1.msra.mxu0 %v2900
      %3561 = vmatprep.subr.mxu0 %v2905
      %3562 = vmatpush1.msra.mxu0 %v2904
      %3563 = vmatprep.subr.mxu0 %v2909
      %3564 = vmatpush1.msra.mxu0 %v2908
      %3565 = vmatprep.subr.mxu0 %v2913
      %3566 = vmatpush1.msra.mxu0 %v2912
      %3567 = vmatprep.subr.mxu0 %v2917
      %3568 = vmatpush1.msra.mxu0 %v2916
      %3569 = vmatprep.subr.mxu0 %v2921
      %3570 = vmatpush1.msra.mxu0 %v2920
      %3571 = vmatprep.subr.mxu0 %v2925
      %3572 = vmatpush1.msra.mxu0 %v2924
      %3573 = vmatprep.subr.mxu0 %v2929
      %3574 = vmatpush1.msra.mxu0 %v2928
      %3575 = vmatprep.mubr.f32.mxu0 %v2796
      %3576 = vmatmul.mubr.f32.gmra.mrb[0].mxu0 %v2795
      %v3577 = vpop.f32.mrb[0].mxu0
      %v3578 = vadd.f32 %v3215, %v3577
      %v3579 = vpop.f32.mrb[0].mxu0
      %v3580 = vadd.f32 %v3219, %v3579
      %3581 = vdwg.mxu0
      %3582 = vmatprep.subr.mxu0 %v2933
      %3583 = vmatpush1.msra.mxu0 %v2932
      %3584 = vmatprep.subr.mxu0 %v2937
      %3585 = vmatpush1.msra.mxu0 %v2936
      %3586 = vmatprep.subr.mxu0 %v2941
      %3587 = vmatpush1.msra.mxu0 %v2940
      %3588 = vmatprep.subr.mxu0 %v2945
      %3589 = vmatpush1.msra.mxu0 %v2944
      %3590 = vmatprep.subr.mxu0 %v2949
      %3591 = vmatpush1.msra.mxu0 %v2948
      %3592 = vmatprep.subr.mxu0 %v2953
      %3593 = vmatpush1.msra.mxu0 %v2952
      %3594 = vmatprep.subr.mxu0 %v2957
      %3595 = vmatpush1.msra.mxu0 %v2956
      %3596 = vmatprep.subr.mxu0 %v2961
      %3597 = vmatpush1.msra.mxu0 %v2960
      %3598 = vmatprep.subr.mxu0 %v2965
      %3599 = vmatpush1.msra.mxu0 %v2964
      %3600 = vmatprep.subr.mxu0 %v2969
      %3601 = vmatpush1.msra.mxu0 %v2968
      %3602 = vmatprep.subr.mxu0 %v2973
      %3603 = vmatpush1.msra.mxu0 %v2972
      %3604 = vmatprep.subr.mxu0 %v2977
      %3605 = vmatpush1.msra.mxu0 %v2976
      %3606 = vmatprep.subr.mxu0 %v2981
      %3607 = vmatpush1.msra.mxu0 %v2980
      %3608 = vmatprep.subr.mxu0 %v2985
      %3609 = vmatpush1.msra.mxu0 %v2984
      %3610 = vmatprep.subr.mxu0 %v2989
      %3611 = vmatpush1.msra.mxu0 %v2988
      %3612 = vmatprep.subr.mxu0 %v2993
      %3613 = vmatpush1.msra.mxu0 %v2992
      %3614 = vmatprep.subr.mxu0 %v2997
      %3615 = vmatpush1.msra.mxu0 %v2996
      %3616 = vmatprep.subr.mxu0 %v3001
      %3617 = vmatpush1.msra.mxu0 %v3000
      %3618 = vmatprep.subr.mxu0 %v3005
      %3619 = vmatpush1.msra.mxu0 %v3004
      %3620 = vmatprep.subr.mxu0 %v3009
      %3621 = vmatpush1.msra.mxu0 %v3008
      %3622 = vmatprep.subr.mxu0 %v3013
      %3623 = vmatpush1.msra.mxu0 %v3012
      %3624 = vmatprep.subr.mxu0 %v3017
      %3625 = vmatpush1.msra.mxu0 %v3016
      %3626 = vmatprep.subr.mxu0 %v3021
      %3627 = vmatpush1.msra.mxu0 %v3020
      %3628 = vmatprep.subr.mxu0 %v3025
      %3629 = vmatpush1.msra.mxu0 %v3024
      %3630 = vmatprep.subr.mxu0 %v3029
      %3631 = vmatpush1.msra.mxu0 %v3028
      %3632 = vmatprep.subr.mxu0 %v3033
      %3633 = vmatpush1.msra.mxu0 %v3032
      %3634 = vmatprep.subr.mxu0 %v3037
      %3635 = vmatpush1.msra.mxu0 %v3036
      %3636 = vmatprep.subr.mxu0 %v3041
      %3637 = vmatpush1.msra.mxu0 %v3040
      %3638 = vmatprep.subr.mxu0 %v3045
      %3639 = vmatpush1.msra.mxu0 %v3044
      %3640 = vmatprep.subr.mxu0 %v3049
      %3641 = vmatpush1.msra.mxu0 %v3048
      %3642 = vmatprep.subr.mxu0 %v3053
      %3643 = vmatpush1.msra.mxu0 %v3052
      %3644 = vmatprep.subr.mxu0 %v3057
      %3645 = vmatpush1.msra.mxu0 %v3056
      %3646 = vmatprep.mubr.f32.mxu0 %v2798
      %3647 = vmatmul.mubr.f32.gmra.mrb[0].mxu0 %v2797
      %v3648 = vpop.f32.mrb[0].mxu0
      %v3649 = vadd.f32 %v3578, %v3648
      %v3650 = vpop.f32.mrb[0].mxu0
      %v3651 = vadd.f32 %v3580, %v3650
      %3652 = vdwg.mxu0
      %3653 = vmatprep.subr.mxu0 %v3061
      %3654 = vmatpush1.msra.mxu0 %v3060
      %3655 = vmatprep.subr.mxu0 %v3065
      %3656 = vmatpush1.msra.mxu0 %v3064
      %3657 = vmatprep.subr.mxu0 %v3069
      %3658 = vmatpush1.msra.mxu0 %v3068
      %3659 = vmatprep.subr.mxu0 %v3073
      %3660 = vmatpush1.msra.mxu0 %v3072
      %3661 = vmatprep.subr.mxu0 %v3077
      %3662 = vmatpush1.msra.mxu0 %v3076
      %3663 = vmatprep.subr.mxu0 %v3081
      %3664 = vmatpush1.msra.mxu0 %v3080
      %3665 = vmatprep.subr.mxu0 %v3085
      %3666 = vmatpush1.msra.mxu0 %v3084
      %3667 = vmatprep.subr.mxu0 %v3089
      %3668 = vmatpush1.msra.mxu0 %v3088
      %3669 = vmatprep.subr.mxu0 %v3093
      %3670 = vmatpush1.msra.mxu0 %v3092
      %3671 = vmatprep.subr.mxu0 %v3097
      %3672 = vmatpush1.msra.mxu0 %v3096
      %3673 = vmatprep.subr.mxu0 %v3101
      %3674 = vmatpush1.msra.mxu0 %v3100
      %3675 = vmatprep.subr.mxu0 %v3105
      %3676 = vmatpush1.msra.mxu0 %v3104
      %3677 = vmatprep.subr.mxu0 %v3109
      %3678 = vmatpush1.msra.mxu0 %v3108
      %3679 = vmatprep.subr.mxu0 %v3113
      %3680 = vmatpush1.msra.mxu0 %v3112
      %3681 = vmatprep.subr.mxu0 %v3117
      %3682 = vmatpush1.msra.mxu0 %v3116
      %3683 = vmatprep.subr.mxu0 %v3121
      %3684 = vmatpush1.msra.mxu0 %v3120
      %3685 = vmatprep.subr.mxu0 %v3125
      %3686 = vmatpush1.msra.mxu0 %v3124
      %3687 = vmatprep.subr.mxu0 %v3129
      %3688 = vmatpush1.msra.mxu0 %v3128
      %3689 = vmatprep.subr.mxu0 %v3133
      %3690 = vmatpush1.msra.mxu0 %v3132
      %3691 = vmatprep.subr.mxu0 %v3137
      %3692 = vmatpush1.msra.mxu0 %v3136
      %3693 = vmatprep.subr.mxu0 %v3141
      %3694 = vmatpush1.msra.mxu0 %v3140
      %3695 = vmatprep.subr.mxu0 %v3145
      %3696 = vmatpush1.msra.mxu0 %v3144
      %3697 = vmatprep.subr.mxu0 %v3149
      %3698 = vmatpush1.msra.mxu0 %v3148
      %3699 = vmatprep.subr.mxu0 %v3153
      %3700 = vmatpush1.msra.mxu0 %v3152
      %3701 = vmatprep.subr.mxu0 %v3157
      %3702 = vmatpush1.msra.mxu0 %v3156
      %3703 = vmatprep.subr.mxu0 %v3161
      %3704 = vmatpush1.msra.mxu0 %v3160
      %3705 = vmatprep.subr.mxu0 %v3165
      %3706 = vmatpush1.msra.mxu0 %v3164
      %3707 = vmatprep.subr.mxu0 %v3169
      %3708 = vmatpush1.msra.mxu0 %v3168
      %3709 = vmatprep.subr.mxu0 %v3173
      %3710 = vmatpush1.msra.mxu0 %v3172
      %3711 = vmatprep.subr.mxu0 %v3177
      %3712 = vmatpush1.msra.mxu0 %v3176
      %3713 = vmatprep.subr.mxu0 %v3181
      %3714 = vmatpush1.msra.mxu0 %v3180
      %3715 = vmatprep.subr.mxu0 %v3185
      %3716 = vmatpush1.msra.mxu0 %v3184
      %3717 = vmatprep.mubr.f32.mxu0 %v2800
      %3718 = vmatmul.mubr.f32.gmra.mrb[0].mxu0 %v2799
      %v3719 = vpop.f32.mrb[0].mxu0
      %v3720 = vadd.f32 %v3649, %v3719
      %v3721 = vpop.f32.mrb[0].mxu0
      %v3722 = vadd.f32 %v3651, %v3721
      %3723 = vdwg.mxu0
      %3724 = vmatprep.subr.mxu0 %v3189
      %3725 = vmatpush1.msra.mxu0 %v3188
      %3726 = vmatprep.subr.mxu0 %v3193
      %3727 = vmatpush1.msra.mxu0 %v3192
      %3728 = vmatprep.subr.mxu0 %v3197
      %3729 = vmatpush1.msra.mxu0 %v3196
      %3730 = vmatprep.subr.mxu0 %v3201
      %3731 = vmatpush1.msra.mxu0 %v3200
      %3732 = vmatprep.subr.mxu0 0.0
      %3733 = vmatpush1.msra.mxu0 0.0
      %3734 = vmatprep.subr.mxu0 0.0
      %3735 = vmatpush1.msra.mxu0 0.0
      %3736 = vmatprep.subr.mxu0 0.0
      %3737 = vmatpush1.msra.mxu0 0.0
      %3738 = vmatprep.subr.mxu0 0.0
      %3739 = vmatpush1.msra.mxu0 0.0
      %3740 = vmatprep.subr.mxu0 0.0
      %3741 = vmatpush1.msra.mxu0 0.0
      %3742 = vmatprep.subr.mxu0 0.0
      %3743 = vmatpush1.msra.mxu0 0.0
      %3744 = vmatprep.subr.mxu0 0.0
      %3745 = vmatpush1.msra.mxu0 0.0
      %3746 = vmatprep.subr.mxu0 0.0
      %3747 = vmatpush1.msra.mxu0 0.0
      %3748 = vmatprep.subr.mxu0 0.0
      %3749 = vmatpush1.msra.mxu0 0.0
      %3750 = vmatprep.subr.mxu0 0.0
      %3751 = vmatpush1.msra.mxu0 0.0
      %3752 = vmatprep.subr.mxu0 0.0
      %3753 = vmatpush1.msra.mxu0 0.0
      %3754 = vmatprep.subr.mxu0 0.0
      %3755 = vmatpush1.msra.mxu0 0.0
      %3756 = vmatprep.subr.mxu0 0.0
      %3757 = vmatpush1.msra.mxu0 0.0
      %3758 = vmatprep.subr.mxu0 0.0
      %3759 = vmatpush1.msra.mxu0 0.0
      %3760 = vmatprep.subr.mxu0 0.0
      %3761 = vmatpush1.msra.mxu0 0.0
      %3762 = vmatprep.subr.mxu0 0.0
      %3763 = vmatpush1.msra.mxu0 0.0
      %3764 = vmatprep.subr.mxu0 0.0
      %3765 = vmatpush1.msra.mxu0 0.0
      %3766 = vmatprep.subr.mxu0 0.0
      %3767 = vmatpush1.msra.mxu0 0.0
      %3768 = vmatprep.subr.mxu0 0.0
      %3769 = vmatpush1.msra.mxu0 0.0
      %3770 = vmatprep.subr.mxu0 0.0
      %3771 = vmatpush1.msra.mxu0 0.0
      %3772 = vmatprep.subr.mxu0 0.0
      %3773 = vmatpush1.msra.mxu0 0.0
      %3774 = vmatprep.subr.mxu0 0.0
      %3775 = vmatpush1.msra.mxu0 0.0
      %3776 = vmatprep.subr.mxu0 0.0
      %3777 = vmatpush1.msra.mxu0 0.0
      %3778 = vmatprep.subr.mxu0 0.0
      %3779 = vmatpush1.msra.mxu0 0.0
      %3780 = vmatprep.subr.mxu0 0.0
      %3781 = vmatpush1.msra.mxu0 0.0
      %3782 = vmatprep.subr.mxu0 0.0
      %3783 = vmatpush1.msra.mxu0 0.0
      %3784 = vmatprep.subr.mxu0 0.0
      %3785 = vmatpush1.msra.mxu0 0.0
      %3786 = vmatprep.subr.mxu0 0.0
      %3787 = vmatpush1.msra.mxu0 0.0
      %3788 = vmatprep.mubr.f32.mxu0 0.0
      %3789 = vmatmul.mubr.f32.gmra.mrb[0].mxu0 %v3225
      %v3790 = vpop.f32.mrb[0].mxu0
      %v3791 = vadd.f32 %v3720, %v3790
      %v3792 = vpop.f32.mrb[0].mxu0
      %v3793 = vadd.f32 %v3722, %v3792
      %3794 = vdwg.mxu0
      %v3795 = vmax.f32 %v3507, 0.0
      %v3796 = vmax.f32 %v3509, 0.0
      %v3797 = vmax.f32 %v3791, 0.0
      %v3798 = vmax.f32 %v3793, 0.0
      %v3799 = vld [vmem:[%s16] sm:$0xff]
      %v3800 = vld [vmem:[%s16 + $0x8] sm:$0xff]
      %v3801 = vld [vmem:[%s16 + $0x10] sm:$0xff]
      %v3802 = vld [vmem:[%s16 + $0x18] sm:$0xff]
      %v3803 = vld [vmem:[%s16 + $0x20] sm:$0xff]
      %v3804 = vld [vmem:[%s16 + $0x28] sm:$0xff]
      %v3805 = vld [vmem:[%s16 + $0x30] sm:$0xff]
      %v3806 = vld [vmem:[%s16 + $0x38] sm:$0xff]
      %v3807 = vld [vmem:[%s16 + $0x40] sm:$0xff]
      %v3808 = vld [vmem:[%s16 + $0x48] sm:$0xff]
      %v3809 = vld [vmem:[%s16 + $0x50] sm:$0xff]
      %v3810 = vld [vmem:[%s16 + $0x58] sm:$0xff]
      %v3811 = vld [vmem:[%s16 + $0x60] sm:$0xff]
      %v3812 = vld [vmem:[%s16 + $0x68] sm:$0xff]
      %v3813 = vld [vmem:[%s16 + $0x70] sm:$0xff]
      %v3814 = vld [vmem:[%s16 + $0x78] sm:$0xff]
      %v3815 = vld [vmem:[%s16 + $0x80] sm:$0xff]
      %v3816 = vld [vmem:[%s16 + $0x88] sm:$0xff]
      %v3817 = vld [vmem:[%s16 + $0x90] sm:$0xff]
      %v3818 = vld [vmem:[%s16 + $0x98] sm:$0xff]
      %v3819 = vld [vmem:[%s16 + $0xa0] sm:$0xff]
      %v3820 = vld [vmem:[%s16 + $0xa8] sm:$0xff]
      %v3821 = vld [vmem:[%s16 + $0xb0] sm:$0xff]
      %v3822 = vld [vmem:[%s16 + $0xb8] sm:$0xff]
      %v3823 = vld [vmem:[%s16 + $0xc0] sm:$0xff]
      %v3824 = vld [vmem:[%s16 + $0xc8] sm:$0xff]
      %v3825 = vld [vmem:[%s16 + $0xd0] sm:$0xff]
      %v3826 = vld [vmem:[%s16 + $0xd8] sm:$0xff]
      %v3827 = vld [vmem:[%s16 + $0xe0] sm:$0xff]
      %v3828 = vld [vmem:[%s16 + $0xe8] sm:$0xff]
      %v3829 = vld [vmem:[%s16 + $0xf0] sm:$0xff]
      %v3830 = vld [vmem:[%s16 + $0xf8] sm:$0xff]
      %v3831 = vld [vmem:[%s16 + $0x100] sm:$0xff]
      %v3832 = vld [vmem:[%s16 + $0x108] sm:$0xff]
      %v3833 = vld [vmem:[%s16 + $0x110] sm:$0xff]
      %v3834 = vld [vmem:[%s16 + $0x118] sm:$0xff]
      %v3835 = vld [vmem:[%s16 + $0x120] sm:$0xff]
      %v3836 = vld [vmem:[%s16 + $0x128] sm:$0xff]
      %v3837 = vld [vmem:[%s16 + $0x130] sm:$0xff]
      %v3838 = vld [vmem:[%s16 + $0x138] sm:$0xff]
      %v3839 = vld [vmem:[%s16 + $0x140] sm:$0xff]
      %v3840 = vld [vmem:[%s16 + $0x148] sm:$0xff]
      %v3841 = vld [vmem:[%s16 + $0x150] sm:$0xff]
      %v3842 = vld [vmem:[%s16 + $0x158] sm:$0xff]
      %v3843 = vld [vmem:[%s16 + $0x160] sm:$0xff]
      %v3844 = vld [vmem:[%s16 + $0x168] sm:$0xff]
      %v3845 = vld [vmem:[%s16 + $0x170] sm:$0xff]
      %v3846 = vld [vmem:[%s16 + $0x178] sm:$0xff]
      %v3847 = vld [vmem:[%s16 + $0x180] sm:$0xff]
      %v3848 = vld [vmem:[%s16 + $0x188] sm:$0xff]
      %v3849 = vld [vmem:[%s17] sm:$0x1]
      %v3851 = vsel %vm1206, %v3798, 0
      %3853 = vmatprep.subr.mxu0 0.0
      %3854 = vmatpush1.msra.mxu0 %v3799
      %3855 = vmatprep.subr.mxu0 0.0
      %3856 = vmatpush1.msra.mxu0 %v3800
      %3857 = vmatprep.subr.mxu0 0.0
      %3858 = vmatpush1.msra.mxu0 %v3801
      %3859 = vmatprep.subr.mxu0 0.0
      %3860 = vmatpush1.msra.mxu0 %v3802
      %3861 = vmatprep.subr.mxu0 0.0
      %3862 = vmatpush1.msra.mxu0 %v3803
      %3863 = vmatprep.subr.mxu0 0.0
      %3864 = vmatpush1.msra.mxu0 %v3804
      %3865 = vmatprep.subr.mxu0 0.0
      %3866 = vmatpush1.msra.mxu0 %v3805
      %3867 = vmatprep.subr.mxu0 0.0
      %3868 = vmatpush1.msra.mxu0 %v3806
      %3869 = vmatprep.subr.mxu0 0.0
      %3870 = vmatpush1.msra.mxu0 %v3807
      %3871 = vmatprep.subr.mxu0 0.0
      %3872 = vmatpush1.msra.mxu0 %v3808
      %3873 = vmatprep.subr.mxu0 0.0
      %3874 = vmatpush1.msra.mxu0 %v3809
      %3875 = vmatprep.subr.mxu0 0.0
      %3876 = vmatpush1.msra.mxu0 %v3810
      %3877 = vmatprep.subr.mxu0 0.0
      %3878 = vmatpush1.msra.mxu0 %v3811
      %3879 = vmatprep.subr.mxu0 0.0
      %3880 = vmatpush1.msra.mxu0 %v3812
      %3881 = vmatprep.subr.mxu0 0.0
      %3882 = vmatpush1.msra.mxu0 %v3813
      %3883 = vmatprep.subr.mxu0 0.0
      %3884 = vmatpush1.msra.mxu0 %v3814
      %3885 = vmatprep.subr.mxu0 0.0
      %3886 = vmatpush1.msra.mxu0 %v3815
      %3887 = vmatprep.subr.mxu0 0.0
      %3888 = vmatpush1.msra.mxu0 %v3816
      %3889 = vmatprep.subr.mxu0 0.0
      %3890 = vmatpush1.msra.mxu0 %v3817
      %3891 = vmatprep.subr.mxu0 0.0
      %3892 = vmatpush1.msra.mxu0 %v3818
      %3893 = vmatprep.subr.mxu0 0.0
      %3894 = vmatpush1.msra.mxu0 %v3819
      %3895 = vmatprep.subr.mxu0 0.0
      %3896 = vmatpush1.msra.mxu0 %v3820
      %3897 = vmatprep.subr.mxu0 0.0
      %3898 = vmatpush1.msra.mxu0 %v3821
      %3899 = vmatprep.subr.mxu0 0.0
      %3900 = vmatpush1.msra.mxu0 %v3822
      %3901 = vmatprep.subr.mxu0 0.0
      %3902 = vmatpush1.msra.mxu0 %v3823
      %3903 = vmatprep.subr.mxu0 0.0
      %3904 = vmatpush1.msra.mxu0 %v3824
      %3905 = vmatprep.subr.mxu0 0.0
      %3906 = vmatpush1.msra.mxu0 %v3825
      %3907 = vmatprep.subr.mxu0 0.0
      %3908 = vmatpush1.msra.mxu0 %v3826
      %3909 = vmatprep.subr.mxu0 0.0
      %3910 = vmatpush1.msra.mxu0 %v3827
      %3911 = vmatprep.subr.mxu0 0.0
      %3912 = vmatpush1.msra.mxu0 %v3828
      %3913 = vmatprep.subr.mxu0 0.0
      %3914 = vmatpush1.msra.mxu0 %v3829
      %3915 = vmatprep.subr.mxu0 0.0
      %3916 = vmatpush1.msra.mxu0 %v3830
      %3917 = vmatprep.mubr.f32.mxu0 %v3796
      %3918 = vmatmul.mubr.f32.gmra.mrb[0].mxu0 %v3795
      %v3919 = vpop.f32.mrb[0].mxu0
      %v3920 = vadd.f32 %v3849, %v3919
      %v3921 = vpop.f32.mrb[0].mxu0
      %3922 = vdwg.mxu0
      %3923 = vmatprep.subr.mxu0 0.0
      %3924 = vmatpush1.msra.mxu0 %v3831
      %3925 = vmatprep.subr.mxu0 0.0
      %3926 = vmatpush1.msra.mxu0 %v3832
      %3927 = vmatprep.subr.mxu0 0.0
      %3928 = vmatpush1.msra.mxu0 %v3833
      %3929 = vmatprep.subr.mxu0 0.0
      %3930 = vmatpush1.msra.mxu0 %v3834
      %3931 = vmatprep.subr.mxu0 0.0
      %3932 = vmatpush1.msra.mxu0 %v3835
      %3933 = vmatprep.subr.mxu0 0.0
      %3934 = vmatpush1.msra.mxu0 %v3836
      %3935 = vmatprep.subr.mxu0 0.0
      %3936 = vmatpush1.msra.mxu0 %v3837
      %3937 = vmatprep.subr.mxu0 0.0
      %3938 = vmatpush1.msra.mxu0 %v3838
      %3939 = vmatprep.subr.mxu0 0.0
      %3940 = vmatpush1.msra.mxu0 %v3839
      %3941 = vmatprep.subr.mxu0 0.0
      %3942 = vmatpush1.msra.mxu0 %v3840
      %3943 = vmatprep.subr.mxu0 0.0
      %3944 = vmatpush1.msra.mxu0 %v3841
      %3945 = vmatprep.subr.mxu0 0.0
      %3946 = vmatpush1.msra.mxu0 %v3842
      %3947 = vmatprep.subr.mxu0 0.0
      %3948 = vmatpush1.msra.mxu0 %v3843
      %3949 = vmatprep.subr.mxu0 0.0
      %3950 = vmatpush1.msra.mxu0 %v3844
      %3951 = vmatprep.subr.mxu0 0.0
      %3952 = vmatpush1.msra.mxu0 %v3845
      %3953 = vmatprep.subr.mxu0 0.0
      %3954 = vmatpush1.msra.mxu0 %v3846
      %3955 = vmatprep.subr.mxu0 0.0
      %3956 = vmatpush1.msra.mxu0 %v3847
      %3957 = vmatprep.subr.mxu0 0.0
      %3958 = vmatpush1.msra.mxu0 %v3848
      %3959 = vmatprep.subr.mxu0 0.0
      %3960 = vmatpush1.msra.mxu0 0.0
      %3961 = vmatprep.subr.mxu0 0.0
      %3962 = vmatpush1.msra.mxu0 0.0
      %3963 = vmatprep.subr.mxu0 0.0
      %3964 = vmatpush1.msra.mxu0 0.0
      %3965 = vmatprep.subr.mxu0 0.0
      %3966 = vmatpush1.msra.mxu0 0.0
      %3967 = vmatprep.subr.mxu0 0.0
      %3968 = vmatpush1.msra.mxu0 0.0
      %3969 = vmatprep.subr.mxu0 0.0
      %3970 = vmatpush1.msra.mxu0 0.0
      %3971 = vmatprep.subr.mxu0 0.0
      %3972 = vmatpush1.msra.mxu0 0.0
      %3973 = vmatprep.subr.mxu0 0.0
      %3974 = vmatpush1.msra.mxu0 0.0
      %3975 = vmatprep.subr.mxu0 0.0
      %3976 = vmatpush1.msra.mxu0 0.0
      %3977 = vmatprep.subr.mxu0 0.0
      %3978 = vmatpush1.msra.mxu0 0.0
      %3979 = vmatprep.subr.mxu0 0.0
      %3980 = vmatpush1.msra.mxu0 0.0
      %3981 = vmatprep.subr.mxu0 0.0
      %3982 = vmatpush1.msra.mxu0 0.0
      %3983 = vmatprep.subr.mxu0 0.0
      %3984 = vmatpush1.msra.mxu0 0.0
      %3985 = vmatprep.subr.mxu0 0.0
      %3986 = vmatpush1.msra.mxu0 0.0
      %3987 = vmatprep.mubr.f32.mxu0 %v3851
      %3988 = vmatmul.mubr.f32.gmra.mrb[0].mxu0 %v3797
      %v3989 = vpop.f32.mrb[0].mxu0
      %v3990 = vadd.f32 %v3920, %v3989
      %v3991 = vpop.f32.mrb[0].mxu0
      %3992 = vdwg.mxu0
      %v3993 = vxor.u32 %v3990, 2147483648
      %v3994 = vmul.f32 %v3993, 1.442695
      %v3995 = vpow.pop %v3994
      %v3996 = vadd.f32 %v3995, 1.0
      %v3997 = vrcp.pop %v3996
      %v3998 = vmul.f32 1.0, %v3997
      %vm3999 = vcmask 196608
      %4000 = vst.msk [vmem:[%s612] sm:$0x1] %vm3999, %v3998
      %p4001 = scmp.lt.s32.totalorder %s31, 1
      %s4002 = scalar_select %p4001, %s31, 1
      %s4003 = scalar_lea.vmem %s18, %s4002
      %p4004 = scmp.lt.s32.totalorder %s31, 1
      %s4005 = scalar_select %p4004, %s31, 1
      %s4006 = scalar_lea.vmem %s19, %s4005
      // Predicated region
      $region93: #{vae_forward.1} parent=91 // pred_check
        %p4007 = pneg %p437
      $region94: #{vae_forward.1} parent=91 // pred_check_branch
        %4009 = sbr.rel (%p4007) target = $region96
      $region95: #{vae_forward.1} parent=91 // pred_region
        _
      $region96: #{vae_forward.1} parent=91 // pred_fallthru
        _
      // Predicated region
      $region97: #{vae_forward.1} parent=91 // pred_check
        %p4010 = pneg %p463
      $region98: #{vae_forward.1} parent=91 // pred_check_branch
        %4012 = sbr.rel (%p4010) target = $region100
      $region99: #{vae_forward.1} parent=91 // pred_region
        _
      $region100: #{vae_forward.1} parent=91 // pred_fallthru
        _
    $region92: #{vae_forward.1} parent=5 // pred_fallthru
      _
    %p4013 = scmp.le.s32.totalorder 2, %s26
    // Predicated region
    $region101: #{vae_forward.1} parent=5 // pred_check
      %p4014 = pneg %p4013
    $region102: #{vae_forward.1} parent=5 // pred_check_branch
      %4016 = sbr.rel (%p4014) target = $region104
    $region103: #{vae_forward.1} parent=5 // pred_region
      %s4017 = ssub.s32 %s26, 2
      // Predicated region
      $region105: #{vae_forward.1} parent=103 // pred_check
        %p4018 = pneg %p443
      $region106: #{vae_forward.1} parent=103 // pred_check_branch
        %4020 = sbr.rel (%p4018) target = $region108
      $region107: #{vae_forward.1} parent=103 // pred_region
        %p4021 = scmp.lt.s32.totalorder %s32, 1
        %s4022 = scalar_select %p4021, %s32, 1
        %s4023 = scalar_lea.vmem %s18, %s4022
      $region108: #{vae_forward.1} parent=103 // pred_fallthru
        _
      // Predicated region
      $region109: #{vae_forward.1} parent=103 // pred_check
        %p4024 = pneg %p469
      $region110: #{vae_forward.1} parent=103 // pred_check_branch
        %4026 = sbr.rel (%p4024) target = $region112
      $region111: #{vae_forward.1} parent=103 // pred_region
        %p4027 = scmp.lt.s32.totalorder %s32, 1
        %s4028 = scalar_select %p4027, %s32, 1
        %s4029 = scalar_lea.vmem %s19, %s4028
      $region112: #{vae_forward.1} parent=103 // pred_fallthru
        _
    $region104: #{vae_forward.1} parent=5 // pred_fallthru
      _
  $region6: #{vae_forward.1} parent=0 // loop_footer
    %s30 = sadd.s32 1, %s26
  $region7: #{vae_forward.1} parent=0 // loop_footer_branch
    %25 = sbr.rel target = $region3
  $region8: #{vae_forward.1} parent=0 // loop_exit
    _

</llo_original>
